<compile_context>
chip_gen: v7x
topology: tpu7x:2x2x1
jax: 0.10.0
libtpu: 0.0.40
codegen_flags: <defaults>
</compile_context>

<pallas_src>
import jax
import jax.numpy as jnp
from jax.experimental import pallas as pl
from jax.experimental.pallas import tpu as pltpu

_OUT_PAD = 128  # lane-dense padding of the 3-wide fc4 output


def _round_up(n, m):
    return ((n + m - 1) // m) * m


def _fullnet_kernel(bn_s_ref, bn_t_ref, xy_ref,
                    w1_ref, b1_ref, w2_ref, b2_ref, w3_ref, b3_ref, w4_ref, b4_ref,
                    out_ref):
    """One (batch-block, channel) grid step: 4-layer MLP + max-accumulate over channels."""
    c = pl.program_id(1)

    x = xy_ref[...]                                                   # (bb, 2048) bf16

    # layer 1: relu(dropout(bn1(fc1(.))))  -- dropout = identity (eval mode)
    z = jnp.dot(x, w1_ref[...], preferred_element_type=jnp.float32) + b1_ref[...]
    h = jnp.maximum(bn_s_ref[0, c] * z + bn_t_ref[0, c], 0.0).astype(jnp.bfloat16)

    # layer 2
    z = jnp.dot(h, w2_ref[...], preferred_element_type=jnp.float32) + b2_ref[...]
    h = jnp.maximum(bn_s_ref[1, c] * z + bn_t_ref[1, c], 0.0).astype(jnp.bfloat16)

    # layer 3
    z = jnp.dot(h, w3_ref[...], preferred_element_type=jnp.float32) + b3_ref[...]
    h = jnp.maximum(bn_s_ref[2, c] * z + bn_t_ref[2, c], 0.0).astype(jnp.bfloat16)

    # layer 4 (no bn / relu), lane-padded to 128 output columns
    z4 = jnp.dot(h, w4_ref[...], preferred_element_type=jnp.float32) + b4_ref[...]

    # torch.max(., dim=1)[0]: max-accumulate into the channel-invariant output block.
    @pl.when(c == 0)
    def _():
        out_ref[...] = z4

    @pl.when(c > 0)
    def _():
        out_ref[...] = jnp.maximum(out_ref[...], z4)


def fullnet_forward(x, y, params, *, block_b=256):
    """x, y: (B, 3, Dx)/(B, 3, Dy) float32 with Dx + Dy == 2048. Returns (B, 3) float32."""
    B, S, _ = x.shape
    assert S == 3, "BatchNorm1d(3) in the reference module requires the middle dim to be 3"
    assert block_b % 8 == 0, "batch row block must be a multiple of 8 (sublane constraint)"
    F_in = x.shape[2] + y.shape[2]

    bb = min(block_b, _round_up(B, 8))          # rows per grid step (>=256 saturates v6e/v7x MXU)
    B_pad = _round_up(B, bb)

    # prep: concat -> channel-major (3, B_pad, 2048) bf16 (fuses into a single XLA copy)
    xy = jnp.concatenate([x, y], axis=2).astype(jnp.bfloat16)        # (B, 3, 2048)
    xy = jnp.transpose(xy, (1, 0, 2))                                # (3, B, 2048)
    xy = jnp.pad(xy, ((0, 0), (0, B_pad - B), (0, 0)))               # (3, B_pad, 2048)

    def w(name):
        return params[name].astype(jnp.bfloat16)

    def b(name):
        return params[name][None, :].astype(jnp.float32)

    w1, b1 = w('w1'), b('b1')
    w2, b2 = w('w2'), b('b2')
    w3, b3 = w('w3'), b('b3')
    n_out = params['w4'].shape[1]                                    # = 3
    w4 = jnp.pad(params['w4'], ((0, 0), (0, _OUT_PAD - n_out))).astype(jnp.bfloat16)
    b4 = jnp.pad(params['b4'], (0, _OUT_PAD - n_out))[None, :].astype(jnp.float32)

    # eval-mode BatchNorm1d(3): per (layer, channel) affine scalars -> tiny SMEM tables
    def bn_affine(gamma, beta, mean, var, eps=1e-5):
        s = gamma / jnp.sqrt(var + eps)
        return s, beta - mean * s

    s1, t1 = bn_affine(*params['bn1'])
    s2, t2 = bn_affine(*params['bn2'])
    s3, t3 = bn_affine(*params['bn3'])
    bn_s = jnp.stack([s1, s2, s3]).astype(jnp.float32)               # (3 layers, 3 channels)
    bn_t = jnp.stack([t1, t2, t3]).astype(jnp.float32)

    grid = (B_pad // bb, 3)

    smem = pl.BlockSpec(memory_space=pltpu.MemorySpace.SMEM)

    def resident(arr):   # VMEM-resident weight/bias: same block index for every grid step
        return pl.BlockSpec(arr.shape, lambda i, c: (0, 0))

    out = pl.pallas_call(
        _fullnet_kernel,
        out_shape=jax.ShapeDtypeStruct((B_pad, _OUT_PAD), jnp.float32),
        grid=grid,
        in_specs=[
            smem, smem,                                              # bn scale / shift tables
            pl.BlockSpec((None, bb, F_in), lambda i, c: (c, i, 0)),  # xy tile -> (bb, 2048)
            resident(w1), resident(b1),
            resident(w2), resident(b2),
            resident(w3), resident(b3),
            resident(w4), resident(b4),
        ],
        out_specs=pl.BlockSpec((bb, _OUT_PAD), lambda i, c: (i, 0)),
        compiler_params=pltpu.CompilerParams(
            dimension_semantics=("parallel", "arbitrary"),
            vmem_limit_bytes=32 << 20,
        ),
    )(bn_s, bn_t, xy, w1, b1, w2, b2, w3, b3, w4, b4)

    return out[:B, :n_out]


def fullnet_reference(x, y, params):
    """Pure-JAX (f32) reference of the same eval-mode forward pass."""
    xy = jnp.concatenate([x, y], axis=2)                             # (B, 3, 2048)

    def bn(z, gamma, beta, mean, var, eps=1e-5):
        s = gamma / jnp.sqrt(var + eps)
        return z * s[None, :, None] + (beta - mean * s)[None, :, None]

    h = jax.nn.relu(bn(xy @ params['w1'] + params['b1'], *params['bn1']))
    h = jax.nn.relu(bn(h @ params['w2'] + params['b2'], *params['bn2']))
    h = jax.nn.relu(bn(h @ params['w3'] + params['b3'], *params['bn3']))
    h = h @ params['w4'] + params['b4']                              # (B, 3, 3)
    return jnp.max(h, axis=1)                                        # (B, 3)


def init_params(key, scale=1):
    ks = jax.random.split(key, 8)

    def lin(k, fin, fout):
        kw, kb = jax.random.split(k)
        wgt = jax.random.normal(kw, (fin, fout), jnp.float32) / jnp.sqrt(jnp.float32(fin))
        bia = 0.01 * jax.random.normal(kb, (fout,), jnp.float32)
        return wgt, bia

    def bn(k):
        k1, k2, k3, k4 = jax.random.split(k, 4)
        gamma = 1.0 + 0.1 * jax.random.normal(k1, (3,), jnp.float32)
        beta = 0.1 * jax.random.normal(k2, (3,), jnp.float32)
        mean = 0.1 * jax.random.normal(k3, (3,), jnp.float32)
        var = 0.5 + jnp.abs(jax.random.normal(k4, (3,), jnp.float32))
        return gamma, beta, mean, var

    w1, b1 = lin(ks[0], 2048, 512 * scale)
    w2, b2 = lin(ks[1], 512 * scale, 256 * scale)
    w3, b3 = lin(ks[2], 256 * scale, 128 * scale)
    w4, b4 = lin(ks[3], 128 * scale, 3)
    return dict(w1=w1, b1=b1, w2=w2, b2=b2, w3=w3, b3=b3, w4=w4, b4=b4,
                bn1=bn(ks[4]), bn2=bn(ks[5]), bn3=bn(ks[6]))


if __name__ == "__main__":
    key = jax.random.PRNGKey(0)
    kx, ky, kp = jax.random.split(key, 3)

    B = 2
    x = jax.random.normal(kx, (B, 3, 1024), jnp.float32)
    y = jax.random.normal(ky, (B, 3, 1024), jnp.float32)
    params = init_params(kp, scale=1)

    out = jax.block_until_ready(fullnet_forward(x, y, params))
    ref = jax.block_until_ready(fullnet_reference(x, y, params))
    assert out.shape == (B, 3)
    assert bool(jnp.all(jnp.isfinite(out)))
    assert bool(jnp.allclose(out, ref, rtol=5e-2, atol=5e-2)), (out, ref)

    # exercise the multi-block grid + batch-padding path (B=20 padded to 24, 3 batch blocks)
    B2 = 20
    kx2, ky2 = jax.random.split(jax.random.PRNGKey(1))
    x2 = jax.random.normal(kx2, (B2, 3, 1024), jnp.float32)
    y2 = jax.random.normal(ky2, (B2, 3, 1024), jnp.float32)
    out2 = jax.block_until_ready(fullnet_forward(x2, y2, params, block_b=8))
    ref2 = jax.block_until_ready(fullnet_reference(x2, y2, params))
    assert out2.shape == (B2, 3)
    assert bool(jnp.allclose(out2, ref2, rtol=5e-2, atol=5e-2)), (out2, ref2)

    print("KERNEL_OK")
</pallas_src>

<mosaic_0001>
module attributes {stable_mosaic.version = 11 : i64} {
  func.func @_fullnet_kernel(%arg0: i32, %arg1: i32, %arg2: memref<3x3xf32, #tpu.memory_space<smem>>, %arg3: memref<3x3xf32, #tpu.memory_space<smem>>, %arg4: memref<1x8x2048xbf16, #tpu.memory_space<vmem>>, %arg5: memref<2048x512xbf16, #tpu.memory_space<vmem>>, %arg6: memref<1x512xf32, #tpu.memory_space<vmem>>, %arg7: memref<512x256xbf16, #tpu.memory_space<vmem>>, %arg8: memref<1x256xf32, #tpu.memory_space<vmem>>, %arg9: memref<256x128xbf16, #tpu.memory_space<vmem>>, %arg10: memref<1x128xf32, #tpu.memory_space<vmem>>, %arg11: memref<128x128xbf16, #tpu.memory_space<vmem>>, %arg12: memref<1x128xf32, #tpu.memory_space<vmem>>, %arg13: memref<8x128xf32, #tpu.memory_space<vmem>>) attributes {dimension_semantics = [#tpu.dimension_semantics<parallel>, #tpu.dimension_semantics<arbitrary>], iteration_bounds = array<i64: 1, 3>, scalar_prefetch = 0 : i64, scratch_operands = 0 : i64, tpu.core_type = #tpu.core_type<tc>, window_params = [{transform_indices = @transform_0, window_bounds = array<i64: 3, 3>}, {transform_indices = @transform_1, window_bounds = array<i64: 3, 3>}, {transform_indices = @transform_2, window_bounds = array<i64: 1, 8, 2048>}, {pipeline_mode = #tpu.pipeline_mode<synchronous>, transform_indices = @transform_3, window_bounds = array<i64: 2048, 512>}, {pipeline_mode = #tpu.pipeline_mode<synchronous>, transform_indices = @transform_4, window_bounds = array<i64: 1, 512>}, {pipeline_mode = #tpu.pipeline_mode<synchronous>, transform_indices = @transform_5, window_bounds = array<i64: 512, 256>}, {pipeline_mode = #tpu.pipeline_mode<synchronous>, transform_indices = @transform_6, window_bounds = array<i64: 1, 256>}, {pipeline_mode = #tpu.pipeline_mode<synchronous>, transform_indices = @transform_7, window_bounds = array<i64: 256, 128>}, {pipeline_mode = #tpu.pipeline_mode<synchronous>, transform_indices = @transform_8, window_bounds = array<i64: 1, 128>}, {pipeline_mode = #tpu.pipeline_mode<synchronous>, transform_indices = @transform_9, window_bounds = array<i64: 128, 128>}, {pipeline_mode = #tpu.pipeline_mode<synchronous>, transform_indices = @transform_10, window_bounds = array<i64: 1, 128>}, {transform_indices = @transform_11, window_bounds = array<i64: 8, 128>}]} {
    %c0 = arith.constant 0 : index
    %c0_0 = arith.constant 0 : index
    %c0_1 = arith.constant 0 : index
    %0 = vector.load %arg4[%c0, %c0_0, %c0_1] : memref<1x8x2048xbf16, #tpu.memory_space<vmem>>, vector<1x8x2048xbf16>
    %1 = vector.shape_cast %0 : vector<1x8x2048xbf16> to vector<8x2048xbf16>
    %c0_2 = arith.constant 0 : index
    %c0_3 = arith.constant 0 : index
    %2 = vector.load %arg5[%c0_2, %c0_3] : memref<2048x512xbf16, #tpu.memory_space<vmem>>, vector<2048x512xbf16>
    %cst = arith.constant dense<0.000000e+00> : vector<8x512xf32>
    %3 = tpu.matmul %1, %2, %cst {dimension_numbers = #tpu.dot_dimension_numbers<[1], [0], [0], [1], [0, 0, 1, 1], [], []>} : vector<8x2048xbf16>, vector<2048x512xbf16>, vector<8x512xf32> -> vector<8x512xf32>
    %c0_4 = arith.constant 0 : index
    %c0_5 = arith.constant 0 : index
    %4 = vector.load %arg6[%c0_4, %c0_5] : memref<1x512xf32, #tpu.memory_space<vmem>>, vector<1x512xf32>
    %5 = vector.broadcast %4 : vector<1x512xf32> to vector<8x512xf32>
    %6 = arith.addf %3, %5 : vector<8x512xf32>
    %c0_6 = arith.constant 0 : index
    %7 = arith.index_cast %arg1 : i32 to index
    %8 = memref.load %arg2[%c0_6, %7] : memref<3x3xf32, #tpu.memory_space<smem>>
    %9 = vector.broadcast %8 : f32 to vector<8x512xf32>
    %10 = arith.mulf %9, %6 : vector<8x512xf32>
    %c0_7 = arith.constant 0 : index
    %11 = arith.index_cast %arg1 : i32 to index
    %12 = memref.load %arg3[%c0_7, %11] : memref<3x3xf32, #tpu.memory_space<smem>>
    %13 = vector.broadcast %12 : f32 to vector<8x512xf32>
    %14 = arith.addf %10, %13 : vector<8x512xf32>
    %cst_8 = arith.constant 0.000000e+00 : f32
    %15 = vector.broadcast %cst_8 : f32 to vector<8x512xf32>
    %16 = arith.maximumf %14, %15 : vector<8x512xf32>
    %17 = arith.truncf %16 : vector<8x512xf32> to vector<8x512xbf16>
    %c0_9 = arith.constant 0 : index
    %c0_10 = arith.constant 0 : index
    %18 = vector.load %arg7[%c0_9, %c0_10] : memref<512x256xbf16, #tpu.memory_space<vmem>>, vector<512x256xbf16>
    %cst_11 = arith.constant dense<0.000000e+00> : vector<8x256xf32>
    %19 = tpu.matmul %17, %18, %cst_11 {dimension_numbers = #tpu.dot_dimension_numbers<[1], [0], [0], [1], [0, 0, 1, 1], [], []>} : vector<8x512xbf16>, vector<512x256xbf16>, vector<8x256xf32> -> vector<8x256xf32>
    %c0_12 = arith.constant 0 : index
    %c0_13 = arith.constant 0 : index
    %20 = vector.load %arg8[%c0_12, %c0_13] : memref<1x256xf32, #tpu.memory_space<vmem>>, vector<1x256xf32>
    %21 = vector.broadcast %20 : vector<1x256xf32> to vector<8x256xf32>
    %22 = arith.addf %19, %21 : vector<8x256xf32>
    %c1 = arith.constant 1 : index
    %23 = arith.index_cast %arg1 : i32 to index
    %24 = memref.load %arg2[%c1, %23] : memref<3x3xf32, #tpu.memory_space<smem>>
    %25 = vector.broadcast %24 : f32 to vector<8x256xf32>
    %26 = arith.mulf %25, %22 : vector<8x256xf32>
    %c1_14 = arith.constant 1 : index
    %27 = arith.index_cast %arg1 : i32 to index
    %28 = memref.load %arg3[%c1_14, %27] : memref<3x3xf32, #tpu.memory_space<smem>>
    %29 = vector.broadcast %28 : f32 to vector<8x256xf32>
    %30 = arith.addf %26, %29 : vector<8x256xf32>
    %cst_15 = arith.constant 0.000000e+00 : f32
    %31 = vector.broadcast %cst_15 : f32 to vector<8x256xf32>
    %32 = arith.maximumf %30, %31 : vector<8x256xf32>
    %33 = arith.truncf %32 : vector<8x256xf32> to vector<8x256xbf16>
    %c0_16 = arith.constant 0 : index
    %c0_17 = arith.constant 0 : index
    %34 = vector.load %arg9[%c0_16, %c0_17] : memref<256x128xbf16, #tpu.memory_space<vmem>>, vector<256x128xbf16>
    %cst_18 = arith.constant dense<0.000000e+00> : vector<8x128xf32>
    %35 = tpu.matmul %33, %34, %cst_18 {dimension_numbers = #tpu.dot_dimension_numbers<[1], [0], [0], [1], [0, 0, 1, 1], [], []>} : vector<8x256xbf16>, vector<256x128xbf16>, vector<8x128xf32> -> vector<8x128xf32>
    %c0_19 = arith.constant 0 : index
    %c0_20 = arith.constant 0 : index
    %36 = vector.load %arg10[%c0_19, %c0_20] : memref<1x128xf32, #tpu.memory_space<vmem>>, vector<1x128xf32>
    %37 = vector.broadcast %36 : vector<1x128xf32> to vector<8x128xf32>
    %38 = arith.addf %35, %37 : vector<8x128xf32>
    %c2 = arith.constant 2 : index
    %39 = arith.index_cast %arg1 : i32 to index
    %40 = memref.load %arg2[%c2, %39] : memref<3x3xf32, #tpu.memory_space<smem>>
    %41 = vector.broadcast %40 : f32 to vector<8x128xf32>
    %42 = arith.mulf %41, %38 : vector<8x128xf32>
    %c2_21 = arith.constant 2 : index
    %43 = arith.index_cast %arg1 : i32 to index
    %44 = memref.load %arg3[%c2_21, %43] : memref<3x3xf32, #tpu.memory_space<smem>>
    %45 = vector.broadcast %44 : f32 to vector<8x128xf32>
    %46 = arith.addf %42, %45 : vector<8x128xf32>
    %cst_22 = arith.constant 0.000000e+00 : f32
    %47 = vector.broadcast %cst_22 : f32 to vector<8x128xf32>
    %48 = arith.maximumf %46, %47 : vector<8x128xf32>
    %49 = arith.truncf %48 : vector<8x128xf32> to vector<8x128xbf16>
    %c0_23 = arith.constant 0 : index
    %c0_24 = arith.constant 0 : index
    %50 = vector.load %arg11[%c0_23, %c0_24] : memref<128x128xbf16, #tpu.memory_space<vmem>>, vector<128x128xbf16>
    %cst_25 = arith.constant dense<0.000000e+00> : vector<8x128xf32>
    %51 = tpu.matmul %49, %50, %cst_25 {dimension_numbers = #tpu.dot_dimension_numbers<[1], [0], [0], [1], [0, 0, 1, 1], [], []>} : vector<8x128xbf16>, vector<128x128xbf16>, vector<8x128xf32> -> vector<8x128xf32>
    %c0_26 = arith.constant 0 : index
    %c0_27 = arith.constant 0 : index
    %52 = vector.load %arg12[%c0_26, %c0_27] : memref<1x128xf32, #tpu.memory_space<vmem>>, vector<1x128xf32>
    %53 = vector.broadcast %52 : vector<1x128xf32> to vector<8x128xf32>
    %54 = arith.addf %51, %53 : vector<8x128xf32>
    %c0_i32 = arith.constant 0 : i32
    %55 = arith.cmpi eq, %arg1, %c0_i32 : i32
    %56 = arith.extui %55 : i1 to i32
    %c0_i32_28 = arith.constant 0 : i32
    %57 = arith.cmpi ne, %56, %c0_i32_28 : i32
    scf.if %57 {
      %c0_31 = arith.constant 0 : index
      %c0_32 = arith.constant 0 : index
      %61 = vector.load %arg13[%c0_31, %c0_32] : memref<8x128xf32, #tpu.memory_space<vmem>>, vector<8x128xf32>
      tpu.vector_store %arg13[%c0_31, %c0_32], %54 {strides = array<i32>} : memref<8x128xf32, #tpu.memory_space<vmem>>, vector<8x128xf32>,
    } else {
    }
    %c0_i32_29 = arith.constant 0 : i32
    %58 = arith.cmpi sgt, %arg1, %c0_i32_29 : i32
    %59 = arith.extui %58 : i1 to i32
    %c0_i32_30 = arith.constant 0 : i32
    %60 = arith.cmpi ne, %59, %c0_i32_30 : i32
    scf.if %60 {
      %c0_31 = arith.constant 0 : index
      %c0_32 = arith.constant 0 : index
      %61 = vector.load %arg13[%c0_31, %c0_32] : memref<8x128xf32, #tpu.memory_space<vmem>>, vector<8x128xf32>
      %62 = arith.maximumf %61, %54 : vector<8x128xf32>
      %c0_33 = arith.constant 0 : index
      %c0_34 = arith.constant 0 : index
      %63 = vector.load %arg13[%c0_33, %c0_34] : memref<8x128xf32, #tpu.memory_space<vmem>>, vector<8x128xf32>
      tpu.vector_store %arg13[%c0_33, %c0_34], %62 {strides = array<i32>} : memref<8x128xf32, #tpu.memory_space<vmem>>, vector<8x128xf32>,
    } else {
    }
    return
  }
  func.func @transform_0(%arg0: i32, %arg1: i32) -> (i32, i32) {
    %c0_i32 = arith.constant 0 : i32
    %c0_i32_0 = arith.constant 0 : i32
    %c0_i32_1 = arith.constant 0 : i32
    return %c0_i32, %c0_i32_0 : i32, i32
  }
  func.func @transform_1(%arg0: i32, %arg1: i32) -> (i32, i32) {
    %c0_i32 = arith.constant 0 : i32
    %c0_i32_0 = arith.constant 0 : i32
    %c0_i32_1 = arith.constant 0 : i32
    return %c0_i32, %c0_i32_0 : i32, i32
  }
  func.func @transform_2(%arg0: i32, %arg1: i32) -> (i32, i32, i32) {
    %c0_i32 = arith.constant 0 : i32
    %c0_i32_0 = arith.constant 0 : i32
    return %arg1, %arg0, %c0_i32 : i32, i32, i32
  }
  func.func @transform_3(%arg0: i32, %arg1: i32) -> (i32, i32) {
    %c0_i32 = arith.constant 0 : i32
    %c0_i32_0 = arith.constant 0 : i32
    %c0_i32_1 = arith.constant 0 : i32
    return %c0_i32, %c0_i32_0 : i32, i32
  }
  func.func @transform_4(%arg0: i32, %arg1: i32) -> (i32, i32) {
    %c0_i32 = arith.constant 0 : i32
    %c0_i32_0 = arith.constant 0 : i32
    %c0_i32_1 = arith.constant 0 : i32
    return %c0_i32, %c0_i32_0 : i32, i32
  }
  func.func @transform_5(%arg0: i32, %arg1: i32) -> (i32, i32) {
    %c0_i32 = arith.constant 0 : i32
    %c0_i32_0 = arith.constant 0 : i32
    %c0_i32_1 = arith.constant 0 : i32
    return %c0_i32, %c0_i32_0 : i32, i32
  }
  func.func @transform_6(%arg0: i32, %arg1: i32) -> (i32, i32) {
    %c0_i32 = arith.constant 0 : i32
    %c0_i32_0 = arith.constant 0 : i32
    %c0_i32_1 = arith.constant 0 : i32
    return %c0_i32, %c0_i32_0 : i32, i32
  }
  func.func @transform_7(%arg0: i32, %arg1: i32) -> (i32, i32) {
    %c0_i32 = arith.constant 0 : i32
    %c0_i32_0 = arith.constant 0 : i32
    %c0_i32_1 = arith.constant 0 : i32
    return %c0_i32, %c0_i32_0 : i32, i32
  }
  func.func @transform_8(%arg0: i32, %arg1: i32) -> (i32, i32) {
    %c0_i32 = arith.constant 0 : i32
    %c0_i32_0 = arith.constant 0 : i32
    %c0_i32_1 = arith.constant 0 : i32
    return %c0_i32, %c0_i32_0 : i32, i32
  }
  func.func @transform_9(%arg0: i32, %arg1: i32) -> (i32, i32) {
    %c0_i32 = arith.constant 0 : i32
    %c0_i32_0 = arith.constant 0 : i32
    %c0_i32_1 = arith.constant 0 : i32
    return %c0_i32, %c0_i32_0 : i32, i32
  }
  func.func @transform_10(%arg0: i32, %arg1: i32) -> (i32, i32) {
    %c0_i32 = arith.constant 0 : i32
    %c0_i32_0 = arith.constant 0 : i32
    %c0_i32_1 = arith.constant 0 : i32
    return %c0_i32, %c0_i32_0 : i32, i32
  }
  func.func @transform_11(%arg0: i32, %arg1: i32) -> (i32, i32) {
    %c0_i32 = arith.constant 0 : i32
    %c0_i32_0 = arith.constant 0 : i32
    return %arg0, %c0_i32 : i32, i32
  }
}

</mosaic_0001>

<llo_original>
// kernel: tpu_custom_call.1
$region0: #{tpu_custom_call.1}
  #allocation0 [shape = 'u32[]', space=smem, size = 0x4, offset = 0x4, fixed_abs, tag = 'smem constant byte address 0x4 - core index']
  #allocation1 [shape = 'u32[144,128]{1,0:T(1,128)}', space=vmem, size = 0x12000, scoped, tag = 'internal scratch']
  %s0 = inlined_call_operand.hbm [shape: f32[3,3], index: 0, kind: input, shape index: {}]
  %s1 = inlined_call_operand.hbm [shape: f32[3,3], index: 1, kind: input, shape index: {}]
  %s2 = inlined_call_operand.hbm [shape: bf16[3,8,2048], index: 2, kind: input, shape index: {}]
  %s3 = inlined_call_operand.hbm [shape: bf16[2048,512], index: 3, kind: input, shape index: {}]
  %s4 = inlined_call_operand.hbm [shape: f32[1,512], index: 4, kind: input, shape index: {}]
  %s5 = inlined_call_operand.hbm [shape: bf16[512,256], index: 5, kind: input, shape index: {}]
  %s6 = inlined_call_operand.hbm [shape: f32[1,256], index: 6, kind: input, shape index: {}]
  %s7 = inlined_call_operand.hbm [shape: bf16[256,128], index: 7, kind: input, shape index: {}]
  %s8 = inlined_call_operand.hbm [shape: f32[1,128], index: 8, kind: input, shape index: {}]
  %s9 = inlined_call_operand.hbm [shape: bf16[128,128], index: 9, kind: input, shape index: {}]
  %s10 = inlined_call_operand.hbm [shape: f32[1,128], index: 10, kind: input, shape index: {}]
  %s11 = inlined_call_operand.hbm [shape: f32[8,128], index: 11, kind: output, shape index: {}]
  %s12 = sld [smem:[#allocation0]]
  $region129: #{tpu_custom_call.1} parent=0
    _
  %s14 = ssub.s32 1, %s12
  %s15 = scalar_select 0, %s14, %s12
  $region1: #{tpu_custom_call.1} parent=0
    #allocation2 [shape = 'u8[2048]{0}', space=smem, size = 0x800, scoped, tag = 'input window, operand 0, single buffered']
    #allocation3 [shape = 's32[2]{0}', space=sflag, size = 0x8, scoped, tag = 'scoped memory for tpu_custom_call.1']
    #allocation4 [shape = 's32[2]{0}', space=sflag, size = 0x8, scoped, tag = 'scoped memory for tpu_custom_call.1']
    #allocation5 [shape = 's32[2]{0}', space=sflag, size = 0x8, scoped, tag = 'scoped memory for tpu_custom_call.1']
    #allocation6 [shape = 'u8[2048]{0}', space=smem, size = 0x800, scoped, tag = 'input window, operand 1, single buffered']
    #allocation7 [shape = 's32[1]{0}', space=sflag, size = 0x4, scoped, tag = 'scoped memory for tpu_custom_call.1']
    #allocation8 [shape = 'u8[65536]{0}', space=vmem, size = 0x10000, scoped, tag = 'input window, operand 2']
    #allocation9 [shape = 'u8[2097152]{0}', space=vmem, size = 0x200000, scoped, tag = 'input window, operand 3, single buffered']
    #allocation10 [shape = 's32[1]{0}', space=sflag, size = 0x4, scoped, tag = 'scoped memory for tpu_custom_call.1']
    #allocation11 [shape = 'u8[2048]{0}', space=vmem, size = 0x800, scoped, tag = 'input window, operand 4, single buffered']
    #allocation12 [shape = 'u8[262144]{0}', space=vmem, size = 0x40000, scoped, tag = 'input window, operand 5, single buffered']
    #allocation13 [shape = 's32[1]{0}', space=sflag, size = 0x4, scoped, tag = 'scoped memory for tpu_custom_call.1']
    #allocation14 [shape = 'u8[1024]{0}', space=vmem, size = 0x400, scoped, tag = 'input window, operand 6, single buffered']
    #allocation15 [shape = 'u8[65536]{0}', space=vmem, size = 0x10000, scoped, tag = 'input window, operand 7, single buffered']
    #allocation16 [shape = 's32[1]{0}', space=sflag, size = 0x4, scoped, tag = 'scoped memory for tpu_custom_call.1']
    #allocation17 [shape = 'u8[512]{0}', space=vmem, size = 0x400, scoped, tag = 'input window, operand 8, single buffered']
    #allocation18 [shape = 'u8[32768]{0}', space=vmem, size = 0x8000, scoped, tag = 'input window, operand 9, single buffered']
    #allocation19 [shape = 's32[1]{0}', space=sflag, size = 0x4, scoped, tag = 'scoped memory for tpu_custom_call.1']
    #allocation20 [shape = 'u8[512]{0}', space=vmem, size = 0x400, scoped, tag = 'input window, operand 10, single buffered']
    #allocation21 [shape = 'u8[4096]{0}', space=vmem, size = 0x1000, scoped, tag = 'output window, operand 0, single buffered']
    %16 = vsyncpa [#allocation5], 0
    %17 = vsyncpa [#allocation7], 0
    %18 = vsyncpa [#allocation3], 0
    %s19 = scalar_lea.sflag [#allocation3], 1
    %20 = vsyncpa %s19, 0
    %21 = vsyncpa [#allocation10], 0
    %22 = vsyncpa [#allocation13], 0
    %23 = vsyncpa [#allocation16], 0
    %24 = vsyncpa [#allocation19], 0
    %25 = vsyncpa [#allocation4], 0
    loop: start=0, step=1, limit=5
    $region2: #{tpu_custom_call.1} parent=1 // loop_pre_header
      _
    $region3: #{tpu_custom_call.1} parent=1 // loop_header
      %s27 = sphi 0, %s31
      %p28 = scmp.ge.s32.totalorder %s27, 5
      %s34 = sphi 0, %s46
      %s35 = sphi 0, %s42
      %s36 = sphi 0, %s34
      %s37 = sphi 0, %s35
      %s38 = sphi 0, %s36
      %s39 = sphi 0, %s37
      %s47 = sphi 0, %s47
      %s49 = sphi 0, %s47
      %s50 = sphi 0, %s49
      %s64 = sphi 0, %s50
      %s68 = sphi 0, %s68
      %s70 = sphi 0, %s68
      %s71 = sphi 0, %s70
      %s85 = sphi 0, %s71
      %s93 = sphi 0, %s95
      %s96 = sphi 0, %s93
      %s97 = sphi 0, %s96
      %s113 = sphi 0, %s97
      %s117 = sphi 0, %s117
      %s119 = sphi 0, %s117
      %s120 = sphi 0, %s119
      %s134 = sphi 0, %s120
      %s138 = sphi 0, %s138
      %s140 = sphi 0, %s138
      %s141 = sphi 0, %s140
      %s155 = sphi 0, %s141
      %s159 = sphi 0, %s159
      %s161 = sphi 0, %s159
      %s162 = sphi 0, %s161
      %s176 = sphi 0, %s162
      %s180 = sphi 0, %s180
      %s182 = sphi 0, %s180
      %s183 = sphi 0, %s182
      %s197 = sphi 0, %s183
      %s201 = sphi 0, %s201
      %s203 = sphi 0, %s201
      %s204 = sphi 0, %s203
      %s218 = sphi 0, %s204
      %s222 = sphi 0, %s222
      %s224 = sphi 0, %s222
      %s225 = sphi 0, %s224
      %s239 = sphi 0, %s225
      %s243 = sphi 0, %s243
      %s245 = sphi 0, %s243
      %s246 = sphi 0, %s245
      %s260 = sphi 0, %s246
      %s264 = sphi 0, %s264
      %s266 = sphi 0, %s264
      %s267 = sphi 0, %s266
      %s281 = sphi 0, %s267
      %s287 = sphi 0, %s289
      %s290 = sphi 0, %s287
      %s291 = sphi 0, %s290
      %s307 = sphi 0, %s291
    $region4: #{tpu_custom_call.1} parent=1 // loop_header_branch
      %30 = sbr.rel (%p28) target = $region8
    $region5: #{tpu_custom_call.1} parent=1 // loop_body
      %s32 = ssub.s32 %s27, 1
      %s33 = ssub.s32 %s27, 2
      %s40 = sadd.s32 1, %s35
      %p41 = scmp.ge.s32.totalorder %s40, 3
      %s42 = scalar_select %p41, 0, %s40
      %s43 = sadd.s32 1, %s34
      %s44 = scalar_select %p41, %s43, %s34
      %p45 = scmp.ge.s32.totalorder %s44, 1
      %s46 = scalar_select %p45, 0, %s44
      %s48 = sadd.s32 %s47, 1
      %p51 = scmp.eq.s32.totalorder %s27, 2
      %p52 = scmp.ne.s32.totalorder %s47, %s49
      %p53 = scmp.eq.s32.totalorder %s27, 0
      %p54 = por %p52, %p53
      %p55 = scmp.ne.s32.totalorder %s47, %s49
      %p56 = scmp.eq.s32.totalorder %s32, 2
      %p57 = por %p55, %p56
      %p58 = scmp.ne.s32.totalorder %s49, %s50
      %p59 = scmp.eq.s32.totalorder %s32, 0
      %p60 = por %p58, %p59
      %p61 = scmp.ne.s32.totalorder %s49, %s50
      %p62 = scmp.eq.s32.totalorder %s33, 2
      %p63 = por %p61, %p62
      %p65 = scmp.ne.s32.totalorder %s50, %s64
      %p66 = scmp.eq.s32.totalorder %s33, 0
      %p67 = por %p65, %p66
      %s69 = sadd.s32 %s68, 1
      %p72 = scmp.eq.s32.totalorder %s27, 2
      %p73 = scmp.ne.s32.totalorder %s68, %s70
      %p74 = scmp.eq.s32.totalorder %s27, 0
      %p75 = por %p73, %p74
      %p76 = scmp.ne.s32.totalorder %s68, %s70
      %p77 = scmp.eq.s32.totalorder %s32, 2
      %p78 = por %p76, %p77
      %p79 = scmp.ne.s32.totalorder %s70, %s71
      %p80 = scmp.eq.s32.totalorder %s32, 0
      %p81 = por %p79, %p80
      %p82 = scmp.ne.s32.totalorder %s70, %s71
      %p83 = scmp.eq.s32.totalorder %s33, 2
      %p84 = por %p82, %p83
      %p86 = scmp.ne.s32.totalorder %s71, %s85
      %p87 = scmp.eq.s32.totalorder %s33, 0
      %p88 = por %p86, %p87
      %s89 = ssub.s32 %s35, %s42
      %s90 = ssub.s32 %s34, %s46
      %s91 = sor.u32 %s89, %s90
      %p92 = scmp.eq.s32.totalorder %s91, 0
      %s94 = sadd.s32 %s93, 1
      %s95 = scalar_select %p92, %s93, %s94
      %p98 = pneg %p92
      %p99 = scmp.eq.s32.totalorder %s27, 2
      %p100 = por %p98, %p99
      %p101 = scmp.ne.s32.totalorder %s93, %s96
      %p102 = scmp.eq.s32.totalorder %s27, 0
      %p103 = por %p101, %p102
      %p104 = scmp.ne.s32.totalorder %s93, %s96
      %p105 = scmp.eq.s32.totalorder %s32, 2
      %p106 = por %p104, %p105
      %p107 = scmp.ne.s32.totalorder %s96, %s97
      %p108 = scmp.eq.s32.totalorder %s32, 0
      %p109 = por %p107, %p108
      %p110 = scmp.ne.s32.totalorder %s96, %s97
      %p111 = scmp.eq.s32.totalorder %s33, 2
      %p112 = por %p110, %p111
      %p114 = scmp.ne.s32.totalorder %s97, %s113
      %p115 = scmp.eq.s32.totalorder %s33, 0
      %p116 = por %p114, %p115
      %s118 = sadd.s32 %s117, 1
      %p121 = scmp.eq.s32.totalorder %s27, 2
      %p122 = scmp.ne.s32.totalorder %s117, %s119
      %p123 = scmp.eq.s32.totalorder %s27, 0
      %p124 = por %p122, %p123
      %p125 = scmp.ne.s32.totalorder %s117, %s119
      %p126 = scmp.eq.s32.totalorder %s32, 2
      %p127 = por %p125, %p126
      %p128 = scmp.ne.s32.totalorder %s119, %s120
      %p129 = scmp.eq.s32.totalorder %s32, 0
      %p130 = por %p128, %p129
      %p131 = scmp.ne.s32.totalorder %s119, %s120
      %p132 = scmp.eq.s32.totalorder %s33, 2
      %p133 = por %p131, %p132
      %p135 = scmp.ne.s32.totalorder %s120, %s134
      %p136 = scmp.eq.s32.totalorder %s33, 0
      %p137 = por %p135, %p136
      %s139 = sadd.s32 %s138, 1
      %p142 = scmp.eq.s32.totalorder %s27, 2
      %p143 = scmp.ne.s32.totalorder %s138, %s140
      %p144 = scmp.eq.s32.totalorder %s27, 0
      %p145 = por %p143, %p144
      %p146 = scmp.ne.s32.totalorder %s138, %s140
      %p147 = scmp.eq.s32.totalorder %s32, 2
      %p148 = por %p146, %p147
      %p149 = scmp.ne.s32.totalorder %s140, %s141
      %p150 = scmp.eq.s32.totalorder %s32, 0
      %p151 = por %p149, %p150
      %p152 = scmp.ne.s32.totalorder %s140, %s141
      %p153 = scmp.eq.s32.totalorder %s33, 2
      %p154 = por %p152, %p153
      %p156 = scmp.ne.s32.totalorder %s141, %s155
      %p157 = scmp.eq.s32.totalorder %s33, 0
      %p158 = por %p156, %p157
      %s160 = sadd.s32 %s159, 1
      %p163 = scmp.eq.s32.totalorder %s27, 2
      %p164 = scmp.ne.s32.totalorder %s159, %s161
      %p165 = scmp.eq.s32.totalorder %s27, 0
      %p166 = por %p164, %p165
      %p167 = scmp.ne.s32.totalorder %s159, %s161
      %p168 = scmp.eq.s32.totalorder %s32, 2
      %p169 = por %p167, %p168
      %p170 = scmp.ne.s32.totalorder %s161, %s162
      %p171 = scmp.eq.s32.totalorder %s32, 0
      %p172 = por %p170, %p171
      %p173 = scmp.ne.s32.totalorder %s161, %s162
      %p174 = scmp.eq.s32.totalorder %s33, 2
      %p175 = por %p173, %p174
      %p177 = scmp.ne.s32.totalorder %s162, %s176
      %p178 = scmp.eq.s32.totalorder %s33, 0
      %p179 = por %p177, %p178
      %s181 = sadd.s32 %s180, 1
      %p184 = scmp.eq.s32.totalorder %s27, 2
      %p185 = scmp.ne.s32.totalorder %s180, %s182
      %p186 = scmp.eq.s32.totalorder %s27, 0
      %p187 = por %p185, %p186
      %p188 = scmp.ne.s32.totalorder %s180, %s182
      %p189 = scmp.eq.s32.totalorder %s32, 2
      %p190 = por %p188, %p189
      %p191 = scmp.ne.s32.totalorder %s182, %s183
      %p192 = scmp.eq.s32.totalorder %s32, 0
      %p193 = por %p191, %p192
      %p194 = scmp.ne.s32.totalorder %s182, %s183
      %p195 = scmp.eq.s32.totalorder %s33, 2
      %p196 = por %p194, %p195
      %p198 = scmp.ne.s32.totalorder %s183, %s197
      %p199 = scmp.eq.s32.totalorder %s33, 0
      %p200 = por %p198, %p199
      %s202 = sadd.s32 %s201, 1
      %p205 = scmp.eq.s32.totalorder %s27, 2
      %p206 = scmp.ne.s32.totalorder %s201, %s203
      %p207 = scmp.eq.s32.totalorder %s27, 0
      %p208 = por %p206, %p207
      %p209 = scmp.ne.s32.totalorder %s201, %s203
      %p210 = scmp.eq.s32.totalorder %s32, 2
      %p211 = por %p209, %p210
      %p212 = scmp.ne.s32.totalorder %s203, %s204
      %p213 = scmp.eq.s32.totalorder %s32, 0
      %p214 = por %p212, %p213
      %p215 = scmp.ne.s32.totalorder %s203, %s204
      %p216 = scmp.eq.s32.totalorder %s33, 2
      %p217 = por %p215, %p216
      %p219 = scmp.ne.s32.totalorder %s204, %s218
      %p220 = scmp.eq.s32.totalorder %s33, 0
      %p221 = por %p219, %p220
      %s223 = sadd.s32 %s222, 1
      %p226 = scmp.eq.s32.totalorder %s27, 2
      %p227 = scmp.ne.s32.totalorder %s222, %s224
      %p228 = scmp.eq.s32.totalorder %s27, 0
      %p229 = por %p227, %p228
      %p230 = scmp.ne.s32.totalorder %s222, %s224
      %p231 = scmp.eq.s32.totalorder %s32, 2
      %p232 = por %p230, %p231
      %p233 = scmp.ne.s32.totalorder %s224, %s225
      %p234 = scmp.eq.s32.totalorder %s32, 0
      %p235 = por %p233, %p234
      %p236 = scmp.ne.s32.totalorder %s224, %s225
      %p237 = scmp.eq.s32.totalorder %s33, 2
      %p238 = por %p236, %p237
      %p240 = scmp.ne.s32.totalorder %s225, %s239
      %p241 = scmp.eq.s32.totalorder %s33, 0
      %p242 = por %p240, %p241
      %s244 = sadd.s32 %s243, 1
      %p247 = scmp.eq.s32.totalorder %s27, 2
      %p248 = scmp.ne.s32.totalorder %s243, %s245
      %p249 = scmp.eq.s32.totalorder %s27, 0
      %p250 = por %p248, %p249
      %p251 = scmp.ne.s32.totalorder %s243, %s245
      %p252 = scmp.eq.s32.totalorder %s32, 2
      %p253 = por %p251, %p252
      %p254 = scmp.ne.s32.totalorder %s245, %s246
      %p255 = scmp.eq.s32.totalorder %s32, 0
      %p256 = por %p254, %p255
      %p257 = scmp.ne.s32.totalorder %s245, %s246
      %p258 = scmp.eq.s32.totalorder %s33, 2
      %p259 = por %p257, %p258
      %p261 = scmp.ne.s32.totalorder %s246, %s260
      %p262 = scmp.eq.s32.totalorder %s33, 0
      %p263 = por %p261, %p262
      %s265 = sadd.s32 %s264, 1
      %p268 = scmp.eq.s32.totalorder %s27, 2
      %p269 = scmp.ne.s32.totalorder %s264, %s266
      %p270 = scmp.eq.s32.totalorder %s27, 0
      %p271 = por %p269, %p270
      %p272 = scmp.ne.s32.totalorder %s264, %s266
      %p273 = scmp.eq.s32.totalorder %s32, 2
      %p274 = por %p272, %p273
      %p275 = scmp.ne.s32.totalorder %s266, %s267
      %p276 = scmp.eq.s32.totalorder %s32, 0
      %p277 = por %p275, %p276
      %p278 = scmp.ne.s32.totalorder %s266, %s267
      %p279 = scmp.eq.s32.totalorder %s33, 2
      %p280 = por %p278, %p279
      %p282 = scmp.ne.s32.totalorder %s267, %s281
      %p283 = scmp.eq.s32.totalorder %s33, 0
      %p284 = por %p282, %p283
      %s285 = ssub.s32 %s34, %s46
      %p286 = scmp.eq.s32.totalorder %s285, 0
      %s288 = sadd.s32 %s287, 1
      %s289 = scalar_select %p286, %s287, %s288
      %p292 = pneg %p286
      %p293 = scmp.eq.s32.totalorder %s27, 2
      %p294 = por %p292, %p293
      %p295 = scmp.ne.s32.totalorder %s287, %s290
      %p296 = scmp.eq.s32.totalorder %s27, 0
      %p297 = por %p295, %p296
      %p298 = scmp.ne.s32.totalorder %s287, %s290
      %p299 = scmp.eq.s32.totalorder %s32, 2
      %p300 = por %p298, %p299
      %p301 = scmp.ne.s32.totalorder %s290, %s291
      %p302 = scmp.eq.s32.totalorder %s32, 0
      %p303 = por %p301, %p302
      %p304 = scmp.ne.s32.totalorder %s290, %s291
      %p305 = scmp.eq.s32.totalorder %s33, 2
      %p306 = por %p304, %p305
      %p308 = scmp.ne.s32.totalorder %s291, %s307
      %p309 = scmp.eq.s32.totalorder %s33, 0
      %p310 = por %p308, %p309
      %p311 = scmp.le.s32.totalorder 1, %s27
      %p312 = scmp.lt.s32.totalorder %s27, 4
      %p313 = pnand %p311, %p312
      %p314 = pneg %p313
      // Predicated region
      $region9: #{tpu_custom_call.1} parent=5 // pred_check
        _
      $region10: #{tpu_custom_call.1} parent=5 // pred_check_branch
        %316 = sbr.rel (%p313) target = $region12
      $region11: #{tpu_custom_call.1} parent=5 // pred_region
        %s317 = ssub.s32 %s27, 1
        // Predicated region
        $region13: #{tpu_custom_call.1} parent=11 // pred_check
          %p318 = pneg %p60
        $region14: #{tpu_custom_call.1} parent=11 // pred_check_branch
          %320 = sbr.rel (%p318) target = $region16
        $region15: #{tpu_custom_call.1} parent=11 // pred_region
          %s322 = ssub.s32 64, 64
          %323 = vsyncadd [#allocation5], %s322
          %326 = dma.hbm_to_smem %s0, 64, [#allocation2], [#allocation5]
        $region16: #{tpu_custom_call.1} parent=11 // pred_fallthru
          _
        // Predicated region
        $region17: #{tpu_custom_call.1} parent=11 // pred_check
          %p327 = pneg %p81
        $region18: #{tpu_custom_call.1} parent=11 // pred_check_branch
          %329 = sbr.rel (%p327) target = $region20
        $region19: #{tpu_custom_call.1} parent=11 // pred_region
          %s331 = ssub.s32 64, 64
          %332 = vsyncadd [#allocation7], %s331
          %335 = dma.hbm_to_smem %s1, 64, [#allocation6], [#allocation7]
        $region20: #{tpu_custom_call.1} parent=11 // pred_fallthru
          _
        // Predicated region
        $region21: #{tpu_custom_call.1} parent=11 // pred_check
          %p336 = pneg %p130
        $region22: #{tpu_custom_call.1} parent=11 // pred_check_branch
          %338 = sbr.rel (%p336) target = $region24
        $region23: #{tpu_custom_call.1} parent=11 // pred_region
          %s340 = ssub.s32 65536, 65536
          %341 = vsyncadd [#allocation10], %s340
          %s342 = sshll.u32 [#allocation9], 4
          %s343 = int_to_ptr.vmem [resolvable:$true] %s342
          %348 = dma.hbm_to_vmem [thread:$0]  %s3, 65536, %s343, [#allocation10], 256, 256, 16
        $region24: #{tpu_custom_call.1} parent=11 // pred_fallthru
          _
        // Predicated region
        $region25: #{tpu_custom_call.1} parent=11 // pred_check
          %p349 = pneg %p151
        $region26: #{tpu_custom_call.1} parent=11 // pred_check_branch
          %351 = sbr.rel (%p349) target = $region28
        $region27: #{tpu_custom_call.1} parent=11 // pred_region
          %s353 = ssub.s32 64, 64
          %354 = vsyncadd [#allocation10], %s353
          %s356 = sshll.u32 [#allocation11], 4
          %s357 = int_to_ptr.vmem [resolvable:$true] %s356
          %359 = dma.hbm_to_vmem [thread:$0]  %s4, 64, %s357, [#allocation10]
        $region28: #{tpu_custom_call.1} parent=11 // pred_fallthru
          _
        // Predicated region
        $region29: #{tpu_custom_call.1} parent=11 // pred_check
          %p360 = pneg %p172
        $region30: #{tpu_custom_call.1} parent=11 // pred_check_branch
          %362 = sbr.rel (%p360) target = $region32
        $region31: #{tpu_custom_call.1} parent=11 // pred_region
          %s364 = ssub.s32 8192, 8192
          %365 = vsyncadd [#allocation13], %s364
          %s366 = sshll.u32 [#allocation12], 4
          %s367 = int_to_ptr.vmem [resolvable:$true] %s366
          %372 = dma.hbm_to_vmem [thread:$0]  %s5, 8192, %s367, [#allocation13], 128, 128, 8
        $region32: #{tpu_custom_call.1} parent=11 // pred_fallthru
          _
        // Predicated region
        $region33: #{tpu_custom_call.1} parent=11 // pred_check
          %p373 = pneg %p193
        $region34: #{tpu_custom_call.1} parent=11 // pred_check_branch
          %375 = sbr.rel (%p373) target = $region36
        $region35: #{tpu_custom_call.1} parent=11 // pred_region
          %s377 = ssub.s32 32, 32
          %378 = vsyncadd [#allocation13], %s377
          %s380 = sshll.u32 [#allocation14], 4
          %s381 = int_to_ptr.vmem [resolvable:$true] %s380
          %383 = dma.hbm_to_vmem [thread:$0]  %s6, 32, %s381, [#allocation13]
        $region36: #{tpu_custom_call.1} parent=11 // pred_fallthru
          _
        // Predicated region
        $region37: #{tpu_custom_call.1} parent=11 // pred_check
          %p384 = pneg %p214
        $region38: #{tpu_custom_call.1} parent=11 // pred_check_branch
          %386 = sbr.rel (%p384) target = $region40
        $region39: #{tpu_custom_call.1} parent=11 // pred_region
          %s388 = ssub.s32 2048, 2048
          %389 = vsyncadd [#allocation16], %s388
          %s390 = sshll.u32 [#allocation15], 4
          %s391 = int_to_ptr.vmem [resolvable:$true] %s390
          %396 = dma.hbm_to_vmem [thread:$0]  %s7, 2048, %s391, [#allocation16], 64, 64, 4
        $region40: #{tpu_custom_call.1} parent=11 // pred_fallthru
          _
        // Predicated region
        $region41: #{tpu_custom_call.1} parent=11 // pred_check
          %p397 = pneg %p235
        $region42: #{tpu_custom_call.1} parent=11 // pred_check_branch
          %399 = sbr.rel (%p397) target = $region44
        $region43: #{tpu_custom_call.1} parent=11 // pred_region
          %s401 = ssub.s32 16, 16
          %402 = vsyncadd [#allocation16], %s401
          %s404 = sshll.u32 [#allocation17], 4
          %s405 = int_to_ptr.vmem [resolvable:$true] %s404
          %407 = dma.hbm_to_vmem [thread:$0]  %s8, 16, %s405, [#allocation16]
        $region44: #{tpu_custom_call.1} parent=11 // pred_fallthru
          _
        // Predicated region
        $region45: #{tpu_custom_call.1} parent=11 // pred_check
          %p408 = pneg %p256
        $region46: #{tpu_custom_call.1} parent=11 // pred_check_branch
          %410 = sbr.rel (%p408) target = $region48
        $region47: #{tpu_custom_call.1} parent=11 // pred_region
          %s412 = ssub.s32 1024, 1024
          %413 = vsyncadd [#allocation19], %s412
          %s414 = sshll.u32 [#allocation18], 4
          %s415 = int_to_ptr.vmem [resolvable:$true] %s414
          %420 = dma.hbm_to_vmem [thread:$0]  %s9, 1024, %s415, [#allocation19], 64, 64, 4
        $region48: #{tpu_custom_call.1} parent=11 // pred_fallthru
          _
        // Predicated region
        $region49: #{tpu_custom_call.1} parent=11 // pred_check
          %p421 = pneg %p277
        $region50: #{tpu_custom_call.1} parent=11 // pred_check_branch
          %423 = sbr.rel (%p421) target = $region52
        $region51: #{tpu_custom_call.1} parent=11 // pred_region
          %s425 = ssub.s32 16, 16
          %426 = vsyncadd [#allocation19], %s425
          %s428 = sshll.u32 [#allocation20], 4
          %s429 = int_to_ptr.vmem [resolvable:$true] %s428
          %431 = dma.hbm_to_vmem [thread:$0]  %s10, 16, %s429, [#allocation19]
        $region52: #{tpu_custom_call.1} parent=11 // pred_fallthru
          _
      $region12: #{tpu_custom_call.1} parent=5 // pred_fallthru
        _
      %p432 = scmp.lt.s32.totalorder %s27, 3
      // Predicated region
      $region53: #{tpu_custom_call.1} parent=5 // pred_check
        %p433 = pneg %p432
      $region54: #{tpu_custom_call.1} parent=5 // pred_check_branch
        %435 = sbr.rel (%p433) target = $region56
      $region55: #{tpu_custom_call.1} parent=5 // pred_region
        // Predicated region
        $region57: #{tpu_custom_call.1} parent=55 // pred_check
          %p436 = pneg %p103
        $region58: #{tpu_custom_call.1} parent=55 // pred_check_branch
          %438 = sbr.rel (%p436) target = $region60
        $region59: #{tpu_custom_call.1} parent=55 // pred_region
          %s439 = sand.u32 %s93, 1
          %s440 = scalar_lea.sflag [#allocation3], %s439
          %s441 = sand.u32 %s93, 1
          %s442 = smul.addr %s441, 64
          %s443 = scalar_lea.vmem [#allocation8], %s442
          %s445 = ssub.s32 1024, 1024
          %446 = vsyncadd %s440, %s445
          %s447 = smul.addr %s34, 16
          %s448 = smul.addr %s35, 16
          %s449 = sadd.s32 %s447, %s448
          %s450 = smul.addr %s449, 64
          %s451 = scalar_lea.hbm %s2, %s450
          %s453 = sshll.u32 %s443, 4
          %s454 = int_to_ptr.vmem [resolvable:$true] %s453
          %456 = dma.hbm_to_vmem [thread:$0]  %s451, 1024, %s454, %s440
        $region60: #{tpu_custom_call.1} parent=55 // pred_fallthru
          _
      $region56: #{tpu_custom_call.1} parent=5 // pred_fallthru
        _
      %p457 = scmp.le.s32.totalorder 1, %s27
      %p458 = scmp.lt.s32.totalorder %s27, 4
      %p459 = pnand %p457, %p458
      %p460 = pneg %p459
      // Predicated region
      $region61: #{tpu_custom_call.1} parent=5 // pred_check
        _
      $region62: #{tpu_custom_call.1} parent=5 // pred_check_branch
        %462 = sbr.rel (%p459) target = $region64
      $region63: #{tpu_custom_call.1} parent=5 // pred_region
        %s463 = ssub.s32 %s27, 1
        // Predicated region
        $region65: #{tpu_custom_call.1} parent=63 // pred_check
          %p464 = pneg %p60
        $region66: #{tpu_custom_call.1} parent=63 // pred_check_branch
          %466 = sbr.rel (%p464) target = $region68
        $region67: #{tpu_custom_call.1} parent=63 // pred_region
          %467 = dma.done [#allocation5], 64
        $region68: #{tpu_custom_call.1} parent=63 // pred_fallthru
          _
        // Predicated region
        $region69: #{tpu_custom_call.1} parent=63 // pred_check
          %p468 = pneg %p81
        $region70: #{tpu_custom_call.1} parent=63 // pred_check_branch
          %470 = sbr.rel (%p468) target = $region72
        $region71: #{tpu_custom_call.1} parent=63 // pred_region
          %471 = dma.done [#allocation7], 64
        $region72: #{tpu_custom_call.1} parent=63 // pred_fallthru
          _
        %s472 = sand.u32 %s96, 1
        %s473 = scalar_lea.sflag [#allocation3], %s472
        %s474 = sand.u32 %s96, 1
        %s475 = smul.addr %s474, 64
        %s476 = scalar_lea.vmem [#allocation8], %s475
        // Predicated region
        $region73: #{tpu_custom_call.1} parent=63 // pred_check
          %p477 = pneg %p109
        $region74: #{tpu_custom_call.1} parent=63 // pred_check_branch
          %479 = sbr.rel (%p477) target = $region76
        $region75: #{tpu_custom_call.1} parent=63 // pred_region
          %480 = dma.done %s473, 1024
        $region76: #{tpu_custom_call.1} parent=63 // pred_fallthru
          _
        // Predicated region
        $region77: #{tpu_custom_call.1} parent=63 // pred_check
          %p481 = pneg %p130
        $region78: #{tpu_custom_call.1} parent=63 // pred_check_branch
          %483 = sbr.rel (%p481) target = $region80
        $region79: #{tpu_custom_call.1} parent=63 // pred_region
          %484 = dma.done [#allocation10], 65536
        $region80: #{tpu_custom_call.1} parent=63 // pred_fallthru
          _
        // Predicated region
        $region81: #{tpu_custom_call.1} parent=63 // pred_check
          %p485 = pneg %p151
        $region82: #{tpu_custom_call.1} parent=63 // pred_check_branch
          %487 = sbr.rel (%p485) target = $region84
        $region83: #{tpu_custom_call.1} parent=63 // pred_region
          %488 = dma.done [#allocation10], 64
        $region84: #{tpu_custom_call.1} parent=63 // pred_fallthru
          _
        // Predicated region
        $region85: #{tpu_custom_call.1} parent=63 // pred_check
          %p489 = pneg %p172
        $region86: #{tpu_custom_call.1} parent=63 // pred_check_branch
          %491 = sbr.rel (%p489) target = $region88
        $region87: #{tpu_custom_call.1} parent=63 // pred_region
          %492 = dma.done [#allocation13], 8192
        $region88: #{tpu_custom_call.1} parent=63 // pred_fallthru
          _
        // Predicated region
        $region89: #{tpu_custom_call.1} parent=63 // pred_check
          %p493 = pneg %p193
        $region90: #{tpu_custom_call.1} parent=63 // pred_check_branch
          %495 = sbr.rel (%p493) target = $region92
        $region91: #{tpu_custom_call.1} parent=63 // pred_region
          %496 = dma.done [#allocation13], 32
        $region92: #{tpu_custom_call.1} parent=63 // pred_fallthru
          _
        // Predicated region
        $region93: #{tpu_custom_call.1} parent=63 // pred_check
          %p497 = pneg %p214
        $region94: #{tpu_custom_call.1} parent=63 // pred_check_branch
          %499 = sbr.rel (%p497) target = $region96
        $region95: #{tpu_custom_call.1} parent=63 // pred_region
          %500 = dma.done [#allocation16], 2048
        $region96: #{tpu_custom_call.1} parent=63 // pred_fallthru
          _
        // Predicated region
        $region97: #{tpu_custom_call.1} parent=63 // pred_check
          %p501 = pneg %p235
        $region98: #{tpu_custom_call.1} parent=63 // pred_check_branch
          %503 = sbr.rel (%p501) target = $region100
        $region99: #{tpu_custom_call.1} parent=63 // pred_region
          %504 = dma.done [#allocation16], 16
        $region100: #{tpu_custom_call.1} parent=63 // pred_fallthru
          _
        // Predicated region
        $region101: #{tpu_custom_call.1} parent=63 // pred_check
          %p505 = pneg %p256
        $region102: #{tpu_custom_call.1} parent=63 // pred_check_branch
          %507 = sbr.rel (%p505) target = $region104
        $region103: #{tpu_custom_call.1} parent=63 // pred_region
          %508 = dma.done [#allocation19], 1024
        $region104: #{tpu_custom_call.1} parent=63 // pred_fallthru
          _
        // Predicated region
        $region105: #{tpu_custom_call.1} parent=63 // pred_check
          %p509 = pneg %p277
        $region106: #{tpu_custom_call.1} parent=63 // pred_check_branch
          %511 = sbr.rel (%p509) target = $region108
        $region107: #{tpu_custom_call.1} parent=63 // pred_region
          %512 = dma.done [#allocation19], 16
        $region108: #{tpu_custom_call.1} parent=63 // pred_fallthru
          _
        %513 = sfence
        %p514 = pneg %p60
        %p515 = pneg %p57
        %p516 = pneg %p81
        %p517 = pneg %p78
        %s518 = sand.u32 %s96, 1
        %s519 = scalar_lea.sflag [#allocation3], %s518
        %s520 = sand.u32 %s96, 1
        %s521 = smul.addr %s520, 64
        %s522 = scalar_lea.vmem [#allocation8], %s521
        %p523 = pneg %p109
        %p524 = pneg %p106
        %p525 = pneg %p130
        %p526 = pneg %p127
        %p527 = pneg %p151
        %p528 = pneg %p148
        %p529 = pneg %p172
        %p530 = pneg %p169
        %p531 = pneg %p193
        %p532 = pneg %p190
        %p533 = pneg %p214
        %p534 = pneg %p211
        %p535 = pneg %p235
        %p536 = pneg %p232
        %p537 = pneg %p256
        %p538 = pneg %p253
        %p539 = pneg %p277
        %p540 = pneg %p274
        %p541 = pneg %p303
        %p542 = pneg %p300
        %v544 = vld [vmem:[%s476] sm:$0xff]
        %v545 = vld [vmem:[%s476 + $0x8] sm:$0xff]
        %v546 = vld [vmem:[%s476 + $0x10] sm:$0xff]
        %v547 = vld [vmem:[%s476 + $0x18] sm:$0xff]
        %v548 = vld [vmem:[%s476 + $0x20] sm:$0xff]
        %v549 = vld [vmem:[%s476 + $0x28] sm:$0xff]
        %v550 = vld [vmem:[%s476 + $0x30] sm:$0xff]
        %v551 = vld [vmem:[%s476 + $0x38] sm:$0xff]
        %v552 = vld [vmem:[#allocation9] sm:$0xff]
        %v553 = vld [vmem:[#allocation9 + $0x8] sm:$0xff]
        %v554 = vld [vmem:[#allocation9 + $0x10] sm:$0xff]
        %v555 = vld [vmem:[#allocation9 + $0x18] sm:$0xff]
        %v556 = vld [vmem:[#allocation9 + $0x20] sm:$0xff]
        %v557 = vld [vmem:[#allocation9 + $0x28] sm:$0xff]
        %v558 = vld [vmem:[#allocation9 + $0x30] sm:$0xff]
        %v559 = vld [vmem:[#allocation9 + $0x38] sm:$0xff]
        %v560 = vld [vmem:[#allocation9 + $0x40] sm:$0xff]
        %v561 = vld [vmem:[#allocation9 + $0x48] sm:$0xff]
        %v562 = vld [vmem:[#allocation9 + $0x50] sm:$0xff]
        %v563 = vld [vmem:[#allocation9 + $0x58] sm:$0xff]
        %v564 = vld [vmem:[#allocation9 + $0x60] sm:$0xff]
        %v565 = vld [vmem:[#allocation9 + $0x68] sm:$0xff]
        %v566 = vld [vmem:[#allocation9 + $0x70] sm:$0xff]
        %v567 = vld [vmem:[#allocation9 + $0x78] sm:$0xff]
        %v568 = vld [vmem:[#allocation9 + $0x80] sm:$0xff]
        %v569 = vld [vmem:[#allocation9 + $0x88] sm:$0xff]
        %v570 = vld [vmem:[#allocation9 + $0x90] sm:$0xff]
        %v571 = vld [vmem:[#allocation9 + $0x98] sm:$0xff]
        %v572 = vld [vmem:[#allocation9 + $0xa0] sm:$0xff]
        %v573 = vld [vmem:[#allocation9 + $0xa8] sm:$0xff]
        %v574 = vld [vmem:[#allocation9 + $0xb0] sm:$0xff]
        %v575 = vld [vmem:[#allocation9 + $0xb8] sm:$0xff]
        %v576 = vld [vmem:[#allocation9 + $0xc0] sm:$0xff]
        %v577 = vld [vmem:[#allocation9 + $0xc8] sm:$0xff]
        %v578 = vld [vmem:[#allocation9 + $0xd0] sm:$0xff]
        %v579 = vld [vmem:[#allocation9 + $0xd8] sm:$0xff]
        %v580 = vld [vmem:[#allocation9 + $0xe0] sm:$0xff]
        %v581 = vld [vmem:[#allocation9 + $0xe8] sm:$0xff]
        %v582 = vld [vmem:[#allocation9 + $0xf0] sm:$0xff]
        %v583 = vld [vmem:[#allocation9 + $0xf8] sm:$0xff]
        %v584 = vld [vmem:[#allocation9 + $0x100] sm:$0xff]
        %v585 = vld [vmem:[#allocation9 + $0x108] sm:$0xff]
        %v586 = vld [vmem:[#allocation9 + $0x110] sm:$0xff]
        %v587 = vld [vmem:[#allocation9 + $0x118] sm:$0xff]
        %v588 = vld [vmem:[#allocation9 + $0x120] sm:$0xff]
        %v589 = vld [vmem:[#allocation9 + $0x128] sm:$0xff]
        %v590 = vld [vmem:[#allocation9 + $0x130] sm:$0xff]
        %v591 = vld [vmem:[#allocation9 + $0x138] sm:$0xff]
        %v592 = vld [vmem:[#allocation9 + $0x140] sm:$0xff]
        %v593 = vld [vmem:[#allocation9 + $0x148] sm:$0xff]
        %v594 = vld [vmem:[#allocation9 + $0x150] sm:$0xff]
        %v595 = vld [vmem:[#allocation9 + $0x158] sm:$0xff]
        %v596 = vld [vmem:[#allocation9 + $0x160] sm:$0xff]
        %v597 = vld [vmem:[#allocation9 + $0x168] sm:$0xff]
        %v598 = vld [vmem:[#allocation9 + $0x170] sm:$0xff]
        %v599 = vld [vmem:[#allocation9 + $0x178] sm:$0xff]
        %v600 = vld [vmem:[#allocation9 + $0x180] sm:$0xff]
        %v601 = vld [vmem:[#allocation9 + $0x188] sm:$0xff]
        %v602 = vld [vmem:[#allocation9 + $0x190] sm:$0xff]
        %v603 = vld [vmem:[#allocation9 + $0x198] sm:$0xff]
        %v604 = vld [vmem:[#allocation9 + $0x1a0] sm:$0xff]
        %v605 = vld [vmem:[#allocation9 + $0x1a8] sm:$0xff]
        %v606 = vld [vmem:[#allocation9 + $0x1b0] sm:$0xff]
        %v607 = vld [vmem:[#allocation9 + $0x1b8] sm:$0xff]
        %v608 = vld [vmem:[#allocation9 + $0x1c0] sm:$0xff]
        %v609 = vld [vmem:[#allocation9 + $0x1c8] sm:$0xff]
        %v610 = vld [vmem:[#allocation9 + $0x1d0] sm:$0xff]
        %v611 = vld [vmem:[#allocation9 + $0x1d8] sm:$0xff]
        %v612 = vld [vmem:[#allocation9 + $0x1e0] sm:$0xff]
        %v613 = vld [vmem:[#allocation9 + $0x1e8] sm:$0xff]
        %v614 = vld [vmem:[#allocation9 + $0x1f0] sm:$0xff]
        %v615 = vld [vmem:[#allocation9 + $0x1f8] sm:$0xff]
        %v616 = vld [vmem:[#allocation9 + $0x200] sm:$0xff]
        %v617 = vld [vmem:[#allocation9 + $0x208] sm:$0xff]
        %v618 = vld [vmem:[#allocation9 + $0x210] sm:$0xff]
        %v619 = vld [vmem:[#allocation9 + $0x218] sm:$0xff]
        %v620 = vld [vmem:[#allocation9 + $0x220] sm:$0xff]
        %v621 = vld [vmem:[#allocation9 + $0x228] sm:$0xff]
        %v622 = vld [vmem:[#allocation9 + $0x230] sm:$0xff]
        %v623 = vld [vmem:[#allocation9 + $0x238] sm:$0xff]
        %v624 = vld [vmem:[#allocation9 + $0x240] sm:$0xff]
        %v625 = vld [vmem:[#allocation9 + $0x248] sm:$0xff]
        %v626 = vld [vmem:[#allocation9 + $0x250] sm:$0xff]
        %v627 = vld [vmem:[#allocation9 + $0x258] sm:$0xff]
        %v628 = vld [vmem:[#allocation9 + $0x260] sm:$0xff]
        %v629 = vld [vmem:[#allocation9 + $0x268] sm:$0xff]
        %v630 = vld [vmem:[#allocation9 + $0x270] sm:$0xff]
        %v631 = vld [vmem:[#allocation9 + $0x278] sm:$0xff]
        %v632 = vld [vmem:[#allocation9 + $0x280] sm:$0xff]
        %v633 = vld [vmem:[#allocation9 + $0x288] sm:$0xff]
        %v634 = vld [vmem:[#allocation9 + $0x290] sm:$0xff]
        %v635 = vld [vmem:[#allocation9 + $0x298] sm:$0xff]
        %v636 = vld [vmem:[#allocation9 + $0x2a0] sm:$0xff]
        %v637 = vld [vmem:[#allocation9 + $0x2a8] sm:$0xff]
        %v638 = vld [vmem:[#allocation9 + $0x2b0] sm:$0xff]
        %v639 = vld [vmem:[#allocation9 + $0x2b8] sm:$0xff]
        %v640 = vld [vmem:[#allocation9 + $0x2c0] sm:$0xff]
        %v641 = vld [vmem:[#allocation9 + $0x2c8] sm:$0xff]
        %v642 = vld [vmem:[#allocation9 + $0x2d0] sm:$0xff]
        %v643 = vld [vmem:[#allocation9 + $0x2d8] sm:$0xff]
        %v644 = vld [vmem:[#allocation9 + $0x2e0] sm:$0xff]
        %v645 = vld [vmem:[#allocation9 + $0x2e8] sm:$0xff]
        %v646 = vld [vmem:[#allocation9 + $0x2f0] sm:$0xff]
        %v647 = vld [vmem:[#allocation9 + $0x2f8] sm:$0xff]
        %v648 = vld [vmem:[#allocation9 + $0x300] sm:$0xff]
        %v649 = vld [vmem:[#allocation9 + $0x308] sm:$0xff]
        %v650 = vld [vmem:[#allocation9 + $0x310] sm:$0xff]
        %v651 = vld [vmem:[#allocation9 + $0x318] sm:$0xff]
        %v652 = vld [vmem:[#allocation9 + $0x320] sm:$0xff]
        %v653 = vld [vmem:[#allocation9 + $0x328] sm:$0xff]
        %v654 = vld [vmem:[#allocation9 + $0x330] sm:$0xff]
        %v655 = vld [vmem:[#allocation9 + $0x338] sm:$0xff]
        %v656 = vld [vmem:[#allocation9 + $0x340] sm:$0xff]
        %v657 = vld [vmem:[#allocation9 + $0x348] sm:$0xff]
        %v658 = vld [vmem:[#allocation9 + $0x350] sm:$0xff]
        %v659 = vld [vmem:[#allocation9 + $0x358] sm:$0xff]
        %v660 = vld [vmem:[#allocation9 + $0x360] sm:$0xff]
        %v661 = vld [vmem:[#allocation9 + $0x368] sm:$0xff]
        %v662 = vld [vmem:[#allocation9 + $0x370] sm:$0xff]
        %v663 = vld [vmem:[#allocation9 + $0x378] sm:$0xff]
        %v664 = vld [vmem:[#allocation9 + $0x380] sm:$0xff]
        %v665 = vld [vmem:[#allocation9 + $0x388] sm:$0xff]
        %v666 = vld [vmem:[#allocation9 + $0x390] sm:$0xff]
        %v667 = vld [vmem:[#allocation9 + $0x398] sm:$0xff]
        %v668 = vld [vmem:[#allocation9 + $0x3a0] sm:$0xff]
        %v669 = vld [vmem:[#allocation9 + $0x3a8] sm:$0xff]
        %v670 = vld [vmem:[#allocation9 + $0x3b0] sm:$0xff]
        %v671 = vld [vmem:[#allocation9 + $0x3b8] sm:$0xff]
        %v672 = vld [vmem:[#allocation9 + $0x3c0] sm:$0xff]
        %v673 = vld [vmem:[#allocation9 + $0x3c8] sm:$0xff]
        %v674 = vld [vmem:[#allocation9 + $0x3d0] sm:$0xff]
        %v675 = vld [vmem:[#allocation9 + $0x3d8] sm:$0xff]
        %v676 = vld [vmem:[#allocation9 + $0x3e0] sm:$0xff]
        %v677 = vld [vmem:[#allocation9 + $0x3e8] sm:$0xff]
        %v678 = vld [vmem:[#allocation9 + $0x3f0] sm:$0xff]
        %v679 = vld [vmem:[#allocation9 + $0x3f8] sm:$0xff]
        %v680 = vld [vmem:[#allocation9 + $0x400] sm:$0xff]
        %v681 = vld [vmem:[#allocation9 + $0x408] sm:$0xff]
        %v682 = vld [vmem:[#allocation9 + $0x410] sm:$0xff]
        %v683 = vld [vmem:[#allocation9 + $0x418] sm:$0xff]
        %v684 = vld [vmem:[#allocation9 + $0x420] sm:$0xff]
        %v685 = vld [vmem:[#allocation9 + $0x428] sm:$0xff]
        %v686 = vld [vmem:[#allocation9 + $0x430] sm:$0xff]
        %v687 = vld [vmem:[#allocation9 + $0x438] sm:$0xff]
        %v688 = vld [vmem:[#allocation9 + $0x440] sm:$0xff]
        %v689 = vld [vmem:[#allocation9 + $0x448] sm:$0xff]
        %v690 = vld [vmem:[#allocation9 + $0x450] sm:$0xff]
        %v691 = vld [vmem:[#allocation9 + $0x458] sm:$0xff]
        %v692 = vld [vmem:[#allocation9 + $0x460] sm:$0xff]
        %v693 = vld [vmem:[#allocation9 + $0x468] sm:$0xff]
        %v694 = vld [vmem:[#allocation9 + $0x470] sm:$0xff]
        %v695 = vld [vmem:[#allocation9 + $0x478] sm:$0xff]
        %v696 = vld [vmem:[#allocation9 + $0x480] sm:$0xff]
        %v697 = vld [vmem:[#allocation9 + $0x488] sm:$0xff]
        %v698 = vld [vmem:[#allocation9 + $0x490] sm:$0xff]
        %v699 = vld [vmem:[#allocation9 + $0x498] sm:$0xff]
        %v700 = vld [vmem:[#allocation9 + $0x4a0] sm:$0xff]
        %v701 = vld [vmem:[#allocation9 + $0x4a8] sm:$0xff]
        %v702 = vld [vmem:[#allocation9 + $0x4b0] sm:$0xff]
        %v703 = vld [vmem:[#allocation9 + $0x4b8] sm:$0xff]
        %v704 = vld [vmem:[#allocation9 + $0x4c0] sm:$0xff]
        %v705 = vld [vmem:[#allocation9 + $0x4c8] sm:$0xff]
        %v706 = vld [vmem:[#allocation9 + $0x4d0] sm:$0xff]
        %v707 = vld [vmem:[#allocation9 + $0x4d8] sm:$0xff]
        %v708 = vld [vmem:[#allocation9 + $0x4e0] sm:$0xff]
        %v709 = vld [vmem:[#allocation9 + $0x4e8] sm:$0xff]
        %v710 = vld [vmem:[#allocation9 + $0x4f0] sm:$0xff]
        %v711 = vld [vmem:[#allocation9 + $0x4f8] sm:$0xff]
        %v712 = vld [vmem:[#allocation9 + $0x500] sm:$0xff]
        %v713 = vld [vmem:[#allocation9 + $0x508] sm:$0xff]
        %v714 = vld [vmem:[#allocation9 + $0x510] sm:$0xff]
        %v715 = vld [vmem:[#allocation9 + $0x518] sm:$0xff]
        %v716 = vld [vmem:[#allocation9 + $0x520] sm:$0xff]
        %v717 = vld [vmem:[#allocation9 + $0x528] sm:$0xff]
        %v718 = vld [vmem:[#allocation9 + $0x530] sm:$0xff]
        %v719 = vld [vmem:[#allocation9 + $0x538] sm:$0xff]
        %v720 = vld [vmem:[#allocation9 + $0x540] sm:$0xff]
        %v721 = vld [vmem:[#allocation9 + $0x548] sm:$0xff]
        %v722 = vld [vmem:[#allocation9 + $0x550] sm:$0xff]
        %v723 = vld [vmem:[#allocation9 + $0x558] sm:$0xff]
        %v724 = vld [vmem:[#allocation9 + $0x560] sm:$0xff]
        %v725 = vld [vmem:[#allocation9 + $0x568] sm:$0xff]
        %v726 = vld [vmem:[#allocation9 + $0x570] sm:$0xff]
        %v727 = vld [vmem:[#allocation9 + $0x578] sm:$0xff]
        %v728 = vld [vmem:[#allocation9 + $0x580] sm:$0xff]
        %v729 = vld [vmem:[#allocation9 + $0x588] sm:$0xff]
        %v730 = vld [vmem:[#allocation9 + $0x590] sm:$0xff]
        %v731 = vld [vmem:[#allocation9 + $0x598] sm:$0xff]
        %v732 = vld [vmem:[#allocation9 + $0x5a0] sm:$0xff]
        %v733 = vld [vmem:[#allocation9 + $0x5a8] sm:$0xff]
        %v734 = vld [vmem:[#allocation9 + $0x5b0] sm:$0xff]
        %v735 = vld [vmem:[#allocation9 + $0x5b8] sm:$0xff]
        %v736 = vld [vmem:[#allocation9 + $0x5c0] sm:$0xff]
        %v737 = vld [vmem:[#allocation9 + $0x5c8] sm:$0xff]
        %v738 = vld [vmem:[#allocation9 + $0x5d0] sm:$0xff]
        %v739 = vld [vmem:[#allocation9 + $0x5d8] sm:$0xff]
        %v740 = vld [vmem:[#allocation9 + $0x5e0] sm:$0xff]
        %v741 = vld [vmem:[#allocation9 + $0x5e8] sm:$0xff]
        %v742 = vld [vmem:[#allocation9 + $0x5f0] sm:$0xff]
        %v743 = vld [vmem:[#allocation9 + $0x5f8] sm:$0xff]
        %v744 = vld [vmem:[#allocation9 + $0x600] sm:$0xff]
        %v745 = vld [vmem:[#allocation9 + $0x608] sm:$0xff]
        %v746 = vld [vmem:[#allocation9 + $0x610] sm:$0xff]
        %v747 = vld [vmem:[#allocation9 + $0x618] sm:$0xff]
        %v748 = vld [vmem:[#allocation9 + $0x620] sm:$0xff]
        %v749 = vld [vmem:[#allocation9 + $0x628] sm:$0xff]
        %v750 = vld [vmem:[#allocation9 + $0x630] sm:$0xff]
        %v751 = vld [vmem:[#allocation9 + $0x638] sm:$0xff]
        %v752 = vld [vmem:[#allocation9 + $0x640] sm:$0xff]
        %v753 = vld [vmem:[#allocation9 + $0x648] sm:$0xff]
        %v754 = vld [vmem:[#allocation9 + $0x650] sm:$0xff]
        %v755 = vld [vmem:[#allocation9 + $0x658] sm:$0xff]
        %v756 = vld [vmem:[#allocation9 + $0x660] sm:$0xff]
        %v757 = vld [vmem:[#allocation9 + $0x668] sm:$0xff]
        %v758 = vld [vmem:[#allocation9 + $0x670] sm:$0xff]
        %v759 = vld [vmem:[#allocation9 + $0x678] sm:$0xff]
        %v760 = vld [vmem:[#allocation9 + $0x680] sm:$0xff]
        %v761 = vld [vmem:[#allocation9 + $0x688] sm:$0xff]
        %v762 = vld [vmem:[#allocation9 + $0x690] sm:$0xff]
        %v763 = vld [vmem:[#allocation9 + $0x698] sm:$0xff]
        %v764 = vld [vmem:[#allocation9 + $0x6a0] sm:$0xff]
        %v765 = vld [vmem:[#allocation9 + $0x6a8] sm:$0xff]
        %v766 = vld [vmem:[#allocation9 + $0x6b0] sm:$0xff]
        %v767 = vld [vmem:[#allocation9 + $0x6b8] sm:$0xff]
        %v768 = vld [vmem:[#allocation9 + $0x6c0] sm:$0xff]
        %v769 = vld [vmem:[#allocation9 + $0x6c8] sm:$0xff]
        %v770 = vld [vmem:[#allocation9 + $0x6d0] sm:$0xff]
        %v771 = vld [vmem:[#allocation9 + $0x6d8] sm:$0xff]
        %v772 = vld [vmem:[#allocation9 + $0x6e0] sm:$0xff]
        %v773 = vld [vmem:[#allocation9 + $0x6e8] sm:$0xff]
        %v774 = vld [vmem:[#allocation9 + $0x6f0] sm:$0xff]
        %v775 = vld [vmem:[#allocation9 + $0x6f8] sm:$0xff]
        %v776 = vld [vmem:[#allocation9 + $0x700] sm:$0xff]
        %v777 = vld [vmem:[#allocation9 + $0x708] sm:$0xff]
        %v778 = vld [vmem:[#allocation9 + $0x710] sm:$0xff]
        %v779 = vld [vmem:[#allocation9 + $0x718] sm:$0xff]
        %v780 = vld [vmem:[#allocation9 + $0x720] sm:$0xff]
        %v781 = vld [vmem:[#allocation9 + $0x728] sm:$0xff]
        %v782 = vld [vmem:[#allocation9 + $0x730] sm:$0xff]
        %v783 = vld [vmem:[#allocation9 + $0x738] sm:$0xff]
        %v784 = vld [vmem:[#allocation9 + $0x740] sm:$0xff]
        %v785 = vld [vmem:[#allocation9 + $0x748] sm:$0xff]
        %v786 = vld [vmem:[#allocation9 + $0x750] sm:$0xff]
        %v787 = vld [vmem:[#allocation9 + $0x758] sm:$0xff]
        %v788 = vld [vmem:[#allocation9 + $0x760] sm:$0xff]
        %v789 = vld [vmem:[#allocation9 + $0x768] sm:$0xff]
        %v790 = vld [vmem:[#allocation9 + $0x770] sm:$0xff]
        %v791 = vld [vmem:[#allocation9 + $0x778] sm:$0xff]
        %v792 = vld [vmem:[#allocation9 + $0x780] sm:$0xff]
        %v793 = vld [vmem:[#allocation9 + $0x788] sm:$0xff]
        %v794 = vld [vmem:[#allocation9 + $0x790] sm:$0xff]
        %v795 = vld [vmem:[#allocation9 + $0x798] sm:$0xff]
        %v796 = vld [vmem:[#allocation9 + $0x7a0] sm:$0xff]
        %v797 = vld [vmem:[#allocation9 + $0x7a8] sm:$0xff]
        %v798 = vld [vmem:[#allocation9 + $0x7b0] sm:$0xff]
        %v799 = vld [vmem:[#allocation9 + $0x7b8] sm:$0xff]
        %v800 = vld [vmem:[#allocation9 + $0x7c0] sm:$0xff]
        %v801 = vld [vmem:[#allocation9 + $0x7c8] sm:$0xff]
        %v802 = vld [vmem:[#allocation9 + $0x7d0] sm:$0xff]
        %v803 = vld [vmem:[#allocation9 + $0x7d8] sm:$0xff]
        %v804 = vld [vmem:[#allocation9 + $0x7e0] sm:$0xff]
        %v805 = vld [vmem:[#allocation9 + $0x7e8] sm:$0xff]
        %v806 = vld [vmem:[#allocation9 + $0x7f0] sm:$0xff]
        %v807 = vld [vmem:[#allocation9 + $0x7f8] sm:$0xff]
        %v808 = vld [vmem:[#allocation9 + $0x800] sm:$0xff]
        %v809 = vld [vmem:[#allocation9 + $0x808] sm:$0xff]
        %v810 = vld [vmem:[#allocation9 + $0x810] sm:$0xff]
        %v811 = vld [vmem:[#allocation9 + $0x818] sm:$0xff]
        %v812 = vld [vmem:[#allocation9 + $0x820] sm:$0xff]
        %v813 = vld [vmem:[#allocation9 + $0x828] sm:$0xff]
        %v814 = vld [vmem:[#allocation9 + $0x830] sm:$0xff]
        %v815 = vld [vmem:[#allocation9 + $0x838] sm:$0xff]
        %v816 = vld [vmem:[#allocation9 + $0x840] sm:$0xff]
        %v817 = vld [vmem:[#allocation9 + $0x848] sm:$0xff]
        %v818 = vld [vmem:[#allocation9 + $0x850] sm:$0xff]
        %v819 = vld [vmem:[#allocation9 + $0x858] sm:$0xff]
        %v820 = vld [vmem:[#allocation9 + $0x860] sm:$0xff]
        %v821 = vld [vmem:[#allocation9 + $0x868] sm:$0xff]
        %v822 = vld [vmem:[#allocation9 + $0x870] sm:$0xff]
        %v823 = vld [vmem:[#allocation9 + $0x878] sm:$0xff]
        %v824 = vld [vmem:[#allocation9 + $0x880] sm:$0xff]
        %v825 = vld [vmem:[#allocation9 + $0x888] sm:$0xff]
        %v826 = vld [vmem:[#allocation9 + $0x890] sm:$0xff]
        %v827 = vld [vmem:[#allocation9 + $0x898] sm:$0xff]
        %v828 = vld [vmem:[#allocation9 + $0x8a0] sm:$0xff]
        %v829 = vld [vmem:[#allocation9 + $0x8a8] sm:$0xff]
        %v830 = vld [vmem:[#allocation9 + $0x8b0] sm:$0xff]
        %v831 = vld [vmem:[#allocation9 + $0x8b8] sm:$0xff]
        %v832 = vld [vmem:[#allocation9 + $0x8c0] sm:$0xff]
        %v833 = vld [vmem:[#allocation9 + $0x8c8] sm:$0xff]
        %v834 = vld [vmem:[#allocation9 + $0x8d0] sm:$0xff]
        %v835 = vld [vmem:[#allocation9 + $0x8d8] sm:$0xff]
        %v836 = vld [vmem:[#allocation9 + $0x8e0] sm:$0xff]
        %v837 = vld [vmem:[#allocation9 + $0x8e8] sm:$0xff]
        %v838 = vld [vmem:[#allocation9 + $0x8f0] sm:$0xff]
        %v839 = vld [vmem:[#allocation9 + $0x8f8] sm:$0xff]
        %v840 = vld [vmem:[#allocation9 + $0x900] sm:$0xff]
        %v841 = vld [vmem:[#allocation9 + $0x908] sm:$0xff]
        %v842 = vld [vmem:[#allocation9 + $0x910] sm:$0xff]
        %v843 = vld [vmem:[#allocation9 + $0x918] sm:$0xff]
        %v844 = vld [vmem:[#allocation9 + $0x920] sm:$0xff]
        %v845 = vld [vmem:[#allocation9 + $0x928] sm:$0xff]
        %v846 = vld [vmem:[#allocation9 + $0x930] sm:$0xff]
        %v847 = vld [vmem:[#allocation9 + $0x938] sm:$0xff]
        %v848 = vld [vmem:[#allocation9 + $0x940] sm:$0xff]
        %v849 = vld [vmem:[#allocation9 + $0x948] sm:$0xff]
        %v850 = vld [vmem:[#allocation9 + $0x950] sm:$0xff]
        %v851 = vld [vmem:[#allocation9 + $0x958] sm:$0xff]
        %v852 = vld [vmem:[#allocation9 + $0x960] sm:$0xff]
        %v853 = vld [vmem:[#allocation9 + $0x968] sm:$0xff]
        %v854 = vld [vmem:[#allocation9 + $0x970] sm:$0xff]
        %v855 = vld [vmem:[#allocation9 + $0x978] sm:$0xff]
        %v856 = vld [vmem:[#allocation9 + $0x980] sm:$0xff]
        %v857 = vld [vmem:[#allocation9 + $0x988] sm:$0xff]
        %v858 = vld [vmem:[#allocation9 + $0x990] sm:$0xff]
        %v859 = vld [vmem:[#allocation9 + $0x998] sm:$0xff]
        %v860 = vld [vmem:[#allocation9 + $0x9a0] sm:$0xff]
        %v861 = vld [vmem:[#allocation9 + $0x9a8] sm:$0xff]
        %v862 = vld [vmem:[#allocation9 + $0x9b0] sm:$0xff]
        %v863 = vld [vmem:[#allocation9 + $0x9b8] sm:$0xff]
        %v864 = vld [vmem:[#allocation9 + $0x9c0] sm:$0xff]
        %v865 = vld [vmem:[#allocation9 + $0x9c8] sm:$0xff]
        %v866 = vld [vmem:[#allocation9 + $0x9d0] sm:$0xff]
        %v867 = vld [vmem:[#allocation9 + $0x9d8] sm:$0xff]
        %v868 = vld [vmem:[#allocation9 + $0x9e0] sm:$0xff]
        %v869 = vld [vmem:[#allocation9 + $0x9e8] sm:$0xff]
        %v870 = vld [vmem:[#allocation9 + $0x9f0] sm:$0xff]
        %v871 = vld [vmem:[#allocation9 + $0x9f8] sm:$0xff]
        %v872 = vld [vmem:[#allocation9 + $0xa00] sm:$0xff]
        %v873 = vld [vmem:[#allocation9 + $0xa08] sm:$0xff]
        %v874 = vld [vmem:[#allocation9 + $0xa10] sm:$0xff]
        %v875 = vld [vmem:[#allocation9 + $0xa18] sm:$0xff]
        %v876 = vld [vmem:[#allocation9 + $0xa20] sm:$0xff]
        %v877 = vld [vmem:[#allocation9 + $0xa28] sm:$0xff]
        %v878 = vld [vmem:[#allocation9 + $0xa30] sm:$0xff]
        %v879 = vld [vmem:[#allocation9 + $0xa38] sm:$0xff]
        %v880 = vld [vmem:[#allocation9 + $0xa40] sm:$0xff]
        %v881 = vld [vmem:[#allocation9 + $0xa48] sm:$0xff]
        %v882 = vld [vmem:[#allocation9 + $0xa50] sm:$0xff]
        %v883 = vld [vmem:[#allocation9 + $0xa58] sm:$0xff]
        %v884 = vld [vmem:[#allocation9 + $0xa60] sm:$0xff]
        %v885 = vld [vmem:[#allocation9 + $0xa68] sm:$0xff]
        %v886 = vld [vmem:[#allocation9 + $0xa70] sm:$0xff]
        %v887 = vld [vmem:[#allocation9 + $0xa78] sm:$0xff]
        %v888 = vld [vmem:[#allocation9 + $0xa80] sm:$0xff]
        %v889 = vld [vmem:[#allocation9 + $0xa88] sm:$0xff]
        %v890 = vld [vmem:[#allocation9 + $0xa90] sm:$0xff]
        %v891 = vld [vmem:[#allocation9 + $0xa98] sm:$0xff]
        %v892 = vld [vmem:[#allocation9 + $0xaa0] sm:$0xff]
        %v893 = vld [vmem:[#allocation9 + $0xaa8] sm:$0xff]
        %v894 = vld [vmem:[#allocation9 + $0xab0] sm:$0xff]
        %v895 = vld [vmem:[#allocation9 + $0xab8] sm:$0xff]
        %v896 = vld [vmem:[#allocation9 + $0xac0] sm:$0xff]
        %v897 = vld [vmem:[#allocation9 + $0xac8] sm:$0xff]
        %v898 = vld [vmem:[#allocation9 + $0xad0] sm:$0xff]
        %v899 = vld [vmem:[#allocation9 + $0xad8] sm:$0xff]
        %v900 = vld [vmem:[#allocation9 + $0xae0] sm:$0xff]
        %v901 = vld [vmem:[#allocation9 + $0xae8] sm:$0xff]
        %v902 = vld [vmem:[#allocation9 + $0xaf0] sm:$0xff]
        %v903 = vld [vmem:[#allocation9 + $0xaf8] sm:$0xff]
        %v904 = vld [vmem:[#allocation9 + $0xb00] sm:$0xff]
        %v905 = vld [vmem:[#allocation9 + $0xb08] sm:$0xff]
        %v906 = vld [vmem:[#allocation9 + $0xb10] sm:$0xff]
        %v907 = vld [vmem:[#allocation9 + $0xb18] sm:$0xff]
        %v908 = vld [vmem:[#allocation9 + $0xb20] sm:$0xff]
        %v909 = vld [vmem:[#allocation9 + $0xb28] sm:$0xff]
        %v910 = vld [vmem:[#allocation9 + $0xb30] sm:$0xff]
        %v911 = vld [vmem:[#allocation9 + $0xb38] sm:$0xff]
        %v912 = vld [vmem:[#allocation9 + $0xb40] sm:$0xff]
        %v913 = vld [vmem:[#allocation9 + $0xb48] sm:$0xff]
        %v914 = vld [vmem:[#allocation9 + $0xb50] sm:$0xff]
        %v915 = vld [vmem:[#allocation9 + $0xb58] sm:$0xff]
        %v916 = vld [vmem:[#allocation9 + $0xb60] sm:$0xff]
        %v917 = vld [vmem:[#allocation9 + $0xb68] sm:$0xff]
        %v918 = vld [vmem:[#allocation9 + $0xb70] sm:$0xff]
        %v919 = vld [vmem:[#allocation9 + $0xb78] sm:$0xff]
        %v920 = vld [vmem:[#allocation9 + $0xb80] sm:$0xff]
        %v921 = vld [vmem:[#allocation9 + $0xb88] sm:$0xff]
        %v922 = vld [vmem:[#allocation9 + $0xb90] sm:$0xff]
        %v923 = vld [vmem:[#allocation9 + $0xb98] sm:$0xff]
        %v924 = vld [vmem:[#allocation9 + $0xba0] sm:$0xff]
        %v925 = vld [vmem:[#allocation9 + $0xba8] sm:$0xff]
        %v926 = vld [vmem:[#allocation9 + $0xbb0] sm:$0xff]
        %v927 = vld [vmem:[#allocation9 + $0xbb8] sm:$0xff]
        %v928 = vld [vmem:[#allocation9 + $0xbc0] sm:$0xff]
        %v929 = vld [vmem:[#allocation9 + $0xbc8] sm:$0xff]
        %v930 = vld [vmem:[#allocation9 + $0xbd0] sm:$0xff]
        %v931 = vld [vmem:[#allocation9 + $0xbd8] sm:$0xff]
        %v932 = vld [vmem:[#allocation9 + $0xbe0] sm:$0xff]
        %v933 = vld [vmem:[#allocation9 + $0xbe8] sm:$0xff]
        %v934 = vld [vmem:[#allocation9 + $0xbf0] sm:$0xff]
        %v935 = vld [vmem:[#allocation9 + $0xbf8] sm:$0xff]
        %v936 = vld [vmem:[#allocation9 + $0xc00] sm:$0xff]
        %v937 = vld [vmem:[#allocation9 + $0xc08] sm:$0xff]
        %v938 = vld [vmem:[#allocation9 + $0xc10] sm:$0xff]
        %v939 = vld [vmem:[#allocation9 + $0xc18] sm:$0xff]
        %v940 = vld [vmem:[#allocation9 + $0xc20] sm:$0xff]
        %v941 = vld [vmem:[#allocation9 + $0xc28] sm:$0xff]
        %v942 = vld [vmem:[#allocation9 + $0xc30] sm:$0xff]
        %v943 = vld [vmem:[#allocation9 + $0xc38] sm:$0xff]
        %v944 = vld [vmem:[#allocation9 + $0xc40] sm:$0xff]
        %v945 = vld [vmem:[#allocation9 + $0xc48] sm:$0xff]
        %v946 = vld [vmem:[#allocation9 + $0xc50] sm:$0xff]
        %v947 = vld [vmem:[#allocation9 + $0xc58] sm:$0xff]
        %v948 = vld [vmem:[#allocation9 + $0xc60] sm:$0xff]
        %v949 = vld [vmem:[#allocation9 + $0xc68] sm:$0xff]
        %v950 = vld [vmem:[#allocation9 + $0xc70] sm:$0xff]
        %v951 = vld [vmem:[#allocation9 + $0xc78] sm:$0xff]
        %v952 = vld [vmem:[#allocation9 + $0xc80] sm:$0xff]
        %v953 = vld [vmem:[#allocation9 + $0xc88] sm:$0xff]
        %v954 = vld [vmem:[#allocation9 + $0xc90] sm:$0xff]
        %v955 = vld [vmem:[#allocation9 + $0xc98] sm:$0xff]
        %v956 = vld [vmem:[#allocation9 + $0xca0] sm:$0xff]
        %v957 = vld [vmem:[#allocation9 + $0xca8] sm:$0xff]
        %v958 = vld [vmem:[#allocation9 + $0xcb0] sm:$0xff]
        %v959 = vld [vmem:[#allocation9 + $0xcb8] sm:$0xff]
        %v960 = vld [vmem:[#allocation9 + $0xcc0] sm:$0xff]
        %v961 = vld [vmem:[#allocation9 + $0xcc8] sm:$0xff]
        %v962 = vld [vmem:[#allocation9 + $0xcd0] sm:$0xff]
        %v963 = vld [vmem:[#allocation9 + $0xcd8] sm:$0xff]
        %v964 = vld [vmem:[#allocation9 + $0xce0] sm:$0xff]
        %v965 = vld [vmem:[#allocation9 + $0xce8] sm:$0xff]
        %v966 = vld [vmem:[#allocation9 + $0xcf0] sm:$0xff]
        %v967 = vld [vmem:[#allocation9 + $0xcf8] sm:$0xff]
        %v968 = vld [vmem:[#allocation9 + $0xd00] sm:$0xff]
        %v969 = vld [vmem:[#allocation9 + $0xd08] sm:$0xff]
        %v970 = vld [vmem:[#allocation9 + $0xd10] sm:$0xff]
        %v971 = vld [vmem:[#allocation9 + $0xd18] sm:$0xff]
        %v972 = vld [vmem:[#allocation9 + $0xd20] sm:$0xff]
        %v973 = vld [vmem:[#allocation9 + $0xd28] sm:$0xff]
        %v974 = vld [vmem:[#allocation9 + $0xd30] sm:$0xff]
        %v975 = vld [vmem:[#allocation9 + $0xd38] sm:$0xff]
        %v976 = vld [vmem:[#allocation9 + $0xd40] sm:$0xff]
        %v977 = vld [vmem:[#allocation9 + $0xd48] sm:$0xff]
        %v978 = vld [vmem:[#allocation9 + $0xd50] sm:$0xff]
        %v979 = vld [vmem:[#allocation9 + $0xd58] sm:$0xff]
        %v980 = vld [vmem:[#allocation9 + $0xd60] sm:$0xff]
        %v981 = vld [vmem:[#allocation9 + $0xd68] sm:$0xff]
        %v982 = vld [vmem:[#allocation9 + $0xd70] sm:$0xff]
        %v983 = vld [vmem:[#allocation9 + $0xd78] sm:$0xff]
        %v984 = vld [vmem:[#allocation9 + $0xd80] sm:$0xff]
        %v985 = vld [vmem:[#allocation9 + $0xd88] sm:$0xff]
        %v986 = vld [vmem:[#allocation9 + $0xd90] sm:$0xff]
        %v987 = vld [vmem:[#allocation9 + $0xd98] sm:$0xff]
        %v988 = vld [vmem:[#allocation9 + $0xda0] sm:$0xff]
        %v989 = vld [vmem:[#allocation9 + $0xda8] sm:$0xff]
        %v990 = vld [vmem:[#allocation9 + $0xdb0] sm:$0xff]
        %v991 = vld [vmem:[#allocation9 + $0xdb8] sm:$0xff]
        %v992 = vld [vmem:[#allocation9 + $0xdc0] sm:$0xff]
        %v993 = vld [vmem:[#allocation9 + $0xdc8] sm:$0xff]
        %v994 = vld [vmem:[#allocation9 + $0xdd0] sm:$0xff]
        %v995 = vld [vmem:[#allocation9 + $0xdd8] sm:$0xff]
        %v996 = vld [vmem:[#allocation9 + $0xde0] sm:$0xff]
        %v997 = vld [vmem:[#allocation9 + $0xde8] sm:$0xff]
        %v998 = vld [vmem:[#allocation9 + $0xdf0] sm:$0xff]
        %v999 = vld [vmem:[#allocation9 + $0xdf8] sm:$0xff]
        %v1000 = vld [vmem:[#allocation9 + $0xe00] sm:$0xff]
        %v1001 = vld [vmem:[#allocation9 + $0xe08] sm:$0xff]
        %v1002 = vld [vmem:[#allocation9 + $0xe10] sm:$0xff]
        %v1003 = vld [vmem:[#allocation9 + $0xe18] sm:$0xff]
        %v1004 = vld [vmem:[#allocation9 + $0xe20] sm:$0xff]
        %v1005 = vld [vmem:[#allocation9 + $0xe28] sm:$0xff]
        %v1006 = vld [vmem:[#allocation9 + $0xe30] sm:$0xff]
        %v1007 = vld [vmem:[#allocation9 + $0xe38] sm:$0xff]
        %v1008 = vld [vmem:[#allocation9 + $0xe40] sm:$0xff]
        %v1009 = vld [vmem:[#allocation9 + $0xe48] sm:$0xff]
        %v1010 = vld [vmem:[#allocation9 + $0xe50] sm:$0xff]
        %v1011 = vld [vmem:[#allocation9 + $0xe58] sm:$0xff]
        %v1012 = vld [vmem:[#allocation9 + $0xe60] sm:$0xff]
        %v1013 = vld [vmem:[#allocation9 + $0xe68] sm:$0xff]
        %v1014 = vld [vmem:[#allocation9 + $0xe70] sm:$0xff]
        %v1015 = vld [vmem:[#allocation9 + $0xe78] sm:$0xff]
        %v1016 = vld [vmem:[#allocation9 + $0xe80] sm:$0xff]
        %v1017 = vld [vmem:[#allocation9 + $0xe88] sm:$0xff]
        %v1018 = vld [vmem:[#allocation9 + $0xe90] sm:$0xff]
        %v1019 = vld [vmem:[#allocation9 + $0xe98] sm:$0xff]
        %v1020 = vld [vmem:[#allocation9 + $0xea0] sm:$0xff]
        %v1021 = vld [vmem:[#allocation9 + $0xea8] sm:$0xff]
        %v1022 = vld [vmem:[#allocation9 + $0xeb0] sm:$0xff]
        %v1023 = vld [vmem:[#allocation9 + $0xeb8] sm:$0xff]
        %v1024 = vld [vmem:[#allocation9 + $0xec0] sm:$0xff]
        %v1025 = vld [vmem:[#allocation9 + $0xec8] sm:$0xff]
        %v1026 = vld [vmem:[#allocation9 + $0xed0] sm:$0xff]
        %v1027 = vld [vmem:[#allocation9 + $0xed8] sm:$0xff]
        %v1028 = vld [vmem:[#allocation9 + $0xee0] sm:$0xff]
        %v1029 = vld [vmem:[#allocation9 + $0xee8] sm:$0xff]
        %v1030 = vld [vmem:[#allocation9 + $0xef0] sm:$0xff]
        %v1031 = vld [vmem:[#allocation9 + $0xef8] sm:$0xff]
        %v1032 = vld [vmem:[#allocation9 + $0xf00] sm:$0xff]
        %v1033 = vld [vmem:[#allocation9 + $0xf08] sm:$0xff]
        %v1034 = vld [vmem:[#allocation9 + $0xf10] sm:$0xff]
        %v1035 = vld [vmem:[#allocation9 + $0xf18] sm:$0xff]
        %v1036 = vld [vmem:[#allocation9 + $0xf20] sm:$0xff]
        %v1037 = vld [vmem:[#allocation9 + $0xf28] sm:$0xff]
        %v1038 = vld [vmem:[#allocation9 + $0xf30] sm:$0xff]
        %v1039 = vld [vmem:[#allocation9 + $0xf38] sm:$0xff]
        %v1040 = vld [vmem:[#allocation9 + $0xf40] sm:$0xff]
        %v1041 = vld [vmem:[#allocation9 + $0xf48] sm:$0xff]
        %v1042 = vld [vmem:[#allocation9 + $0xf50] sm:$0xff]
        %v1043 = vld [vmem:[#allocation9 + $0xf58] sm:$0xff]
        %v1044 = vld [vmem:[#allocation9 + $0xf60] sm:$0xff]
        %v1045 = vld [vmem:[#allocation9 + $0xf68] sm:$0xff]
        %v1046 = vld [vmem:[#allocation9 + $0xf70] sm:$0xff]
        %v1047 = vld [vmem:[#allocation9 + $0xf78] sm:$0xff]
        %v1048 = vld [vmem:[#allocation9 + $0xf80] sm:$0xff]
        %v1049 = vld [vmem:[#allocation9 + $0xf88] sm:$0xff]
        %v1050 = vld [vmem:[#allocation9 + $0xf90] sm:$0xff]
        %v1051 = vld [vmem:[#allocation9 + $0xf98] sm:$0xff]
        %v1052 = vld [vmem:[#allocation9 + $0xfa0] sm:$0xff]
        %v1053 = vld [vmem:[#allocation9 + $0xfa8] sm:$0xff]
        %v1054 = vld [vmem:[#allocation9 + $0xfb0] sm:$0xff]
        %v1055 = vld [vmem:[#allocation9 + $0xfb8] sm:$0xff]
        %v1056 = vld [vmem:[#allocation9 + $0xfc0] sm:$0xff]
        %v1057 = vld [vmem:[#allocation9 + $0xfc8] sm:$0xff]
        %v1058 = vld [vmem:[#allocation9 + $0xfd0] sm:$0xff]
        %v1059 = vld [vmem:[#allocation9 + $0xfd8] sm:$0xff]
        %v1060 = vld [vmem:[#allocation9 + $0xfe0] sm:$0xff]
        %v1061 = vld [vmem:[#allocation9 + $0xfe8] sm:$0xff]
        %v1062 = vld [vmem:[#allocation9 + $0xff0] sm:$0xff]
        %v1063 = vld [vmem:[#allocation9 + $0xff8] sm:$0xff]
        %v1064 = vld [vmem:[#allocation11] sm:$0xf]
        %v1066 = vlaneseq
        %v1067 = vshrl.u32 %v1066, 7
        %v1068 = vsub.s32 0, %v1067
        %v1069 = vrot.slane %v1064, %v1068
        %v1070 = vlaneseq
        %v1071 = vshrl.u32 %v1070, 7
        %v1072 = vsub.s32 1, %v1071
        %v1073 = vrot.slane %v1064, %v1072
        %v1074 = vlaneseq
        %v1075 = vshrl.u32 %v1074, 7
        %v1076 = vsub.s32 2, %v1075
        %v1077 = vrot.slane %v1064, %v1076
        %v1078 = vlaneseq
        %v1079 = vshrl.u32 %v1078, 7
        %v1080 = vsub.s32 3, %v1079
        %v1081 = vrot.slane %v1064, %v1080
        %v1094 = vunpack.c.l.b16 %v544
        %v1095 = vunpack.c.h.b16 %v544
        %v1096 = vunpack.c.l.b16 %v545
        %v1097 = vunpack.c.h.b16 %v545
        %v1098 = vunpack.c.l.b16 %v546
        %v1099 = vunpack.c.h.b16 %v546
        %v1100 = vunpack.c.l.b16 %v547
        %v1101 = vunpack.c.h.b16 %v547
        %v1102 = vunpack.c.l.b16 %v548
        %v1103 = vunpack.c.h.b16 %v548
        %v1104 = vunpack.c.l.b16 %v549
        %v1105 = vunpack.c.h.b16 %v549
        %v1106 = vunpack.c.l.b16 %v550
        %v1107 = vunpack.c.h.b16 %v550
        %v1108 = vunpack.c.l.b16 %v551
        %v1109 = vunpack.c.h.b16 %v551
        %v1110 = vpack.c.b16 %v1094, %v1094
        %v1111 = vpack.c.b16 %v1095, %v1095
        %v1112 = vpack.c.b16 %v1096, %v1096
        %v1113 = vpack.c.b16 %v1097, %v1097
        %v1114 = vpack.c.b16 %v1098, %v1098
        %v1115 = vpack.c.b16 %v1099, %v1099
        %v1116 = vpack.c.b16 %v1100, %v1100
        %v1117 = vpack.c.b16 %v1101, %v1101
        %v1118 = vpack.c.b16 %v1102, %v1102
        %v1119 = vpack.c.b16 %v1103, %v1103
        %v1120 = vpack.c.b16 %v1104, %v1104
        %v1121 = vpack.c.b16 %v1105, %v1105
        %v1122 = vpack.c.b16 %v1106, %v1106
        %v1123 = vpack.c.b16 %v1107, %v1107
        %v1124 = vpack.c.b16 %v1108, %v1108
        %v1125 = vpack.c.b16 %v1109, %v1109
        %v1654 = vunpack.c.l.b16 %v552
        %v1655 = vunpack.c.h.b16 %v552
        %v1656 = vunpack.c.l.b16 %v553
        %v1657 = vunpack.c.h.b16 %v553
        %v1658 = vunpack.c.l.b16 %v554
        %v1659 = vunpack.c.h.b16 %v554
        %v1660 = vunpack.c.l.b16 %v555
        %v1661 = vunpack.c.h.b16 %v555
        %v1662 = vunpack.c.l.b16 %v556
        %v1663 = vunpack.c.h.b16 %v556
        %v1664 = vunpack.c.l.b16 %v557
        %v1665 = vunpack.c.h.b16 %v557
        %v1666 = vunpack.c.l.b16 %v558
        %v1667 = vunpack.c.h.b16 %v558
        %v1668 = vunpack.c.l.b16 %v559
        %v1669 = vunpack.c.h.b16 %v559
        %v1670 = vunpack.c.l.b16 %v560
        %v1671 = vunpack.c.h.b16 %v560
        %v1672 = vunpack.c.l.b16 %v561
        %v1673 = vunpack.c.h.b16 %v561
        %v1674 = vunpack.c.l.b16 %v562
        %v1675 = vunpack.c.h.b16 %v562
        %v1676 = vunpack.c.l.b16 %v563
        %v1677 = vunpack.c.h.b16 %v563
        %v1678 = vunpack.c.l.b16 %v564
        %v1679 = vunpack.c.h.b16 %v564
        %v1680 = vunpack.c.l.b16 %v565
        %v1681 = vunpack.c.h.b16 %v565
        %v1682 = vunpack.c.l.b16 %v566
        %v1683 = vunpack.c.h.b16 %v566
        %v1684 = vunpack.c.l.b16 %v567
        %v1685 = vunpack.c.h.b16 %v567
        %v1686 = vunpack.c.l.b16 %v568
        %v1687 = vunpack.c.h.b16 %v568
        %v1688 = vunpack.c.l.b16 %v569
        %v1689 = vunpack.c.h.b16 %v569
        %v1690 = vunpack.c.l.b16 %v570
        %v1691 = vunpack.c.h.b16 %v570
        %v1692 = vunpack.c.l.b16 %v571
        %v1693 = vunpack.c.h.b16 %v571
        %v1694 = vunpack.c.l.b16 %v572
        %v1695 = vunpack.c.h.b16 %v572
        %v1696 = vunpack.c.l.b16 %v573
        %v1697 = vunpack.c.h.b16 %v573
        %v1698 = vunpack.c.l.b16 %v574
        %v1699 = vunpack.c.h.b16 %v574
        %v1700 = vunpack.c.l.b16 %v575
        %v1701 = vunpack.c.h.b16 %v575
        %v1702 = vunpack.c.l.b16 %v576
        %v1703 = vunpack.c.h.b16 %v576
        %v1704 = vunpack.c.l.b16 %v577
        %v1705 = vunpack.c.h.b16 %v577
        %v1706 = vunpack.c.l.b16 %v578
        %v1707 = vunpack.c.h.b16 %v578
        %v1708 = vunpack.c.l.b16 %v579
        %v1709 = vunpack.c.h.b16 %v579
        %v1710 = vunpack.c.l.b16 %v580
        %v1711 = vunpack.c.h.b16 %v580
        %v1712 = vunpack.c.l.b16 %v581
        %v1713 = vunpack.c.h.b16 %v581
        %v1714 = vunpack.c.l.b16 %v582
        %v1715 = vunpack.c.h.b16 %v582
        %v1716 = vunpack.c.l.b16 %v583
        %v1717 = vunpack.c.h.b16 %v583
        %v1718 = vunpack.c.l.b16 %v584
        %v1719 = vunpack.c.h.b16 %v584
        %v1720 = vunpack.c.l.b16 %v585
        %v1721 = vunpack.c.h.b16 %v585
        %v1722 = vunpack.c.l.b16 %v586
        %v1723 = vunpack.c.h.b16 %v586
        %v1724 = vunpack.c.l.b16 %v587
        %v1725 = vunpack.c.h.b16 %v587
        %v1726 = vunpack.c.l.b16 %v588
        %v1727 = vunpack.c.h.b16 %v588
        %v1728 = vunpack.c.l.b16 %v589
        %v1729 = vunpack.c.h.b16 %v589
        %v1730 = vunpack.c.l.b16 %v590
        %v1731 = vunpack.c.h.b16 %v590
        %v1732 = vunpack.c.l.b16 %v591
        %v1733 = vunpack.c.h.b16 %v591
        %v1734 = vunpack.c.l.b16 %v592
        %v1735 = vunpack.c.h.b16 %v592
        %v1736 = vunpack.c.l.b16 %v593
        %v1737 = vunpack.c.h.b16 %v593
        %v1738 = vunpack.c.l.b16 %v594
        %v1739 = vunpack.c.h.b16 %v594
        %v1740 = vunpack.c.l.b16 %v595
        %v1741 = vunpack.c.h.b16 %v595
        %v1742 = vunpack.c.l.b16 %v596
        %v1743 = vunpack.c.h.b16 %v596
        %v1744 = vunpack.c.l.b16 %v597
        %v1745 = vunpack.c.h.b16 %v597
        %v1746 = vunpack.c.l.b16 %v598
        %v1747 = vunpack.c.h.b16 %v598
        %v1748 = vunpack.c.l.b16 %v599
        %v1749 = vunpack.c.h.b16 %v599
        %v1750 = vunpack.c.l.b16 %v600
        %v1751 = vunpack.c.h.b16 %v600
        %v1752 = vunpack.c.l.b16 %v601
        %v1753 = vunpack.c.h.b16 %v601
        %v1754 = vunpack.c.l.b16 %v602
        %v1755 = vunpack.c.h.b16 %v602
        %v1756 = vunpack.c.l.b16 %v603
        %v1757 = vunpack.c.h.b16 %v603
        %v1758 = vunpack.c.l.b16 %v604
        %v1759 = vunpack.c.h.b16 %v604
        %v1760 = vunpack.c.l.b16 %v605
        %v1761 = vunpack.c.h.b16 %v605
        %v1762 = vunpack.c.l.b16 %v606
        %v1763 = vunpack.c.h.b16 %v606
        %v1764 = vunpack.c.l.b16 %v607
        %v1765 = vunpack.c.h.b16 %v607
        %v1766 = vunpack.c.l.b16 %v608
        %v1767 = vunpack.c.h.b16 %v608
        %v1768 = vunpack.c.l.b16 %v609
        %v1769 = vunpack.c.h.b16 %v609
        %v1770 = vunpack.c.l.b16 %v610
        %v1771 = vunpack.c.h.b16 %v610
        %v1772 = vunpack.c.l.b16 %v611
        %v1773 = vunpack.c.h.b16 %v611
        %v1774 = vunpack.c.l.b16 %v612
        %v1775 = vunpack.c.h.b16 %v612
        %v1776 = vunpack.c.l.b16 %v613
        %v1777 = vunpack.c.h.b16 %v613
        %v1778 = vunpack.c.l.b16 %v614
        %v1779 = vunpack.c.h.b16 %v614
        %v1780 = vunpack.c.l.b16 %v615
        %v1781 = vunpack.c.h.b16 %v615
        %v1782 = vunpack.c.l.b16 %v616
        %v1783 = vunpack.c.h.b16 %v616
        %v1784 = vunpack.c.l.b16 %v617
        %v1785 = vunpack.c.h.b16 %v617
        %v1786 = vunpack.c.l.b16 %v618
        %v1787 = vunpack.c.h.b16 %v618
        %v1788 = vunpack.c.l.b16 %v619
        %v1789 = vunpack.c.h.b16 %v619
        %v1790 = vunpack.c.l.b16 %v620
        %v1791 = vunpack.c.h.b16 %v620
        %v1792 = vunpack.c.l.b16 %v621
        %v1793 = vunpack.c.h.b16 %v621
        %v1794 = vunpack.c.l.b16 %v622
        %v1795 = vunpack.c.h.b16 %v622
        %v1796 = vunpack.c.l.b16 %v623
        %v1797 = vunpack.c.h.b16 %v623
        %v1798 = vunpack.c.l.b16 %v624
        %v1799 = vunpack.c.h.b16 %v624
        %v1800 = vunpack.c.l.b16 %v625
        %v1801 = vunpack.c.h.b16 %v625
        %v1802 = vunpack.c.l.b16 %v626
        %v1803 = vunpack.c.h.b16 %v626
        %v1804 = vunpack.c.l.b16 %v627
        %v1805 = vunpack.c.h.b16 %v627
        %v1806 = vunpack.c.l.b16 %v628
        %v1807 = vunpack.c.h.b16 %v628
        %v1808 = vunpack.c.l.b16 %v629
        %v1809 = vunpack.c.h.b16 %v629
        %v1810 = vunpack.c.l.b16 %v630
        %v1811 = vunpack.c.h.b16 %v630
        %v1812 = vunpack.c.l.b16 %v631
        %v1813 = vunpack.c.h.b16 %v631
        %v1814 = vunpack.c.l.b16 %v632
        %v1815 = vunpack.c.h.b16 %v632
        %v1816 = vunpack.c.l.b16 %v633
        %v1817 = vunpack.c.h.b16 %v633
        %v1818 = vunpack.c.l.b16 %v634
        %v1819 = vunpack.c.h.b16 %v634
        %v1820 = vunpack.c.l.b16 %v635
        %v1821 = vunpack.c.h.b16 %v635
        %v1822 = vunpack.c.l.b16 %v636
        %v1823 = vunpack.c.h.b16 %v636
        %v1824 = vunpack.c.l.b16 %v637
        %v1825 = vunpack.c.h.b16 %v637
        %v1826 = vunpack.c.l.b16 %v638
        %v1827 = vunpack.c.h.b16 %v638
        %v1828 = vunpack.c.l.b16 %v639
        %v1829 = vunpack.c.h.b16 %v639
        %v1830 = vunpack.c.l.b16 %v640
        %v1831 = vunpack.c.h.b16 %v640
        %v1832 = vunpack.c.l.b16 %v641
        %v1833 = vunpack.c.h.b16 %v641
        %v1834 = vunpack.c.l.b16 %v642
        %v1835 = vunpack.c.h.b16 %v642
        %v1836 = vunpack.c.l.b16 %v643
        %v1837 = vunpack.c.h.b16 %v643
        %v1838 = vunpack.c.l.b16 %v644
        %v1839 = vunpack.c.h.b16 %v644
        %v1840 = vunpack.c.l.b16 %v645
        %v1841 = vunpack.c.h.b16 %v645
        %v1842 = vunpack.c.l.b16 %v646
        %v1843 = vunpack.c.h.b16 %v646
        %v1844 = vunpack.c.l.b16 %v647
        %v1845 = vunpack.c.h.b16 %v647
        %v1846 = vunpack.c.l.b16 %v648
        %v1847 = vunpack.c.h.b16 %v648
        %v1848 = vunpack.c.l.b16 %v649
        %v1849 = vunpack.c.h.b16 %v649
        %v1850 = vunpack.c.l.b16 %v650
        %v1851 = vunpack.c.h.b16 %v650
        %v1852 = vunpack.c.l.b16 %v651
        %v1853 = vunpack.c.h.b16 %v651
        %v1854 = vunpack.c.l.b16 %v652
        %v1855 = vunpack.c.h.b16 %v652
        %v1856 = vunpack.c.l.b16 %v653
        %v1857 = vunpack.c.h.b16 %v653
        %v1858 = vunpack.c.l.b16 %v654
        %v1859 = vunpack.c.h.b16 %v654
        %v1860 = vunpack.c.l.b16 %v655
        %v1861 = vunpack.c.h.b16 %v655
        %v1862 = vunpack.c.l.b16 %v656
        %v1863 = vunpack.c.h.b16 %v656
        %v1864 = vunpack.c.l.b16 %v657
        %v1865 = vunpack.c.h.b16 %v657
        %v1866 = vunpack.c.l.b16 %v658
        %v1867 = vunpack.c.h.b16 %v658
        %v1868 = vunpack.c.l.b16 %v659
        %v1869 = vunpack.c.h.b16 %v659
        %v1870 = vunpack.c.l.b16 %v660
        %v1871 = vunpack.c.h.b16 %v660
        %v1872 = vunpack.c.l.b16 %v661
        %v1873 = vunpack.c.h.b16 %v661
        %v1874 = vunpack.c.l.b16 %v662
        %v1875 = vunpack.c.h.b16 %v662
        %v1876 = vunpack.c.l.b16 %v663
        %v1877 = vunpack.c.h.b16 %v663
        %v1878 = vunpack.c.l.b16 %v664
        %v1879 = vunpack.c.h.b16 %v664
        %v1880 = vunpack.c.l.b16 %v665
        %v1881 = vunpack.c.h.b16 %v665
        %v1882 = vunpack.c.l.b16 %v666
        %v1883 = vunpack.c.h.b16 %v666
        %v1884 = vunpack.c.l.b16 %v667
        %v1885 = vunpack.c.h.b16 %v667
        %v1886 = vunpack.c.l.b16 %v668
        %v1887 = vunpack.c.h.b16 %v668
        %v1888 = vunpack.c.l.b16 %v669
        %v1889 = vunpack.c.h.b16 %v669
        %v1890 = vunpack.c.l.b16 %v670
        %v1891 = vunpack.c.h.b16 %v670
        %v1892 = vunpack.c.l.b16 %v671
        %v1893 = vunpack.c.h.b16 %v671
        %v1894 = vunpack.c.l.b16 %v672
        %v1895 = vunpack.c.h.b16 %v672
        %v1896 = vunpack.c.l.b16 %v673
        %v1897 = vunpack.c.h.b16 %v673
        %v1898 = vunpack.c.l.b16 %v674
        %v1899 = vunpack.c.h.b16 %v674
        %v1900 = vunpack.c.l.b16 %v675
        %v1901 = vunpack.c.h.b16 %v675
        %v1902 = vunpack.c.l.b16 %v676
        %v1903 = vunpack.c.h.b16 %v676
        %v1904 = vunpack.c.l.b16 %v677
        %v1905 = vunpack.c.h.b16 %v677
        %v1906 = vunpack.c.l.b16 %v678
        %v1907 = vunpack.c.h.b16 %v678
        %v1908 = vunpack.c.l.b16 %v679
        %v1909 = vunpack.c.h.b16 %v679
        %v1910 = vunpack.c.l.b16 %v680
        %v1911 = vunpack.c.h.b16 %v680
        %v1912 = vunpack.c.l.b16 %v681
        %v1913 = vunpack.c.h.b16 %v681
        %v1914 = vunpack.c.l.b16 %v682
        %v1915 = vunpack.c.h.b16 %v682
        %v1916 = vunpack.c.l.b16 %v683
        %v1917 = vunpack.c.h.b16 %v683
        %v1918 = vunpack.c.l.b16 %v684
        %v1919 = vunpack.c.h.b16 %v684
        %v1920 = vunpack.c.l.b16 %v685
        %v1921 = vunpack.c.h.b16 %v685
        %v1922 = vunpack.c.l.b16 %v686
        %v1923 = vunpack.c.h.b16 %v686
        %v1924 = vunpack.c.l.b16 %v687
        %v1925 = vunpack.c.h.b16 %v687
        %v1926 = vunpack.c.l.b16 %v688
        %v1927 = vunpack.c.h.b16 %v688
        %v1928 = vunpack.c.l.b16 %v689
        %v1929 = vunpack.c.h.b16 %v689
        %v1930 = vunpack.c.l.b16 %v690
        %v1931 = vunpack.c.h.b16 %v690
        %v1932 = vunpack.c.l.b16 %v691
        %v1933 = vunpack.c.h.b16 %v691
        %v1934 = vunpack.c.l.b16 %v692
        %v1935 = vunpack.c.h.b16 %v692
        %v1936 = vunpack.c.l.b16 %v693
        %v1937 = vunpack.c.h.b16 %v693
        %v1938 = vunpack.c.l.b16 %v694
        %v1939 = vunpack.c.h.b16 %v694
        %v1940 = vunpack.c.l.b16 %v695
        %v1941 = vunpack.c.h.b16 %v695
        %v1942 = vunpack.c.l.b16 %v696
        %v1943 = vunpack.c.h.b16 %v696
        %v1944 = vunpack.c.l.b16 %v697
        %v1945 = vunpack.c.h.b16 %v697
        %v1946 = vunpack.c.l.b16 %v698
        %v1947 = vunpack.c.h.b16 %v698
        %v1948 = vunpack.c.l.b16 %v699
        %v1949 = vunpack.c.h.b16 %v699
        %v1950 = vunpack.c.l.b16 %v700
        %v1951 = vunpack.c.h.b16 %v700
        %v1952 = vunpack.c.l.b16 %v701
        %v1953 = vunpack.c.h.b16 %v701
        %v1954 = vunpack.c.l.b16 %v702
        %v1955 = vunpack.c.h.b16 %v702
        %v1956 = vunpack.c.l.b16 %v703
        %v1957 = vunpack.c.h.b16 %v703
        %v1958 = vunpack.c.l.b16 %v704
        %v1959 = vunpack.c.h.b16 %v704
        %v1960 = vunpack.c.l.b16 %v705
        %v1961 = vunpack.c.h.b16 %v705
        %v1962 = vunpack.c.l.b16 %v706
        %v1963 = vunpack.c.h.b16 %v706
        %v1964 = vunpack.c.l.b16 %v707
        %v1965 = vunpack.c.h.b16 %v707
        %v1966 = vunpack.c.l.b16 %v708
        %v1967 = vunpack.c.h.b16 %v708
        %v1968 = vunpack.c.l.b16 %v709
        %v1969 = vunpack.c.h.b16 %v709
        %v1970 = vunpack.c.l.b16 %v710
        %v1971 = vunpack.c.h.b16 %v710
        %v1972 = vunpack.c.l.b16 %v711
        %v1973 = vunpack.c.h.b16 %v711
        %v1974 = vunpack.c.l.b16 %v712
        %v1975 = vunpack.c.h.b16 %v712
        %v1976 = vunpack.c.l.b16 %v713
        %v1977 = vunpack.c.h.b16 %v713
        %v1978 = vunpack.c.l.b16 %v714
        %v1979 = vunpack.c.h.b16 %v714
        %v1980 = vunpack.c.l.b16 %v715
        %v1981 = vunpack.c.h.b16 %v715
        %v1982 = vunpack.c.l.b16 %v716
        %v1983 = vunpack.c.h.b16 %v716
        %v1984 = vunpack.c.l.b16 %v717
        %v1985 = vunpack.c.h.b16 %v717
        %v1986 = vunpack.c.l.b16 %v718
        %v1987 = vunpack.c.h.b16 %v718
        %v1988 = vunpack.c.l.b16 %v719
        %v1989 = vunpack.c.h.b16 %v719
        %v1990 = vunpack.c.l.b16 %v720
        %v1991 = vunpack.c.h.b16 %v720
        %v1992 = vunpack.c.l.b16 %v721
        %v1993 = vunpack.c.h.b16 %v721
        %v1994 = vunpack.c.l.b16 %v722
        %v1995 = vunpack.c.h.b16 %v722
        %v1996 = vunpack.c.l.b16 %v723
        %v1997 = vunpack.c.h.b16 %v723
        %v1998 = vunpack.c.l.b16 %v724
        %v1999 = vunpack.c.h.b16 %v724
        %v2000 = vunpack.c.l.b16 %v725
        %v2001 = vunpack.c.h.b16 %v725
        %v2002 = vunpack.c.l.b16 %v726
        %v2003 = vunpack.c.h.b16 %v726
        %v2004 = vunpack.c.l.b16 %v727
        %v2005 = vunpack.c.h.b16 %v727
        %v2006 = vunpack.c.l.b16 %v728
        %v2007 = vunpack.c.h.b16 %v728
        %v2008 = vunpack.c.l.b16 %v729
        %v2009 = vunpack.c.h.b16 %v729
        %v2010 = vunpack.c.l.b16 %v730
        %v2011 = vunpack.c.h.b16 %v730
        %v2012 = vunpack.c.l.b16 %v731
        %v2013 = vunpack.c.h.b16 %v731
        %v2014 = vunpack.c.l.b16 %v732
        %v2015 = vunpack.c.h.b16 %v732
        %v2016 = vunpack.c.l.b16 %v733
        %v2017 = vunpack.c.h.b16 %v733
        %v2018 = vunpack.c.l.b16 %v734
        %v2019 = vunpack.c.h.b16 %v734
        %v2020 = vunpack.c.l.b16 %v735
        %v2021 = vunpack.c.h.b16 %v735
        %v2022 = vunpack.c.l.b16 %v736
        %v2023 = vunpack.c.h.b16 %v736
        %v2024 = vunpack.c.l.b16 %v737
        %v2025 = vunpack.c.h.b16 %v737
        %v2026 = vunpack.c.l.b16 %v738
        %v2027 = vunpack.c.h.b16 %v738
        %v2028 = vunpack.c.l.b16 %v739
        %v2029 = vunpack.c.h.b16 %v739
        %v2030 = vunpack.c.l.b16 %v740
        %v2031 = vunpack.c.h.b16 %v740
        %v2032 = vunpack.c.l.b16 %v741
        %v2033 = vunpack.c.h.b16 %v741
        %v2034 = vunpack.c.l.b16 %v742
        %v2035 = vunpack.c.h.b16 %v742
        %v2036 = vunpack.c.l.b16 %v743
        %v2037 = vunpack.c.h.b16 %v743
        %v2038 = vunpack.c.l.b16 %v744
        %v2039 = vunpack.c.h.b16 %v744
        %v2040 = vunpack.c.l.b16 %v745
        %v2041 = vunpack.c.h.b16 %v745
        %v2042 = vunpack.c.l.b16 %v746
        %v2043 = vunpack.c.h.b16 %v746
        %v2044 = vunpack.c.l.b16 %v747
        %v2045 = vunpack.c.h.b16 %v747
        %v2046 = vunpack.c.l.b16 %v748
        %v2047 = vunpack.c.h.b16 %v748
        %v2048 = vunpack.c.l.b16 %v749
        %v2049 = vunpack.c.h.b16 %v749
        %v2050 = vunpack.c.l.b16 %v750
        %v2051 = vunpack.c.h.b16 %v750
        %v2052 = vunpack.c.l.b16 %v751
        %v2053 = vunpack.c.h.b16 %v751
        %v2054 = vunpack.c.l.b16 %v752
        %v2055 = vunpack.c.h.b16 %v752
        %v2056 = vunpack.c.l.b16 %v753
        %v2057 = vunpack.c.h.b16 %v753
        %v2058 = vunpack.c.l.b16 %v754
        %v2059 = vunpack.c.h.b16 %v754
        %v2060 = vunpack.c.l.b16 %v755
        %v2061 = vunpack.c.h.b16 %v755
        %v2062 = vunpack.c.l.b16 %v756
        %v2063 = vunpack.c.h.b16 %v756
        %v2064 = vunpack.c.l.b16 %v757
        %v2065 = vunpack.c.h.b16 %v757
        %v2066 = vunpack.c.l.b16 %v758
        %v2067 = vunpack.c.h.b16 %v758
        %v2068 = vunpack.c.l.b16 %v759
        %v2069 = vunpack.c.h.b16 %v759
        %v2070 = vunpack.c.l.b16 %v760
        %v2071 = vunpack.c.h.b16 %v760
        %v2072 = vunpack.c.l.b16 %v761
        %v2073 = vunpack.c.h.b16 %v761
        %v2074 = vunpack.c.l.b16 %v762
        %v2075 = vunpack.c.h.b16 %v762
        %v2076 = vunpack.c.l.b16 %v763
        %v2077 = vunpack.c.h.b16 %v763
        %v2078 = vunpack.c.l.b16 %v764
        %v2079 = vunpack.c.h.b16 %v764
        %v2080 = vunpack.c.l.b16 %v765
        %v2081 = vunpack.c.h.b16 %v765
        %v2082 = vunpack.c.l.b16 %v766
        %v2083 = vunpack.c.h.b16 %v766
        %v2084 = vunpack.c.l.b16 %v767
        %v2085 = vunpack.c.h.b16 %v767
        %v2086 = vunpack.c.l.b16 %v768
        %v2087 = vunpack.c.h.b16 %v768
        %v2088 = vunpack.c.l.b16 %v769
        %v2089 = vunpack.c.h.b16 %v769
        %v2090 = vunpack.c.l.b16 %v770
        %v2091 = vunpack.c.h.b16 %v770
        %v2092 = vunpack.c.l.b16 %v771
        %v2093 = vunpack.c.h.b16 %v771
        %v2094 = vunpack.c.l.b16 %v772
        %v2095 = vunpack.c.h.b16 %v772
        %v2096 = vunpack.c.l.b16 %v773
        %v2097 = vunpack.c.h.b16 %v773
        %v2098 = vunpack.c.l.b16 %v774
        %v2099 = vunpack.c.h.b16 %v774
        %v2100 = vunpack.c.l.b16 %v775
        %v2101 = vunpack.c.h.b16 %v775
        %v2102 = vunpack.c.l.b16 %v776
        %v2103 = vunpack.c.h.b16 %v776
        %v2104 = vunpack.c.l.b16 %v777
        %v2105 = vunpack.c.h.b16 %v777
        %v2106 = vunpack.c.l.b16 %v778
        %v2107 = vunpack.c.h.b16 %v778
        %v2108 = vunpack.c.l.b16 %v779
        %v2109 = vunpack.c.h.b16 %v779
        %v2110 = vunpack.c.l.b16 %v780
        %v2111 = vunpack.c.h.b16 %v780
        %v2112 = vunpack.c.l.b16 %v781
        %v2113 = vunpack.c.h.b16 %v781
        %v2114 = vunpack.c.l.b16 %v782
        %v2115 = vunpack.c.h.b16 %v782
        %v2116 = vunpack.c.l.b16 %v783
        %v2117 = vunpack.c.h.b16 %v783
        %v2118 = vunpack.c.l.b16 %v784
        %v2119 = vunpack.c.h.b16 %v784
        %v2120 = vunpack.c.l.b16 %v785
        %v2121 = vunpack.c.h.b16 %v785
        %v2122 = vunpack.c.l.b16 %v786
        %v2123 = vunpack.c.h.b16 %v786
        %v2124 = vunpack.c.l.b16 %v787
        %v2125 = vunpack.c.h.b16 %v787
        %v2126 = vunpack.c.l.b16 %v788
        %v2127 = vunpack.c.h.b16 %v788
        %v2128 = vunpack.c.l.b16 %v789
        %v2129 = vunpack.c.h.b16 %v789
        %v2130 = vunpack.c.l.b16 %v790
        %v2131 = vunpack.c.h.b16 %v790
        %v2132 = vunpack.c.l.b16 %v791
        %v2133 = vunpack.c.h.b16 %v791
        %v2134 = vunpack.c.l.b16 %v792
        %v2135 = vunpack.c.h.b16 %v792
        %v2136 = vunpack.c.l.b16 %v793
        %v2137 = vunpack.c.h.b16 %v793
        %v2138 = vunpack.c.l.b16 %v794
        %v2139 = vunpack.c.h.b16 %v794
        %v2140 = vunpack.c.l.b16 %v795
        %v2141 = vunpack.c.h.b16 %v795
        %v2142 = vunpack.c.l.b16 %v796
        %v2143 = vunpack.c.h.b16 %v796
        %v2144 = vunpack.c.l.b16 %v797
        %v2145 = vunpack.c.h.b16 %v797
        %v2146 = vunpack.c.l.b16 %v798
        %v2147 = vunpack.c.h.b16 %v798
        %v2148 = vunpack.c.l.b16 %v799
        %v2149 = vunpack.c.h.b16 %v799
        %v2150 = vunpack.c.l.b16 %v800
        %v2151 = vunpack.c.h.b16 %v800
        %v2152 = vunpack.c.l.b16 %v801
        %v2153 = vunpack.c.h.b16 %v801
        %v2154 = vunpack.c.l.b16 %v802
        %v2155 = vunpack.c.h.b16 %v802
        %v2156 = vunpack.c.l.b16 %v803
        %v2157 = vunpack.c.h.b16 %v803
        %v2158 = vunpack.c.l.b16 %v804
        %v2159 = vunpack.c.h.b16 %v804
        %v2160 = vunpack.c.l.b16 %v805
        %v2161 = vunpack.c.h.b16 %v805
        %v2162 = vunpack.c.l.b16 %v806
        %v2163 = vunpack.c.h.b16 %v806
        %v2164 = vunpack.c.l.b16 %v807
        %v2165 = vunpack.c.h.b16 %v807
        %v2166 = vunpack.c.l.b16 %v808
        %v2167 = vunpack.c.h.b16 %v808
        %v2168 = vunpack.c.l.b16 %v809
        %v2169 = vunpack.c.h.b16 %v809
        %v2170 = vunpack.c.l.b16 %v810
        %v2171 = vunpack.c.h.b16 %v810
        %v2172 = vunpack.c.l.b16 %v811
        %v2173 = vunpack.c.h.b16 %v811
        %v2174 = vunpack.c.l.b16 %v812
        %v2175 = vunpack.c.h.b16 %v812
        %v2176 = vunpack.c.l.b16 %v813
        %v2177 = vunpack.c.h.b16 %v813
        %v2178 = vunpack.c.l.b16 %v814
        %v2179 = vunpack.c.h.b16 %v814
        %v2180 = vunpack.c.l.b16 %v815
        %v2181 = vunpack.c.h.b16 %v815
        %v2182 = vunpack.c.l.b16 %v816
        %v2183 = vunpack.c.h.b16 %v816
        %v2184 = vunpack.c.l.b16 %v817
        %v2185 = vunpack.c.h.b16 %v817
        %v2186 = vunpack.c.l.b16 %v818
        %v2187 = vunpack.c.h.b16 %v818
        %v2188 = vunpack.c.l.b16 %v819
        %v2189 = vunpack.c.h.b16 %v819
        %v2190 = vunpack.c.l.b16 %v820
        %v2191 = vunpack.c.h.b16 %v820
        %v2192 = vunpack.c.l.b16 %v821
        %v2193 = vunpack.c.h.b16 %v821
        %v2194 = vunpack.c.l.b16 %v822
        %v2195 = vunpack.c.h.b16 %v822
        %v2196 = vunpack.c.l.b16 %v823
        %v2197 = vunpack.c.h.b16 %v823
        %v2198 = vunpack.c.l.b16 %v824
        %v2199 = vunpack.c.h.b16 %v824
        %v2200 = vunpack.c.l.b16 %v825
        %v2201 = vunpack.c.h.b16 %v825
        %v2202 = vunpack.c.l.b16 %v826
        %v2203 = vunpack.c.h.b16 %v826
        %v2204 = vunpack.c.l.b16 %v827
        %v2205 = vunpack.c.h.b16 %v827
        %v2206 = vunpack.c.l.b16 %v828
        %v2207 = vunpack.c.h.b16 %v828
        %v2208 = vunpack.c.l.b16 %v829
        %v2209 = vunpack.c.h.b16 %v829
        %v2210 = vunpack.c.l.b16 %v830
        %v2211 = vunpack.c.h.b16 %v830
        %v2212 = vunpack.c.l.b16 %v831
        %v2213 = vunpack.c.h.b16 %v831
        %v2214 = vunpack.c.l.b16 %v832
        %v2215 = vunpack.c.h.b16 %v832
        %v2216 = vunpack.c.l.b16 %v833
        %v2217 = vunpack.c.h.b16 %v833
        %v2218 = vunpack.c.l.b16 %v834
        %v2219 = vunpack.c.h.b16 %v834
        %v2220 = vunpack.c.l.b16 %v835
        %v2221 = vunpack.c.h.b16 %v835
        %v2222 = vunpack.c.l.b16 %v836
        %v2223 = vunpack.c.h.b16 %v836
        %v2224 = vunpack.c.l.b16 %v837
        %v2225 = vunpack.c.h.b16 %v837
        %v2226 = vunpack.c.l.b16 %v838
        %v2227 = vunpack.c.h.b16 %v838
        %v2228 = vunpack.c.l.b16 %v839
        %v2229 = vunpack.c.h.b16 %v839
        %v2230 = vunpack.c.l.b16 %v840
        %v2231 = vunpack.c.h.b16 %v840
        %v2232 = vunpack.c.l.b16 %v841
        %v2233 = vunpack.c.h.b16 %v841
        %v2234 = vunpack.c.l.b16 %v842
        %v2235 = vunpack.c.h.b16 %v842
        %v2236 = vunpack.c.l.b16 %v843
        %v2237 = vunpack.c.h.b16 %v843
        %v2238 = vunpack.c.l.b16 %v844
        %v2239 = vunpack.c.h.b16 %v844
        %v2240 = vunpack.c.l.b16 %v845
        %v2241 = vunpack.c.h.b16 %v845
        %v2242 = vunpack.c.l.b16 %v846
        %v2243 = vunpack.c.h.b16 %v846
        %v2244 = vunpack.c.l.b16 %v847
        %v2245 = vunpack.c.h.b16 %v847
        %v2246 = vunpack.c.l.b16 %v848
        %v2247 = vunpack.c.h.b16 %v848
        %v2248 = vunpack.c.l.b16 %v849
        %v2249 = vunpack.c.h.b16 %v849
        %v2250 = vunpack.c.l.b16 %v850
        %v2251 = vunpack.c.h.b16 %v850
        %v2252 = vunpack.c.l.b16 %v851
        %v2253 = vunpack.c.h.b16 %v851
        %v2254 = vunpack.c.l.b16 %v852
        %v2255 = vunpack.c.h.b16 %v852
        %v2256 = vunpack.c.l.b16 %v853
        %v2257 = vunpack.c.h.b16 %v853
        %v2258 = vunpack.c.l.b16 %v854
        %v2259 = vunpack.c.h.b16 %v854
        %v2260 = vunpack.c.l.b16 %v855
        %v2261 = vunpack.c.h.b16 %v855
        %v2262 = vunpack.c.l.b16 %v856
        %v2263 = vunpack.c.h.b16 %v856
        %v2264 = vunpack.c.l.b16 %v857
        %v2265 = vunpack.c.h.b16 %v857
        %v2266 = vunpack.c.l.b16 %v858
        %v2267 = vunpack.c.h.b16 %v858
        %v2268 = vunpack.c.l.b16 %v859
        %v2269 = vunpack.c.h.b16 %v859
        %v2270 = vunpack.c.l.b16 %v860
        %v2271 = vunpack.c.h.b16 %v860
        %v2272 = vunpack.c.l.b16 %v861
        %v2273 = vunpack.c.h.b16 %v861
        %v2274 = vunpack.c.l.b16 %v862
        %v2275 = vunpack.c.h.b16 %v862
        %v2276 = vunpack.c.l.b16 %v863
        %v2277 = vunpack.c.h.b16 %v863
        %v2278 = vunpack.c.l.b16 %v864
        %v2279 = vunpack.c.h.b16 %v864
        %v2280 = vunpack.c.l.b16 %v865
        %v2281 = vunpack.c.h.b16 %v865
        %v2282 = vunpack.c.l.b16 %v866
        %v2283 = vunpack.c.h.b16 %v866
        %v2284 = vunpack.c.l.b16 %v867
        %v2285 = vunpack.c.h.b16 %v867
        %v2286 = vunpack.c.l.b16 %v868
        %v2287 = vunpack.c.h.b16 %v868
        %v2288 = vunpack.c.l.b16 %v869
        %v2289 = vunpack.c.h.b16 %v869
        %v2290 = vunpack.c.l.b16 %v870
        %v2291 = vunpack.c.h.b16 %v870
        %v2292 = vunpack.c.l.b16 %v871
        %v2293 = vunpack.c.h.b16 %v871
        %v2294 = vunpack.c.l.b16 %v872
        %v2295 = vunpack.c.h.b16 %v872
        %v2296 = vunpack.c.l.b16 %v873
        %v2297 = vunpack.c.h.b16 %v873
        %v2298 = vunpack.c.l.b16 %v874
        %v2299 = vunpack.c.h.b16 %v874
        %v2300 = vunpack.c.l.b16 %v875
        %v2301 = vunpack.c.h.b16 %v875
        %v2302 = vunpack.c.l.b16 %v876
        %v2303 = vunpack.c.h.b16 %v876
        %v2304 = vunpack.c.l.b16 %v877
        %v2305 = vunpack.c.h.b16 %v877
        %v2306 = vunpack.c.l.b16 %v878
        %v2307 = vunpack.c.h.b16 %v878
        %v2308 = vunpack.c.l.b16 %v879
        %v2309 = vunpack.c.h.b16 %v879
        %v2310 = vunpack.c.l.b16 %v880
        %v2311 = vunpack.c.h.b16 %v880
        %v2312 = vunpack.c.l.b16 %v881
        %v2313 = vunpack.c.h.b16 %v881
        %v2314 = vunpack.c.l.b16 %v882
        %v2315 = vunpack.c.h.b16 %v882
        %v2316 = vunpack.c.l.b16 %v883
        %v2317 = vunpack.c.h.b16 %v883
        %v2318 = vunpack.c.l.b16 %v884
        %v2319 = vunpack.c.h.b16 %v884
        %v2320 = vunpack.c.l.b16 %v885
        %v2321 = vunpack.c.h.b16 %v885
        %v2322 = vunpack.c.l.b16 %v886
        %v2323 = vunpack.c.h.b16 %v886
        %v2324 = vunpack.c.l.b16 %v887
        %v2325 = vunpack.c.h.b16 %v887
        %v2326 = vunpack.c.l.b16 %v888
        %v2327 = vunpack.c.h.b16 %v888
        %v2328 = vunpack.c.l.b16 %v889
        %v2329 = vunpack.c.h.b16 %v889
        %v2330 = vunpack.c.l.b16 %v890
        %v2331 = vunpack.c.h.b16 %v890
        %v2332 = vunpack.c.l.b16 %v891
        %v2333 = vunpack.c.h.b16 %v891
        %v2334 = vunpack.c.l.b16 %v892
        %v2335 = vunpack.c.h.b16 %v892
        %v2336 = vunpack.c.l.b16 %v893
        %v2337 = vunpack.c.h.b16 %v893
        %v2338 = vunpack.c.l.b16 %v894
        %v2339 = vunpack.c.h.b16 %v894
        %v2340 = vunpack.c.l.b16 %v895
        %v2341 = vunpack.c.h.b16 %v895
        %v2342 = vunpack.c.l.b16 %v896
        %v2343 = vunpack.c.h.b16 %v896
        %v2344 = vunpack.c.l.b16 %v897
        %v2345 = vunpack.c.h.b16 %v897
        %v2346 = vunpack.c.l.b16 %v898
        %v2347 = vunpack.c.h.b16 %v898
        %v2348 = vunpack.c.l.b16 %v899
        %v2349 = vunpack.c.h.b16 %v899
        %v2350 = vunpack.c.l.b16 %v900
        %v2351 = vunpack.c.h.b16 %v900
        %v2352 = vunpack.c.l.b16 %v901
        %v2353 = vunpack.c.h.b16 %v901
        %v2354 = vunpack.c.l.b16 %v902
        %v2355 = vunpack.c.h.b16 %v902
        %v2356 = vunpack.c.l.b16 %v903
        %v2357 = vunpack.c.h.b16 %v903
        %v2358 = vunpack.c.l.b16 %v904
        %v2359 = vunpack.c.h.b16 %v904
        %v2360 = vunpack.c.l.b16 %v905
        %v2361 = vunpack.c.h.b16 %v905
        %v2362 = vunpack.c.l.b16 %v906
        %v2363 = vunpack.c.h.b16 %v906
        %v2364 = vunpack.c.l.b16 %v907
        %v2365 = vunpack.c.h.b16 %v907
        %v2366 = vunpack.c.l.b16 %v908
        %v2367 = vunpack.c.h.b16 %v908
        %v2368 = vunpack.c.l.b16 %v909
        %v2369 = vunpack.c.h.b16 %v909
        %v2370 = vunpack.c.l.b16 %v910
        %v2371 = vunpack.c.h.b16 %v910
        %v2372 = vunpack.c.l.b16 %v911
        %v2373 = vunpack.c.h.b16 %v911
        %v2374 = vunpack.c.l.b16 %v912
        %v2375 = vunpack.c.h.b16 %v912
        %v2376 = vunpack.c.l.b16 %v913
        %v2377 = vunpack.c.h.b16 %v913
        %v2378 = vunpack.c.l.b16 %v914
        %v2379 = vunpack.c.h.b16 %v914
        %v2380 = vunpack.c.l.b16 %v915
        %v2381 = vunpack.c.h.b16 %v915
        %v2382 = vunpack.c.l.b16 %v916
        %v2383 = vunpack.c.h.b16 %v916
        %v2384 = vunpack.c.l.b16 %v917
        %v2385 = vunpack.c.h.b16 %v917
        %v2386 = vunpack.c.l.b16 %v918
        %v2387 = vunpack.c.h.b16 %v918
        %v2388 = vunpack.c.l.b16 %v919
        %v2389 = vunpack.c.h.b16 %v919
        %v2390 = vunpack.c.l.b16 %v920
        %v2391 = vunpack.c.h.b16 %v920
        %v2392 = vunpack.c.l.b16 %v921
        %v2393 = vunpack.c.h.b16 %v921
        %v2394 = vunpack.c.l.b16 %v922
        %v2395 = vunpack.c.h.b16 %v922
        %v2396 = vunpack.c.l.b16 %v923
        %v2397 = vunpack.c.h.b16 %v923
        %v2398 = vunpack.c.l.b16 %v924
        %v2399 = vunpack.c.h.b16 %v924
        %v2400 = vunpack.c.l.b16 %v925
        %v2401 = vunpack.c.h.b16 %v925
        %v2402 = vunpack.c.l.b16 %v926
        %v2403 = vunpack.c.h.b16 %v926
        %v2404 = vunpack.c.l.b16 %v927
        %v2405 = vunpack.c.h.b16 %v927
        %v2406 = vunpack.c.l.b16 %v928
        %v2407 = vunpack.c.h.b16 %v928
        %v2408 = vunpack.c.l.b16 %v929
        %v2409 = vunpack.c.h.b16 %v929
        %v2410 = vunpack.c.l.b16 %v930
        %v2411 = vunpack.c.h.b16 %v930
        %v2412 = vunpack.c.l.b16 %v931
        %v2413 = vunpack.c.h.b16 %v931
        %v2414 = vunpack.c.l.b16 %v932
        %v2415 = vunpack.c.h.b16 %v932
        %v2416 = vunpack.c.l.b16 %v933
        %v2417 = vunpack.c.h.b16 %v933
        %v2418 = vunpack.c.l.b16 %v934
        %v2419 = vunpack.c.h.b16 %v934
        %v2420 = vunpack.c.l.b16 %v935
        %v2421 = vunpack.c.h.b16 %v935
        %v2422 = vunpack.c.l.b16 %v936
        %v2423 = vunpack.c.h.b16 %v936
        %v2424 = vunpack.c.l.b16 %v937
        %v2425 = vunpack.c.h.b16 %v937
        %v2426 = vunpack.c.l.b16 %v938
        %v2427 = vunpack.c.h.b16 %v938
        %v2428 = vunpack.c.l.b16 %v939
        %v2429 = vunpack.c.h.b16 %v939
        %v2430 = vunpack.c.l.b16 %v940
        %v2431 = vunpack.c.h.b16 %v940
        %v2432 = vunpack.c.l.b16 %v941
        %v2433 = vunpack.c.h.b16 %v941
        %v2434 = vunpack.c.l.b16 %v942
        %v2435 = vunpack.c.h.b16 %v942
        %v2436 = vunpack.c.l.b16 %v943
        %v2437 = vunpack.c.h.b16 %v943
        %v2438 = vunpack.c.l.b16 %v944
        %v2439 = vunpack.c.h.b16 %v944
        %v2440 = vunpack.c.l.b16 %v945
        %v2441 = vunpack.c.h.b16 %v945
        %v2442 = vunpack.c.l.b16 %v946
        %v2443 = vunpack.c.h.b16 %v946
        %v2444 = vunpack.c.l.b16 %v947
        %v2445 = vunpack.c.h.b16 %v947
        %v2446 = vunpack.c.l.b16 %v948
        %v2447 = vunpack.c.h.b16 %v948
        %v2448 = vunpack.c.l.b16 %v949
        %v2449 = vunpack.c.h.b16 %v949
        %v2450 = vunpack.c.l.b16 %v950
        %v2451 = vunpack.c.h.b16 %v950
        %v2452 = vunpack.c.l.b16 %v951
        %v2453 = vunpack.c.h.b16 %v951
        %v2454 = vunpack.c.l.b16 %v952
        %v2455 = vunpack.c.h.b16 %v952
        %v2456 = vunpack.c.l.b16 %v953
        %v2457 = vunpack.c.h.b16 %v953
        %v2458 = vunpack.c.l.b16 %v954
        %v2459 = vunpack.c.h.b16 %v954
        %v2460 = vunpack.c.l.b16 %v955
        %v2461 = vunpack.c.h.b16 %v955
        %v2462 = vunpack.c.l.b16 %v956
        %v2463 = vunpack.c.h.b16 %v956
        %v2464 = vunpack.c.l.b16 %v957
        %v2465 = vunpack.c.h.b16 %v957
        %v2466 = vunpack.c.l.b16 %v958
        %v2467 = vunpack.c.h.b16 %v958
        %v2468 = vunpack.c.l.b16 %v959
        %v2469 = vunpack.c.h.b16 %v959
        %v2470 = vunpack.c.l.b16 %v960
        %v2471 = vunpack.c.h.b16 %v960
        %v2472 = vunpack.c.l.b16 %v961
        %v2473 = vunpack.c.h.b16 %v961
        %v2474 = vunpack.c.l.b16 %v962
        %v2475 = vunpack.c.h.b16 %v962
        %v2476 = vunpack.c.l.b16 %v963
        %v2477 = vunpack.c.h.b16 %v963
        %v2478 = vunpack.c.l.b16 %v964
        %v2479 = vunpack.c.h.b16 %v964
        %v2480 = vunpack.c.l.b16 %v965
        %v2481 = vunpack.c.h.b16 %v965
        %v2482 = vunpack.c.l.b16 %v966
        %v2483 = vunpack.c.h.b16 %v966
        %v2484 = vunpack.c.l.b16 %v967
        %v2485 = vunpack.c.h.b16 %v967
        %v2486 = vunpack.c.l.b16 %v968
        %v2487 = vunpack.c.h.b16 %v968
        %v2488 = vunpack.c.l.b16 %v969
        %v2489 = vunpack.c.h.b16 %v969
        %v2490 = vunpack.c.l.b16 %v970
        %v2491 = vunpack.c.h.b16 %v970
        %v2492 = vunpack.c.l.b16 %v971
        %v2493 = vunpack.c.h.b16 %v971
        %v2494 = vunpack.c.l.b16 %v972
        %v2495 = vunpack.c.h.b16 %v972
        %v2496 = vunpack.c.l.b16 %v973
        %v2497 = vunpack.c.h.b16 %v973
        %v2498 = vunpack.c.l.b16 %v974
        %v2499 = vunpack.c.h.b16 %v974
        %v2500 = vunpack.c.l.b16 %v975
        %v2501 = vunpack.c.h.b16 %v975
        %v2502 = vunpack.c.l.b16 %v976
        %v2503 = vunpack.c.h.b16 %v976
        %v2504 = vunpack.c.l.b16 %v977
        %v2505 = vunpack.c.h.b16 %v977
        %v2506 = vunpack.c.l.b16 %v978
        %v2507 = vunpack.c.h.b16 %v978
        %v2508 = vunpack.c.l.b16 %v979
        %v2509 = vunpack.c.h.b16 %v979
        %v2510 = vunpack.c.l.b16 %v980
        %v2511 = vunpack.c.h.b16 %v980
        %v2512 = vunpack.c.l.b16 %v981
        %v2513 = vunpack.c.h.b16 %v981
        %v2514 = vunpack.c.l.b16 %v982
        %v2515 = vunpack.c.h.b16 %v982
        %v2516 = vunpack.c.l.b16 %v983
        %v2517 = vunpack.c.h.b16 %v983
        %v2518 = vunpack.c.l.b16 %v984
        %v2519 = vunpack.c.h.b16 %v984
        %v2520 = vunpack.c.l.b16 %v985
        %v2521 = vunpack.c.h.b16 %v985
        %v2522 = vunpack.c.l.b16 %v986
        %v2523 = vunpack.c.h.b16 %v986
        %v2524 = vunpack.c.l.b16 %v987
        %v2525 = vunpack.c.h.b16 %v987
        %v2526 = vunpack.c.l.b16 %v988
        %v2527 = vunpack.c.h.b16 %v988
        %v2528 = vunpack.c.l.b16 %v989
        %v2529 = vunpack.c.h.b16 %v989
        %v2530 = vunpack.c.l.b16 %v990
        %v2531 = vunpack.c.h.b16 %v990
        %v2532 = vunpack.c.l.b16 %v991
        %v2533 = vunpack.c.h.b16 %v991
        %v2534 = vunpack.c.l.b16 %v992
        %v2535 = vunpack.c.h.b16 %v992
        %v2536 = vunpack.c.l.b16 %v993
        %v2537 = vunpack.c.h.b16 %v993
        %v2538 = vunpack.c.l.b16 %v994
        %v2539 = vunpack.c.h.b16 %v994
        %v2540 = vunpack.c.l.b16 %v995
        %v2541 = vunpack.c.h.b16 %v995
        %v2542 = vunpack.c.l.b16 %v996
        %v2543 = vunpack.c.h.b16 %v996
        %v2544 = vunpack.c.l.b16 %v997
        %v2545 = vunpack.c.h.b16 %v997
        %v2546 = vunpack.c.l.b16 %v998
        %v2547 = vunpack.c.h.b16 %v998
        %v2548 = vunpack.c.l.b16 %v999
        %v2549 = vunpack.c.h.b16 %v999
        %v2550 = vunpack.c.l.b16 %v1000
        %v2551 = vunpack.c.h.b16 %v1000
        %v2552 = vunpack.c.l.b16 %v1001
        %v2553 = vunpack.c.h.b16 %v1001
        %v2554 = vunpack.c.l.b16 %v1002
        %v2555 = vunpack.c.h.b16 %v1002
        %v2556 = vunpack.c.l.b16 %v1003
        %v2557 = vunpack.c.h.b16 %v1003
        %v2558 = vunpack.c.l.b16 %v1004
        %v2559 = vunpack.c.h.b16 %v1004
        %v2560 = vunpack.c.l.b16 %v1005
        %v2561 = vunpack.c.h.b16 %v1005
        %v2562 = vunpack.c.l.b16 %v1006
        %v2563 = vunpack.c.h.b16 %v1006
        %v2564 = vunpack.c.l.b16 %v1007
        %v2565 = vunpack.c.h.b16 %v1007
        %v2566 = vunpack.c.l.b16 %v1008
        %v2567 = vunpack.c.h.b16 %v1008
        %v2568 = vunpack.c.l.b16 %v1009
        %v2569 = vunpack.c.h.b16 %v1009
        %v2570 = vunpack.c.l.b16 %v1010
        %v2571 = vunpack.c.h.b16 %v1010
        %v2572 = vunpack.c.l.b16 %v1011
        %v2573 = vunpack.c.h.b16 %v1011
        %v2574 = vunpack.c.l.b16 %v1012
        %v2575 = vunpack.c.h.b16 %v1012
        %v2576 = vunpack.c.l.b16 %v1013
        %v2577 = vunpack.c.h.b16 %v1013
        %v2578 = vunpack.c.l.b16 %v1014
        %v2579 = vunpack.c.h.b16 %v1014
        %v2580 = vunpack.c.l.b16 %v1015
        %v2581 = vunpack.c.h.b16 %v1015
        %v2582 = vunpack.c.l.b16 %v1016
        %v2583 = vunpack.c.h.b16 %v1016
        %v2584 = vunpack.c.l.b16 %v1017
        %v2585 = vunpack.c.h.b16 %v1017
        %v2586 = vunpack.c.l.b16 %v1018
        %v2587 = vunpack.c.h.b16 %v1018
        %v2588 = vunpack.c.l.b16 %v1019
        %v2589 = vunpack.c.h.b16 %v1019
        %v2590 = vunpack.c.l.b16 %v1020
        %v2591 = vunpack.c.h.b16 %v1020
        %v2592 = vunpack.c.l.b16 %v1021
        %v2593 = vunpack.c.h.b16 %v1021
        %v2594 = vunpack.c.l.b16 %v1022
        %v2595 = vunpack.c.h.b16 %v1022
        %v2596 = vunpack.c.l.b16 %v1023
        %v2597 = vunpack.c.h.b16 %v1023
        %v2598 = vunpack.c.l.b16 %v1024
        %v2599 = vunpack.c.h.b16 %v1024
        %v2600 = vunpack.c.l.b16 %v1025
        %v2601 = vunpack.c.h.b16 %v1025
        %v2602 = vunpack.c.l.b16 %v1026
        %v2603 = vunpack.c.h.b16 %v1026
        %v2604 = vunpack.c.l.b16 %v1027
        %v2605 = vunpack.c.h.b16 %v1027
        %v2606 = vunpack.c.l.b16 %v1028
        %v2607 = vunpack.c.h.b16 %v1028
        %v2608 = vunpack.c.l.b16 %v1029
        %v2609 = vunpack.c.h.b16 %v1029
        %v2610 = vunpack.c.l.b16 %v1030
        %v2611 = vunpack.c.h.b16 %v1030
        %v2612 = vunpack.c.l.b16 %v1031
        %v2613 = vunpack.c.h.b16 %v1031
        %v2614 = vunpack.c.l.b16 %v1032
        %v2615 = vunpack.c.h.b16 %v1032
        %v2616 = vunpack.c.l.b16 %v1033
        %v2617 = vunpack.c.h.b16 %v1033
        %v2618 = vunpack.c.l.b16 %v1034
        %v2619 = vunpack.c.h.b16 %v1034
        %v2620 = vunpack.c.l.b16 %v1035
        %v2621 = vunpack.c.h.b16 %v1035
        %v2622 = vunpack.c.l.b16 %v1036
        %v2623 = vunpack.c.h.b16 %v1036
        %v2624 = vunpack.c.l.b16 %v1037
        %v2625 = vunpack.c.h.b16 %v1037
        %v2626 = vunpack.c.l.b16 %v1038
        %v2627 = vunpack.c.h.b16 %v1038
        %v2628 = vunpack.c.l.b16 %v1039
        %v2629 = vunpack.c.h.b16 %v1039
        %v2630 = vunpack.c.l.b16 %v1040
        %v2631 = vunpack.c.h.b16 %v1040
        %v2632 = vunpack.c.l.b16 %v1041
        %v2633 = vunpack.c.h.b16 %v1041
        %v2634 = vunpack.c.l.b16 %v1042
        %v2635 = vunpack.c.h.b16 %v1042
        %v2636 = vunpack.c.l.b16 %v1043
        %v2637 = vunpack.c.h.b16 %v1043
        %v2638 = vunpack.c.l.b16 %v1044
        %v2639 = vunpack.c.h.b16 %v1044
        %v2640 = vunpack.c.l.b16 %v1045
        %v2641 = vunpack.c.h.b16 %v1045
        %v2642 = vunpack.c.l.b16 %v1046
        %v2643 = vunpack.c.h.b16 %v1046
        %v2644 = vunpack.c.l.b16 %v1047
        %v2645 = vunpack.c.h.b16 %v1047
        %v2646 = vunpack.c.l.b16 %v1048
        %v2647 = vunpack.c.h.b16 %v1048
        %v2648 = vunpack.c.l.b16 %v1049
        %v2649 = vunpack.c.h.b16 %v1049
        %v2650 = vunpack.c.l.b16 %v1050
        %v2651 = vunpack.c.h.b16 %v1050
        %v2652 = vunpack.c.l.b16 %v1051
        %v2653 = vunpack.c.h.b16 %v1051
        %v2654 = vunpack.c.l.b16 %v1052
        %v2655 = vunpack.c.h.b16 %v1052
        %v2656 = vunpack.c.l.b16 %v1053
        %v2657 = vunpack.c.h.b16 %v1053
        %v2658 = vunpack.c.l.b16 %v1054
        %v2659 = vunpack.c.h.b16 %v1054
        %v2660 = vunpack.c.l.b16 %v1055
        %v2661 = vunpack.c.h.b16 %v1055
        %v2662 = vunpack.c.l.b16 %v1056
        %v2663 = vunpack.c.h.b16 %v1056
        %v2664 = vunpack.c.l.b16 %v1057
        %v2665 = vunpack.c.h.b16 %v1057
        %v2666 = vunpack.c.l.b16 %v1058
        %v2667 = vunpack.c.h.b16 %v1058
        %v2668 = vunpack.c.l.b16 %v1059
        %v2669 = vunpack.c.h.b16 %v1059
        %v2670 = vunpack.c.l.b16 %v1060
        %v2671 = vunpack.c.h.b16 %v1060
        %v2672 = vunpack.c.l.b16 %v1061
        %v2673 = vunpack.c.h.b16 %v1061
        %v2674 = vunpack.c.l.b16 %v1062
        %v2675 = vunpack.c.h.b16 %v1062
        %v2676 = vunpack.c.l.b16 %v1063
        %v2677 = vunpack.c.h.b16 %v1063
        %v2678 = vpack.c.b16 %v1658, %v1654
        %v2679 = vpack.c.b16 %v1659, %v1655
        %v2680 = vpack.c.b16 %v1660, %v1656
        %v2681 = vpack.c.b16 %v1661, %v1657
        %v2682 = vpack.c.b16 %v1666, %v1662
        %v2683 = vpack.c.b16 %v1667, %v1663
        %v2684 = vpack.c.b16 %v1668, %v1664
        %v2685 = vpack.c.b16 %v1669, %v1665
        %v2686 = vpack.c.b16 %v1674, %v1670
        %v2687 = vpack.c.b16 %v1675, %v1671
        %v2688 = vpack.c.b16 %v1676, %v1672
        %v2689 = vpack.c.b16 %v1677, %v1673
        %v2690 = vpack.c.b16 %v1682, %v1678
        %v2691 = vpack.c.b16 %v1683, %v1679
        %v2692 = vpack.c.b16 %v1684, %v1680
        %v2693 = vpack.c.b16 %v1685, %v1681
        %v2694 = vpack.c.b16 %v1690, %v1686
        %v2695 = vpack.c.b16 %v1691, %v1687
        %v2696 = vpack.c.b16 %v1692, %v1688
        %v2697 = vpack.c.b16 %v1693, %v1689
        %v2698 = vpack.c.b16 %v1698, %v1694
        %v2699 = vpack.c.b16 %v1699, %v1695
        %v2700 = vpack.c.b16 %v1700, %v1696
        %v2701 = vpack.c.b16 %v1701, %v1697
        %v2702 = vpack.c.b16 %v1706, %v1702
        %v2703 = vpack.c.b16 %v1707, %v1703
        %v2704 = vpack.c.b16 %v1708, %v1704
        %v2705 = vpack.c.b16 %v1709, %v1705
        %v2706 = vpack.c.b16 %v1714, %v1710
        %v2707 = vpack.c.b16 %v1715, %v1711
        %v2708 = vpack.c.b16 %v1716, %v1712
        %v2709 = vpack.c.b16 %v1717, %v1713
        %v2710 = vpack.c.b16 %v1722, %v1718
        %v2711 = vpack.c.b16 %v1723, %v1719
        %v2712 = vpack.c.b16 %v1724, %v1720
        %v2713 = vpack.c.b16 %v1725, %v1721
        %v2714 = vpack.c.b16 %v1730, %v1726
        %v2715 = vpack.c.b16 %v1731, %v1727
        %v2716 = vpack.c.b16 %v1732, %v1728
        %v2717 = vpack.c.b16 %v1733, %v1729
        %v2718 = vpack.c.b16 %v1738, %v1734
        %v2719 = vpack.c.b16 %v1739, %v1735
        %v2720 = vpack.c.b16 %v1740, %v1736
        %v2721 = vpack.c.b16 %v1741, %v1737
        %v2722 = vpack.c.b16 %v1746, %v1742
        %v2723 = vpack.c.b16 %v1747, %v1743
        %v2724 = vpack.c.b16 %v1748, %v1744
        %v2725 = vpack.c.b16 %v1749, %v1745
        %v2726 = vpack.c.b16 %v1754, %v1750
        %v2727 = vpack.c.b16 %v1755, %v1751
        %v2728 = vpack.c.b16 %v1756, %v1752
        %v2729 = vpack.c.b16 %v1757, %v1753
        %v2730 = vpack.c.b16 %v1762, %v1758
        %v2731 = vpack.c.b16 %v1763, %v1759
        %v2732 = vpack.c.b16 %v1764, %v1760
        %v2733 = vpack.c.b16 %v1765, %v1761
        %v2734 = vpack.c.b16 %v1770, %v1766
        %v2735 = vpack.c.b16 %v1771, %v1767
        %v2736 = vpack.c.b16 %v1772, %v1768
        %v2737 = vpack.c.b16 %v1773, %v1769
        %v2738 = vpack.c.b16 %v1778, %v1774
        %v2739 = vpack.c.b16 %v1779, %v1775
        %v2740 = vpack.c.b16 %v1780, %v1776
        %v2741 = vpack.c.b16 %v1781, %v1777
        %v2742 = vpack.c.b16 %v1786, %v1782
        %v2743 = vpack.c.b16 %v1787, %v1783
        %v2744 = vpack.c.b16 %v1788, %v1784
        %v2745 = vpack.c.b16 %v1789, %v1785
        %v2746 = vpack.c.b16 %v1794, %v1790
        %v2747 = vpack.c.b16 %v1795, %v1791
        %v2748 = vpack.c.b16 %v1796, %v1792
        %v2749 = vpack.c.b16 %v1797, %v1793
        %v2750 = vpack.c.b16 %v1802, %v1798
        %v2751 = vpack.c.b16 %v1803, %v1799
        %v2752 = vpack.c.b16 %v1804, %v1800
        %v2753 = vpack.c.b16 %v1805, %v1801
        %v2754 = vpack.c.b16 %v1810, %v1806
        %v2755 = vpack.c.b16 %v1811, %v1807
        %v2756 = vpack.c.b16 %v1812, %v1808
        %v2757 = vpack.c.b16 %v1813, %v1809
        %v2758 = vpack.c.b16 %v1818, %v1814
        %v2759 = vpack.c.b16 %v1819, %v1815
        %v2760 = vpack.c.b16 %v1820, %v1816
        %v2761 = vpack.c.b16 %v1821, %v1817
        %v2762 = vpack.c.b16 %v1826, %v1822
        %v2763 = vpack.c.b16 %v1827, %v1823
        %v2764 = vpack.c.b16 %v1828, %v1824
        %v2765 = vpack.c.b16 %v1829, %v1825
        %v2766 = vpack.c.b16 %v1834, %v1830
        %v2767 = vpack.c.b16 %v1835, %v1831
        %v2768 = vpack.c.b16 %v1836, %v1832
        %v2769 = vpack.c.b16 %v1837, %v1833
        %v2770 = vpack.c.b16 %v1842, %v1838
        %v2771 = vpack.c.b16 %v1843, %v1839
        %v2772 = vpack.c.b16 %v1844, %v1840
        %v2773 = vpack.c.b16 %v1845, %v1841
        %v2774 = vpack.c.b16 %v1850, %v1846
        %v2775 = vpack.c.b16 %v1851, %v1847
        %v2776 = vpack.c.b16 %v1852, %v1848
        %v2777 = vpack.c.b16 %v1853, %v1849
        %v2778 = vpack.c.b16 %v1858, %v1854
        %v2779 = vpack.c.b16 %v1859, %v1855
        %v2780 = vpack.c.b16 %v1860, %v1856
        %v2781 = vpack.c.b16 %v1861, %v1857
        %v2782 = vpack.c.b16 %v1866, %v1862
        %v2783 = vpack.c.b16 %v1867, %v1863
        %v2784 = vpack.c.b16 %v1868, %v1864
        %v2785 = vpack.c.b16 %v1869, %v1865
        %v2786 = vpack.c.b16 %v1874, %v1870
        %v2787 = vpack.c.b16 %v1875, %v1871
        %v2788 = vpack.c.b16 %v1876, %v1872
        %v2789 = vpack.c.b16 %v1877, %v1873
        %v2790 = vpack.c.b16 %v1882, %v1878
        %v2791 = vpack.c.b16 %v1883, %v1879
        %v2792 = vpack.c.b16 %v1884, %v1880
        %v2793 = vpack.c.b16 %v1885, %v1881
        %v2794 = vpack.c.b16 %v1890, %v1886
        %v2795 = vpack.c.b16 %v1891, %v1887
        %v2796 = vpack.c.b16 %v1892, %v1888
        %v2797 = vpack.c.b16 %v1893, %v1889
        %v2798 = vpack.c.b16 %v1898, %v1894
        %v2799 = vpack.c.b16 %v1899, %v1895
        %v2800 = vpack.c.b16 %v1900, %v1896
        %v2801 = vpack.c.b16 %v1901, %v1897
        %v2802 = vpack.c.b16 %v1906, %v1902
        %v2803 = vpack.c.b16 %v1907, %v1903
        %v2804 = vpack.c.b16 %v1908, %v1904
        %v2805 = vpack.c.b16 %v1909, %v1905
        %v2806 = vpack.c.b16 %v1914, %v1910
        %v2807 = vpack.c.b16 %v1915, %v1911
        %v2808 = vpack.c.b16 %v1916, %v1912
        %v2809 = vpack.c.b16 %v1917, %v1913
        %v2810 = vpack.c.b16 %v1922, %v1918
        %v2811 = vpack.c.b16 %v1923, %v1919
        %v2812 = vpack.c.b16 %v1924, %v1920
        %v2813 = vpack.c.b16 %v1925, %v1921
        %v2814 = vpack.c.b16 %v1930, %v1926
        %v2815 = vpack.c.b16 %v1931, %v1927
        %v2816 = vpack.c.b16 %v1932, %v1928
        %v2817 = vpack.c.b16 %v1933, %v1929
        %v2818 = vpack.c.b16 %v1938, %v1934
        %v2819 = vpack.c.b16 %v1939, %v1935
        %v2820 = vpack.c.b16 %v1940, %v1936
        %v2821 = vpack.c.b16 %v1941, %v1937
        %v2822 = vpack.c.b16 %v1946, %v1942
        %v2823 = vpack.c.b16 %v1947, %v1943
        %v2824 = vpack.c.b16 %v1948, %v1944
        %v2825 = vpack.c.b16 %v1949, %v1945
        %v2826 = vpack.c.b16 %v1954, %v1950
        %v2827 = vpack.c.b16 %v1955, %v1951
        %v2828 = vpack.c.b16 %v1956, %v1952
        %v2829 = vpack.c.b16 %v1957, %v1953
        %v2830 = vpack.c.b16 %v1962, %v1958
        %v2831 = vpack.c.b16 %v1963, %v1959
        %v2832 = vpack.c.b16 %v1964, %v1960
        %v2833 = vpack.c.b16 %v1965, %v1961
        %v2834 = vpack.c.b16 %v1970, %v1966
        %v2835 = vpack.c.b16 %v1971, %v1967
        %v2836 = vpack.c.b16 %v1972, %v1968
        %v2837 = vpack.c.b16 %v1973, %v1969
        %v2838 = vpack.c.b16 %v1978, %v1974
        %v2839 = vpack.c.b16 %v1979, %v1975
        %v2840 = vpack.c.b16 %v1980, %v1976
        %v2841 = vpack.c.b16 %v1981, %v1977
        %v2842 = vpack.c.b16 %v1986, %v1982
        %v2843 = vpack.c.b16 %v1987, %v1983
        %v2844 = vpack.c.b16 %v1988, %v1984
        %v2845 = vpack.c.b16 %v1989, %v1985
        %v2846 = vpack.c.b16 %v1994, %v1990
        %v2847 = vpack.c.b16 %v1995, %v1991
        %v2848 = vpack.c.b16 %v1996, %v1992
        %v2849 = vpack.c.b16 %v1997, %v1993
        %v2850 = vpack.c.b16 %v2002, %v1998
        %v2851 = vpack.c.b16 %v2003, %v1999
        %v2852 = vpack.c.b16 %v2004, %v2000
        %v2853 = vpack.c.b16 %v2005, %v2001
        %v2854 = vpack.c.b16 %v2010, %v2006
        %v2855 = vpack.c.b16 %v2011, %v2007
        %v2856 = vpack.c.b16 %v2012, %v2008
        %v2857 = vpack.c.b16 %v2013, %v2009
        %v2858 = vpack.c.b16 %v2018, %v2014
        %v2859 = vpack.c.b16 %v2019, %v2015
        %v2860 = vpack.c.b16 %v2020, %v2016
        %v2861 = vpack.c.b16 %v2021, %v2017
        %v2862 = vpack.c.b16 %v2026, %v2022
        %v2863 = vpack.c.b16 %v2027, %v2023
        %v2864 = vpack.c.b16 %v2028, %v2024
        %v2865 = vpack.c.b16 %v2029, %v2025
        %v2866 = vpack.c.b16 %v2034, %v2030
        %v2867 = vpack.c.b16 %v2035, %v2031
        %v2868 = vpack.c.b16 %v2036, %v2032
        %v2869 = vpack.c.b16 %v2037, %v2033
        %v2870 = vpack.c.b16 %v2042, %v2038
        %v2871 = vpack.c.b16 %v2043, %v2039
        %v2872 = vpack.c.b16 %v2044, %v2040
        %v2873 = vpack.c.b16 %v2045, %v2041
        %v2874 = vpack.c.b16 %v2050, %v2046
        %v2875 = vpack.c.b16 %v2051, %v2047
        %v2876 = vpack.c.b16 %v2052, %v2048
        %v2877 = vpack.c.b16 %v2053, %v2049
        %v2878 = vpack.c.b16 %v2058, %v2054
        %v2879 = vpack.c.b16 %v2059, %v2055
        %v2880 = vpack.c.b16 %v2060, %v2056
        %v2881 = vpack.c.b16 %v2061, %v2057
        %v2882 = vpack.c.b16 %v2066, %v2062
        %v2883 = vpack.c.b16 %v2067, %v2063
        %v2884 = vpack.c.b16 %v2068, %v2064
        %v2885 = vpack.c.b16 %v2069, %v2065
        %v2886 = vpack.c.b16 %v2074, %v2070
        %v2887 = vpack.c.b16 %v2075, %v2071
        %v2888 = vpack.c.b16 %v2076, %v2072
        %v2889 = vpack.c.b16 %v2077, %v2073
        %v2890 = vpack.c.b16 %v2082, %v2078
        %v2891 = vpack.c.b16 %v2083, %v2079
        %v2892 = vpack.c.b16 %v2084, %v2080
        %v2893 = vpack.c.b16 %v2085, %v2081
        %v2894 = vpack.c.b16 %v2090, %v2086
        %v2895 = vpack.c.b16 %v2091, %v2087
        %v2896 = vpack.c.b16 %v2092, %v2088
        %v2897 = vpack.c.b16 %v2093, %v2089
        %v2898 = vpack.c.b16 %v2098, %v2094
        %v2899 = vpack.c.b16 %v2099, %v2095
        %v2900 = vpack.c.b16 %v2100, %v2096
        %v2901 = vpack.c.b16 %v2101, %v2097
        %v2902 = vpack.c.b16 %v2106, %v2102
        %v2903 = vpack.c.b16 %v2107, %v2103
        %v2904 = vpack.c.b16 %v2108, %v2104
        %v2905 = vpack.c.b16 %v2109, %v2105
        %v2906 = vpack.c.b16 %v2114, %v2110
        %v2907 = vpack.c.b16 %v2115, %v2111
        %v2908 = vpack.c.b16 %v2116, %v2112
        %v2909 = vpack.c.b16 %v2117, %v2113
        %v2910 = vpack.c.b16 %v2122, %v2118
        %v2911 = vpack.c.b16 %v2123, %v2119
        %v2912 = vpack.c.b16 %v2124, %v2120
        %v2913 = vpack.c.b16 %v2125, %v2121
        %v2914 = vpack.c.b16 %v2130, %v2126
        %v2915 = vpack.c.b16 %v2131, %v2127
        %v2916 = vpack.c.b16 %v2132, %v2128
        %v2917 = vpack.c.b16 %v2133, %v2129
        %v2918 = vpack.c.b16 %v2138, %v2134
        %v2919 = vpack.c.b16 %v2139, %v2135
        %v2920 = vpack.c.b16 %v2140, %v2136
        %v2921 = vpack.c.b16 %v2141, %v2137
        %v2922 = vpack.c.b16 %v2146, %v2142
        %v2923 = vpack.c.b16 %v2147, %v2143
        %v2924 = vpack.c.b16 %v2148, %v2144
        %v2925 = vpack.c.b16 %v2149, %v2145
        %v2926 = vpack.c.b16 %v2154, %v2150
        %v2927 = vpack.c.b16 %v2155, %v2151
        %v2928 = vpack.c.b16 %v2156, %v2152
        %v2929 = vpack.c.b16 %v2157, %v2153
        %v2930 = vpack.c.b16 %v2162, %v2158
        %v2931 = vpack.c.b16 %v2163, %v2159
        %v2932 = vpack.c.b16 %v2164, %v2160
        %v2933 = vpack.c.b16 %v2165, %v2161
        %v2934 = vpack.c.b16 %v2170, %v2166
        %v2935 = vpack.c.b16 %v2171, %v2167
        %v2936 = vpack.c.b16 %v2172, %v2168
        %v2937 = vpack.c.b16 %v2173, %v2169
        %v2938 = vpack.c.b16 %v2178, %v2174
        %v2939 = vpack.c.b16 %v2179, %v2175
        %v2940 = vpack.c.b16 %v2180, %v2176
        %v2941 = vpack.c.b16 %v2181, %v2177
        %v2942 = vpack.c.b16 %v2186, %v2182
        %v2943 = vpack.c.b16 %v2187, %v2183
        %v2944 = vpack.c.b16 %v2188, %v2184
        %v2945 = vpack.c.b16 %v2189, %v2185
        %v2946 = vpack.c.b16 %v2194, %v2190
        %v2947 = vpack.c.b16 %v2195, %v2191
        %v2948 = vpack.c.b16 %v2196, %v2192
        %v2949 = vpack.c.b16 %v2197, %v2193
        %v2950 = vpack.c.b16 %v2202, %v2198
        %v2951 = vpack.c.b16 %v2203, %v2199
        %v2952 = vpack.c.b16 %v2204, %v2200
        %v2953 = vpack.c.b16 %v2205, %v2201
        %v2954 = vpack.c.b16 %v2210, %v2206
        %v2955 = vpack.c.b16 %v2211, %v2207
        %v2956 = vpack.c.b16 %v2212, %v2208
        %v2957 = vpack.c.b16 %v2213, %v2209
        %v2958 = vpack.c.b16 %v2218, %v2214
        %v2959 = vpack.c.b16 %v2219, %v2215
        %v2960 = vpack.c.b16 %v2220, %v2216
        %v2961 = vpack.c.b16 %v2221, %v2217
        %v2962 = vpack.c.b16 %v2226, %v2222
        %v2963 = vpack.c.b16 %v2227, %v2223
        %v2964 = vpack.c.b16 %v2228, %v2224
        %v2965 = vpack.c.b16 %v2229, %v2225
        %v2966 = vpack.c.b16 %v2234, %v2230
        %v2967 = vpack.c.b16 %v2235, %v2231
        %v2968 = vpack.c.b16 %v2236, %v2232
        %v2969 = vpack.c.b16 %v2237, %v2233
        %v2970 = vpack.c.b16 %v2242, %v2238
        %v2971 = vpack.c.b16 %v2243, %v2239
        %v2972 = vpack.c.b16 %v2244, %v2240
        %v2973 = vpack.c.b16 %v2245, %v2241
        %v2974 = vpack.c.b16 %v2250, %v2246
        %v2975 = vpack.c.b16 %v2251, %v2247
        %v2976 = vpack.c.b16 %v2252, %v2248
        %v2977 = vpack.c.b16 %v2253, %v2249
        %v2978 = vpack.c.b16 %v2258, %v2254
        %v2979 = vpack.c.b16 %v2259, %v2255
        %v2980 = vpack.c.b16 %v2260, %v2256
        %v2981 = vpack.c.b16 %v2261, %v2257
        %v2982 = vpack.c.b16 %v2266, %v2262
        %v2983 = vpack.c.b16 %v2267, %v2263
        %v2984 = vpack.c.b16 %v2268, %v2264
        %v2985 = vpack.c.b16 %v2269, %v2265
        %v2986 = vpack.c.b16 %v2274, %v2270
        %v2987 = vpack.c.b16 %v2275, %v2271
        %v2988 = vpack.c.b16 %v2276, %v2272
        %v2989 = vpack.c.b16 %v2277, %v2273
        %v2990 = vpack.c.b16 %v2282, %v2278
        %v2991 = vpack.c.b16 %v2283, %v2279
        %v2992 = vpack.c.b16 %v2284, %v2280
        %v2993 = vpack.c.b16 %v2285, %v2281
        %v2994 = vpack.c.b16 %v2290, %v2286
        %v2995 = vpack.c.b16 %v2291, %v2287
        %v2996 = vpack.c.b16 %v2292, %v2288
        %v2997 = vpack.c.b16 %v2293, %v2289
        %v2998 = vpack.c.b16 %v2298, %v2294
        %v2999 = vpack.c.b16 %v2299, %v2295
        %v3000 = vpack.c.b16 %v2300, %v2296
        %v3001 = vpack.c.b16 %v2301, %v2297
        %v3002 = vpack.c.b16 %v2306, %v2302
        %v3003 = vpack.c.b16 %v2307, %v2303
        %v3004 = vpack.c.b16 %v2308, %v2304
        %v3005 = vpack.c.b16 %v2309, %v2305
        %v3006 = vpack.c.b16 %v2314, %v2310
        %v3007 = vpack.c.b16 %v2315, %v2311
        %v3008 = vpack.c.b16 %v2316, %v2312
        %v3009 = vpack.c.b16 %v2317, %v2313
        %v3010 = vpack.c.b16 %v2322, %v2318
        %v3011 = vpack.c.b16 %v2323, %v2319
        %v3012 = vpack.c.b16 %v2324, %v2320
        %v3013 = vpack.c.b16 %v2325, %v2321
        %v3014 = vpack.c.b16 %v2330, %v2326
        %v3015 = vpack.c.b16 %v2331, %v2327
        %v3016 = vpack.c.b16 %v2332, %v2328
        %v3017 = vpack.c.b16 %v2333, %v2329
        %v3018 = vpack.c.b16 %v2338, %v2334
        %v3019 = vpack.c.b16 %v2339, %v2335
        %v3020 = vpack.c.b16 %v2340, %v2336
        %v3021 = vpack.c.b16 %v2341, %v2337
        %v3022 = vpack.c.b16 %v2346, %v2342
        %v3023 = vpack.c.b16 %v2347, %v2343
        %v3024 = vpack.c.b16 %v2348, %v2344
        %v3025 = vpack.c.b16 %v2349, %v2345
        %v3026 = vpack.c.b16 %v2354, %v2350
        %v3027 = vpack.c.b16 %v2355, %v2351
        %v3028 = vpack.c.b16 %v2356, %v2352
        %v3029 = vpack.c.b16 %v2357, %v2353
        %v3030 = vpack.c.b16 %v2362, %v2358
        %v3031 = vpack.c.b16 %v2363, %v2359
        %v3032 = vpack.c.b16 %v2364, %v2360
        %v3033 = vpack.c.b16 %v2365, %v2361
        %v3034 = vpack.c.b16 %v2370, %v2366
        %v3035 = vpack.c.b16 %v2371, %v2367
        %v3036 = vpack.c.b16 %v2372, %v2368
        %v3037 = vpack.c.b16 %v2373, %v2369
        %v3038 = vpack.c.b16 %v2378, %v2374
        %v3039 = vpack.c.b16 %v2379, %v2375
        %v3040 = vpack.c.b16 %v2380, %v2376
        %v3041 = vpack.c.b16 %v2381, %v2377
        %v3042 = vpack.c.b16 %v2386, %v2382
        %v3043 = vpack.c.b16 %v2387, %v2383
        %v3044 = vpack.c.b16 %v2388, %v2384
        %v3045 = vpack.c.b16 %v2389, %v2385
        %v3046 = vpack.c.b16 %v2394, %v2390
        %v3047 = vpack.c.b16 %v2395, %v2391
        %v3048 = vpack.c.b16 %v2396, %v2392
        %v3049 = vpack.c.b16 %v2397, %v2393
        %v3050 = vpack.c.b16 %v2402, %v2398
        %v3051 = vpack.c.b16 %v2403, %v2399
        %v3052 = vpack.c.b16 %v2404, %v2400
        %v3053 = vpack.c.b16 %v2405, %v2401
        %v3054 = vpack.c.b16 %v2410, %v2406
        %v3055 = vpack.c.b16 %v2411, %v2407
        %v3056 = vpack.c.b16 %v2412, %v2408
        %v3057 = vpack.c.b16 %v2413, %v2409
        %v3058 = vpack.c.b16 %v2418, %v2414
        %v3059 = vpack.c.b16 %v2419, %v2415
        %v3060 = vpack.c.b16 %v2420, %v2416
        %v3061 = vpack.c.b16 %v2421, %v2417
        %v3062 = vpack.c.b16 %v2426, %v2422
        %v3063 = vpack.c.b16 %v2427, %v2423
        %v3064 = vpack.c.b16 %v2428, %v2424
        %v3065 = vpack.c.b16 %v2429, %v2425
        %v3066 = vpack.c.b16 %v2434, %v2430
        %v3067 = vpack.c.b16 %v2435, %v2431
        %v3068 = vpack.c.b16 %v2436, %v2432
        %v3069 = vpack.c.b16 %v2437, %v2433
        %v3070 = vpack.c.b16 %v2442, %v2438
        %v3071 = vpack.c.b16 %v2443, %v2439
        %v3072 = vpack.c.b16 %v2444, %v2440
        %v3073 = vpack.c.b16 %v2445, %v2441
        %v3074 = vpack.c.b16 %v2450, %v2446
        %v3075 = vpack.c.b16 %v2451, %v2447
        %v3076 = vpack.c.b16 %v2452, %v2448
        %v3077 = vpack.c.b16 %v2453, %v2449
        %v3078 = vpack.c.b16 %v2458, %v2454
        %v3079 = vpack.c.b16 %v2459, %v2455
        %v3080 = vpack.c.b16 %v2460, %v2456
        %v3081 = vpack.c.b16 %v2461, %v2457
        %v3082 = vpack.c.b16 %v2466, %v2462
        %v3083 = vpack.c.b16 %v2467, %v2463
        %v3084 = vpack.c.b16 %v2468, %v2464
        %v3085 = vpack.c.b16 %v2469, %v2465
        %v3086 = vpack.c.b16 %v2474, %v2470
        %v3087 = vpack.c.b16 %v2475, %v2471
        %v3088 = vpack.c.b16 %v2476, %v2472
        %v3089 = vpack.c.b16 %v2477, %v2473
        %v3090 = vpack.c.b16 %v2482, %v2478
        %v3091 = vpack.c.b16 %v2483, %v2479
        %v3092 = vpack.c.b16 %v2484, %v2480
        %v3093 = vpack.c.b16 %v2485, %v2481
        %v3094 = vpack.c.b16 %v2490, %v2486
        %v3095 = vpack.c.b16 %v2491, %v2487
        %v3096 = vpack.c.b16 %v2492, %v2488
        %v3097 = vpack.c.b16 %v2493, %v2489
        %v3098 = vpack.c.b16 %v2498, %v2494
        %v3099 = vpack.c.b16 %v2499, %v2495
        %v3100 = vpack.c.b16 %v2500, %v2496
        %v3101 = vpack.c.b16 %v2501, %v2497
        %v3102 = vpack.c.b16 %v2506, %v2502
        %v3103 = vpack.c.b16 %v2507, %v2503
        %v3104 = vpack.c.b16 %v2508, %v2504
        %v3105 = vpack.c.b16 %v2509, %v2505
        %v3106 = vpack.c.b16 %v2514, %v2510
        %v3107 = vpack.c.b16 %v2515, %v2511
        %v3108 = vpack.c.b16 %v2516, %v2512
        %v3109 = vpack.c.b16 %v2517, %v2513
        %v3110 = vpack.c.b16 %v2522, %v2518
        %v3111 = vpack.c.b16 %v2523, %v2519
        %v3112 = vpack.c.b16 %v2524, %v2520
        %v3113 = vpack.c.b16 %v2525, %v2521
        %v3114 = vpack.c.b16 %v2530, %v2526
        %v3115 = vpack.c.b16 %v2531, %v2527
        %v3116 = vpack.c.b16 %v2532, %v2528
        %v3117 = vpack.c.b16 %v2533, %v2529
        %v3118 = vpack.c.b16 %v2538, %v2534
        %v3119 = vpack.c.b16 %v2539, %v2535
        %v3120 = vpack.c.b16 %v2540, %v2536
        %v3121 = vpack.c.b16 %v2541, %v2537
        %v3122 = vpack.c.b16 %v2546, %v2542
        %v3123 = vpack.c.b16 %v2547, %v2543
        %v3124 = vpack.c.b16 %v2548, %v2544
        %v3125 = vpack.c.b16 %v2549, %v2545
        %v3126 = vpack.c.b16 %v2554, %v2550
        %v3127 = vpack.c.b16 %v2555, %v2551
        %v3128 = vpack.c.b16 %v2556, %v2552
        %v3129 = vpack.c.b16 %v2557, %v2553
        %v3130 = vpack.c.b16 %v2562, %v2558
        %v3131 = vpack.c.b16 %v2563, %v2559
        %v3132 = vpack.c.b16 %v2564, %v2560
        %v3133 = vpack.c.b16 %v2565, %v2561
        %v3134 = vpack.c.b16 %v2570, %v2566
        %v3135 = vpack.c.b16 %v2571, %v2567
        %v3136 = vpack.c.b16 %v2572, %v2568
        %v3137 = vpack.c.b16 %v2573, %v2569
        %v3138 = vpack.c.b16 %v2578, %v2574
        %v3139 = vpack.c.b16 %v2579, %v2575
        %v3140 = vpack.c.b16 %v2580, %v2576
        %v3141 = vpack.c.b16 %v2581, %v2577
        %v3142 = vpack.c.b16 %v2586, %v2582
        %v3143 = vpack.c.b16 %v2587, %v2583
        %v3144 = vpack.c.b16 %v2588, %v2584
        %v3145 = vpack.c.b16 %v2589, %v2585
        %v3146 = vpack.c.b16 %v2594, %v2590
        %v3147 = vpack.c.b16 %v2595, %v2591
        %v3148 = vpack.c.b16 %v2596, %v2592
        %v3149 = vpack.c.b16 %v2597, %v2593
        %v3150 = vpack.c.b16 %v2602, %v2598
        %v3151 = vpack.c.b16 %v2603, %v2599
        %v3152 = vpack.c.b16 %v2604, %v2600
        %v3153 = vpack.c.b16 %v2605, %v2601
        %v3154 = vpack.c.b16 %v2610, %v2606
        %v3155 = vpack.c.b16 %v2611, %v2607
        %v3156 = vpack.c.b16 %v2612, %v2608
        %v3157 = vpack.c.b16 %v2613, %v2609
        %v3158 = vpack.c.b16 %v2618, %v2614
        %v3159 = vpack.c.b16 %v2619, %v2615
        %v3160 = vpack.c.b16 %v2620, %v2616
        %v3161 = vpack.c.b16 %v2621, %v2617
        %v3162 = vpack.c.b16 %v2626, %v2622
        %v3163 = vpack.c.b16 %v2627, %v2623
        %v3164 = vpack.c.b16 %v2628, %v2624
        %v3165 = vpack.c.b16 %v2629, %v2625
        %v3166 = vpack.c.b16 %v2634, %v2630
        %v3167 = vpack.c.b16 %v2635, %v2631
        %v3168 = vpack.c.b16 %v2636, %v2632
        %v3169 = vpack.c.b16 %v2637, %v2633
        %v3170 = vpack.c.b16 %v2642, %v2638
        %v3171 = vpack.c.b16 %v2643, %v2639
        %v3172 = vpack.c.b16 %v2644, %v2640
        %v3173 = vpack.c.b16 %v2645, %v2641
        %v3174 = vpack.c.b16 %v2650, %v2646
        %v3175 = vpack.c.b16 %v2651, %v2647
        %v3176 = vpack.c.b16 %v2652, %v2648
        %v3177 = vpack.c.b16 %v2653, %v2649
        %v3178 = vpack.c.b16 %v2658, %v2654
        %v3179 = vpack.c.b16 %v2659, %v2655
        %v3180 = vpack.c.b16 %v2660, %v2656
        %v3181 = vpack.c.b16 %v2661, %v2657
        %v3182 = vpack.c.b16 %v2666, %v2662
        %v3183 = vpack.c.b16 %v2667, %v2663
        %v3184 = vpack.c.b16 %v2668, %v2664
        %v3185 = vpack.c.b16 %v2669, %v2665
        %v3186 = vpack.c.b16 %v2674, %v2670
        %v3187 = vpack.c.b16 %v2675, %v2671
        %v3188 = vpack.c.b16 %v2676, %v2672
        %v3189 = vpack.c.b16 %v2677, %v2673
        %3702 = vmatprep.subr.bf16.mxu0 %v2679
        %3703 = vmatpush1.bf16.msra.mxu0 %v2678
        %3704 = vmatprep.subr.bf16.mxu0 %v2683
        %3705 = vmatpush1.bf16.msra.mxu0 %v2682
        %3706 = vmatprep.subr.bf16.mxu0 %v2687
        %3707 = vmatpush1.bf16.msra.mxu0 %v2686
        %3708 = vmatprep.subr.bf16.mxu0 %v2691
        %3709 = vmatpush1.bf16.msra.mxu0 %v2690
        %3710 = vmatprep.subr.bf16.mxu0 %v2695
        %3711 = vmatpush1.bf16.msra.mxu0 %v2694
        %3712 = vmatprep.subr.bf16.mxu0 %v2699
        %3713 = vmatpush1.bf16.msra.mxu0 %v2698
        %3714 = vmatprep.subr.bf16.mxu0 %v2703
        %3715 = vmatpush1.bf16.msra.mxu0 %v2702
        %3716 = vmatprep.subr.bf16.mxu0 %v2707
        %3717 = vmatpush1.bf16.msra.mxu0 %v2706
        %3718 = vmatprep.subr.bf16.mxu0 %v2711
        %3719 = vmatpush1.bf16.msra.mxu0 %v2710
        %3720 = vmatprep.subr.bf16.mxu0 %v2715
        %3721 = vmatpush1.bf16.msra.mxu0 %v2714
        %3722 = vmatprep.subr.bf16.mxu0 %v2719
        %3723 = vmatpush1.bf16.msra.mxu0 %v2718
        %3724 = vmatprep.subr.bf16.mxu0 %v2723
        %3725 = vmatpush1.bf16.msra.mxu0 %v2722
        %3726 = vmatprep.subr.bf16.mxu0 %v2727
        %3727 = vmatpush1.bf16.msra.mxu0 %v2726
        %3728 = vmatprep.subr.bf16.mxu0 %v2731
        %3729 = vmatpush1.bf16.msra.mxu0 %v2730
        %3730 = vmatprep.subr.bf16.mxu0 %v2735
        %3731 = vmatpush1.bf16.msra.mxu0 %v2734
        %3732 = vmatprep.subr.bf16.mxu0 %v2739
        %3733 = vmatpush1.bf16.msra.mxu0 %v2738
        %3734 = vmatprep.mubr.bf16.mxu0 %v1111
        %3735 = vmatmul.mubr.bf16.gmra.mrb[0].mxu0 %v1110
        %v3736 = vpop.f32.mrb[0].mxu0
        %v3737 = vadd.f32 %v1069, %v3736
        %v3738 = vpop.f32.mrb[0].mxu0
        %v3739 = vadd.f32 %v1073, %v3738
        %v3740 = vpop.f32.mrb[0].mxu0
        %v3741 = vpop.f32.mrb[0].mxu0
        %3742 = vdwg.mxu0
        %3743 = vmatprep.subr.bf16.mxu0 %v2743
        %3744 = vmatpush1.bf16.msra.mxu0 %v2742
        %3745 = vmatprep.subr.bf16.mxu0 %v2747
        %3746 = vmatpush1.bf16.msra.mxu0 %v2746
        %3747 = vmatprep.subr.bf16.mxu0 %v2751
        %3748 = vmatpush1.bf16.msra.mxu0 %v2750
        %3749 = vmatprep.subr.bf16.mxu0 %v2755
        %3750 = vmatpush1.bf16.msra.mxu0 %v2754
        %3751 = vmatprep.subr.bf16.mxu0 %v2759
        %3752 = vmatpush1.bf16.msra.mxu0 %v2758
        %3753 = vmatprep.subr.bf16.mxu0 %v2763
        %3754 = vmatpush1.bf16.msra.mxu0 %v2762
        %3755 = vmatprep.subr.bf16.mxu0 %v2767
        %3756 = vmatpush1.bf16.msra.mxu0 %v2766
        %3757 = vmatprep.subr.bf16.mxu0 %v2771
        %3758 = vmatpush1.bf16.msra.mxu0 %v2770
        %3759 = vmatprep.subr.bf16.mxu0 %v2775
        %3760 = vmatpush1.bf16.msra.mxu0 %v2774
        %3761 = vmatprep.subr.bf16.mxu0 %v2779
        %3762 = vmatpush1.bf16.msra.mxu0 %v2778
        %3763 = vmatprep.subr.bf16.mxu0 %v2783
        %3764 = vmatpush1.bf16.msra.mxu0 %v2782
        %3765 = vmatprep.subr.bf16.mxu0 %v2787
        %3766 = vmatpush1.bf16.msra.mxu0 %v2786
        %3767 = vmatprep.subr.bf16.mxu0 %v2791
        %3768 = vmatpush1.bf16.msra.mxu0 %v2790
        %3769 = vmatprep.subr.bf16.mxu0 %v2795
        %3770 = vmatpush1.bf16.msra.mxu0 %v2794
        %3771 = vmatprep.subr.bf16.mxu0 %v2799
        %3772 = vmatpush1.bf16.msra.mxu0 %v2798
        %3773 = vmatprep.subr.bf16.mxu0 %v2803
        %3774 = vmatpush1.bf16.msra.mxu0 %v2802
        %3775 = vmatprep.mubr.bf16.mxu0 %v1113
        %3776 = vmatmul.mubr.bf16.gmra.mrb[0].mxu0 %v1112
        %v3777 = vpop.f32.mrb[0].mxu0
        %v3778 = vadd.f32 %v3737, %v3777
        %v3779 = vpop.f32.mrb[0].mxu0
        %v3780 = vadd.f32 %v3739, %v3779
        %v3781 = vpop.f32.mrb[0].mxu0
        %v3782 = vpop.f32.mrb[0].mxu0
        %3783 = vdwg.mxu0
        %3784 = vmatprep.subr.bf16.mxu0 %v2807
        %3785 = vmatpush1.bf16.msra.mxu0 %v2806
        %3786 = vmatprep.subr.bf16.mxu0 %v2811
        %3787 = vmatpush1.bf16.msra.mxu0 %v2810
        %3788 = vmatprep.subr.bf16.mxu0 %v2815
        %3789 = vmatpush1.bf16.msra.mxu0 %v2814
        %3790 = vmatprep.subr.bf16.mxu0 %v2819
        %3791 = vmatpush1.bf16.msra.mxu0 %v2818
        %3792 = vmatprep.subr.bf16.mxu0 %v2823
        %3793 = vmatpush1.bf16.msra.mxu0 %v2822
        %3794 = vmatprep.subr.bf16.mxu0 %v2827
        %3795 = vmatpush1.bf16.msra.mxu0 %v2826
        %3796 = vmatprep.subr.bf16.mxu0 %v2831
        %3797 = vmatpush1.bf16.msra.mxu0 %v2830
        %3798 = vmatprep.subr.bf16.mxu0 %v2835
        %3799 = vmatpush1.bf16.msra.mxu0 %v2834
        %3800 = vmatprep.subr.bf16.mxu0 %v2839
        %3801 = vmatpush1.bf16.msra.mxu0 %v2838
        %3802 = vmatprep.subr.bf16.mxu0 %v2843
        %3803 = vmatpush1.bf16.msra.mxu0 %v2842
        %3804 = vmatprep.subr.bf16.mxu0 %v2847
        %3805 = vmatpush1.bf16.msra.mxu0 %v2846
        %3806 = vmatprep.subr.bf16.mxu0 %v2851
        %3807 = vmatpush1.bf16.msra.mxu0 %v2850
        %3808 = vmatprep.subr.bf16.mxu0 %v2855
        %3809 = vmatpush1.bf16.msra.mxu0 %v2854
        %3810 = vmatprep.subr.bf16.mxu0 %v2859
        %3811 = vmatpush1.bf16.msra.mxu0 %v2858
        %3812 = vmatprep.subr.bf16.mxu0 %v2863
        %3813 = vmatpush1.bf16.msra.mxu0 %v2862
        %3814 = vmatprep.subr.bf16.mxu0 %v2867
        %3815 = vmatpush1.bf16.msra.mxu0 %v2866
        %3816 = vmatprep.mubr.bf16.mxu0 %v1115
        %3817 = vmatmul.mubr.bf16.gmra.mrb[0].mxu0 %v1114
        %v3818 = vpop.f32.mrb[0].mxu0
        %v3819 = vadd.f32 %v3778, %v3818
        %v3820 = vpop.f32.mrb[0].mxu0
        %v3821 = vadd.f32 %v3780, %v3820
        %v3822 = vpop.f32.mrb[0].mxu0
        %v3823 = vpop.f32.mrb[0].mxu0
        %3824 = vdwg.mxu0
        %3825 = vmatprep.subr.bf16.mxu0 %v2871
        %3826 = vmatpush1.bf16.msra.mxu0 %v2870
        %3827 = vmatprep.subr.bf16.mxu0 %v2875
        %3828 = vmatpush1.bf16.msra.mxu0 %v2874
        %3829 = vmatprep.subr.bf16.mxu0 %v2879
        %3830 = vmatpush1.bf16.msra.mxu0 %v2878
        %3831 = vmatprep.subr.bf16.mxu0 %v2883
        %3832 = vmatpush1.bf16.msra.mxu0 %v2882
        %3833 = vmatprep.subr.bf16.mxu0 %v2887
        %3834 = vmatpush1.bf16.msra.mxu0 %v2886
        %3835 = vmatprep.subr.bf16.mxu0 %v2891
        %3836 = vmatpush1.bf16.msra.mxu0 %v2890
        %3837 = vmatprep.subr.bf16.mxu0 %v2895
        %3838 = vmatpush1.bf16.msra.mxu0 %v2894
        %3839 = vmatprep.subr.bf16.mxu0 %v2899
        %3840 = vmatpush1.bf16.msra.mxu0 %v2898
        %3841 = vmatprep.subr.bf16.mxu0 %v2903
        %3842 = vmatpush1.bf16.msra.mxu0 %v2902
        %3843 = vmatprep.subr.bf16.mxu0 %v2907
        %3844 = vmatpush1.bf16.msra.mxu0 %v2906
        %3845 = vmatprep.subr.bf16.mxu0 %v2911
        %3846 = vmatpush1.bf16.msra.mxu0 %v2910
        %3847 = vmatprep.subr.bf16.mxu0 %v2915
        %3848 = vmatpush1.bf16.msra.mxu0 %v2914
        %3849 = vmatprep.subr.bf16.mxu0 %v2919
        %3850 = vmatpush1.bf16.msra.mxu0 %v2918
        %3851 = vmatprep.subr.bf16.mxu0 %v2923
        %3852 = vmatpush1.bf16.msra.mxu0 %v2922
        %3853 = vmatprep.subr.bf16.mxu0 %v2927
        %3854 = vmatpush1.bf16.msra.mxu0 %v2926
        %3855 = vmatprep.subr.bf16.mxu0 %v2931
        %3856 = vmatpush1.bf16.msra.mxu0 %v2930
        %3857 = vmatprep.mubr.bf16.mxu0 %v1117
        %3858 = vmatmul.mubr.bf16.gmra.mrb[0].mxu0 %v1116
        %v3859 = vpop.f32.mrb[0].mxu0
        %v3860 = vadd.f32 %v3819, %v3859
        %v3861 = vpop.f32.mrb[0].mxu0
        %v3862 = vadd.f32 %v3821, %v3861
        %v3863 = vpop.f32.mrb[0].mxu0
        %v3864 = vpop.f32.mrb[0].mxu0
        %3865 = vdwg.mxu0
        %3866 = vmatprep.subr.bf16.mxu0 %v2935
        %3867 = vmatpush1.bf16.msra.mxu0 %v2934
        %3868 = vmatprep.subr.bf16.mxu0 %v2939
        %3869 = vmatpush1.bf16.msra.mxu0 %v2938
        %3870 = vmatprep.subr.bf16.mxu0 %v2943
        %3871 = vmatpush1.bf16.msra.mxu0 %v2942
        %3872 = vmatprep.subr.bf16.mxu0 %v2947
        %3873 = vmatpush1.bf16.msra.mxu0 %v2946
        %3874 = vmatprep.subr.bf16.mxu0 %v2951
        %3875 = vmatpush1.bf16.msra.mxu0 %v2950
        %3876 = vmatprep.subr.bf16.mxu0 %v2955
        %3877 = vmatpush1.bf16.msra.mxu0 %v2954
        %3878 = vmatprep.subr.bf16.mxu0 %v2959
        %3879 = vmatpush1.bf16.msra.mxu0 %v2958
        %3880 = vmatprep.subr.bf16.mxu0 %v2963
        %3881 = vmatpush1.bf16.msra.mxu0 %v2962
        %3882 = vmatprep.subr.bf16.mxu0 %v2967
        %3883 = vmatpush1.bf16.msra.mxu0 %v2966
        %3884 = vmatprep.subr.bf16.mxu0 %v2971
        %3885 = vmatpush1.bf16.msra.mxu0 %v2970
        %3886 = vmatprep.subr.bf16.mxu0 %v2975
        %3887 = vmatpush1.bf16.msra.mxu0 %v2974
        %3888 = vmatprep.subr.bf16.mxu0 %v2979
        %3889 = vmatpush1.bf16.msra.mxu0 %v2978
        %3890 = vmatprep.subr.bf16.mxu0 %v2983
        %3891 = vmatpush1.bf16.msra.mxu0 %v2982
        %3892 = vmatprep.subr.bf16.mxu0 %v2987
        %3893 = vmatpush1.bf16.msra.mxu0 %v2986
        %3894 = vmatprep.subr.bf16.mxu0 %v2991
        %3895 = vmatpush1.bf16.msra.mxu0 %v2990
        %3896 = vmatprep.subr.bf16.mxu0 %v2995
        %3897 = vmatpush1.bf16.msra.mxu0 %v2994
        %3898 = vmatprep.mubr.bf16.mxu0 %v1119
        %3899 = vmatmul.mubr.bf16.gmra.mrb[0].mxu0 %v1118
        %v3900 = vpop.f32.mrb[0].mxu0
        %v3901 = vadd.f32 %v3860, %v3900
        %v3902 = vpop.f32.mrb[0].mxu0
        %v3903 = vadd.f32 %v3862, %v3902
        %v3904 = vpop.f32.mrb[0].mxu0
        %v3905 = vpop.f32.mrb[0].mxu0
        %3906 = vdwg.mxu0
        %3907 = vmatprep.subr.bf16.mxu0 %v2999
        %3908 = vmatpush1.bf16.msra.mxu0 %v2998
        %3909 = vmatprep.subr.bf16.mxu0 %v3003
        %3910 = vmatpush1.bf16.msra.mxu0 %v3002
        %3911 = vmatprep.subr.bf16.mxu0 %v3007
        %3912 = vmatpush1.bf16.msra.mxu0 %v3006
        %3913 = vmatprep.subr.bf16.mxu0 %v3011
        %3914 = vmatpush1.bf16.msra.mxu0 %v3010
        %3915 = vmatprep.subr.bf16.mxu0 %v3015
        %3916 = vmatpush1.bf16.msra.mxu0 %v3014
        %3917 = vmatprep.subr.bf16.mxu0 %v3019
        %3918 = vmatpush1.bf16.msra.mxu0 %v3018
        %3919 = vmatprep.subr.bf16.mxu0 %v3023
        %3920 = vmatpush1.bf16.msra.mxu0 %v3022
        %3921 = vmatprep.subr.bf16.mxu0 %v3027
        %3922 = vmatpush1.bf16.msra.mxu0 %v3026
        %3923 = vmatprep.subr.bf16.mxu0 %v3031
        %3924 = vmatpush1.bf16.msra.mxu0 %v3030
        %3925 = vmatprep.subr.bf16.mxu0 %v3035
        %3926 = vmatpush1.bf16.msra.mxu0 %v3034
        %3927 = vmatprep.subr.bf16.mxu0 %v3039
        %3928 = vmatpush1.bf16.msra.mxu0 %v3038
        %3929 = vmatprep.subr.bf16.mxu0 %v3043
        %3930 = vmatpush1.bf16.msra.mxu0 %v3042
        %3931 = vmatprep.subr.bf16.mxu0 %v3047
        %3932 = vmatpush1.bf16.msra.mxu0 %v3046
        %3933 = vmatprep.subr.bf16.mxu0 %v3051
        %3934 = vmatpush1.bf16.msra.mxu0 %v3050
        %3935 = vmatprep.subr.bf16.mxu0 %v3055
        %3936 = vmatpush1.bf16.msra.mxu0 %v3054
        %3937 = vmatprep.subr.bf16.mxu0 %v3059
        %3938 = vmatpush1.bf16.msra.mxu0 %v3058
        %3939 = vmatprep.mubr.bf16.mxu0 %v1121
        %3940 = vmatmul.mubr.bf16.gmra.mrb[0].mxu0 %v1120
        %v3941 = vpop.f32.mrb[0].mxu0
        %v3942 = vadd.f32 %v3901, %v3941
        %v3943 = vpop.f32.mrb[0].mxu0
        %v3944 = vadd.f32 %v3903, %v3943
        %v3945 = vpop.f32.mrb[0].mxu0
        %v3946 = vpop.f32.mrb[0].mxu0
        %3947 = vdwg.mxu0
        %3948 = vmatprep.subr.bf16.mxu0 %v3063
        %3949 = vmatpush1.bf16.msra.mxu0 %v3062
        %3950 = vmatprep.subr.bf16.mxu0 %v3067
        %3951 = vmatpush1.bf16.msra.mxu0 %v3066
        %3952 = vmatprep.subr.bf16.mxu0 %v3071
        %3953 = vmatpush1.bf16.msra.mxu0 %v3070
        %3954 = vmatprep.subr.bf16.mxu0 %v3075
        %3955 = vmatpush1.bf16.msra.mxu0 %v3074
        %3956 = vmatprep.subr.bf16.mxu0 %v3079
        %3957 = vmatpush1.bf16.msra.mxu0 %v3078
        %3958 = vmatprep.subr.bf16.mxu0 %v3083
        %3959 = vmatpush1.bf16.msra.mxu0 %v3082
        %3960 = vmatprep.subr.bf16.mxu0 %v3087
        %3961 = vmatpush1.bf16.msra.mxu0 %v3086
        %3962 = vmatprep.subr.bf16.mxu0 %v3091
        %3963 = vmatpush1.bf16.msra.mxu0 %v3090
        %3964 = vmatprep.subr.bf16.mxu0 %v3095
        %3965 = vmatpush1.bf16.msra.mxu0 %v3094
        %3966 = vmatprep.subr.bf16.mxu0 %v3099
        %3967 = vmatpush1.bf16.msra.mxu0 %v3098
        %3968 = vmatprep.subr.bf16.mxu0 %v3103
        %3969 = vmatpush1.bf16.msra.mxu0 %v3102
        %3970 = vmatprep.subr.bf16.mxu0 %v3107
        %3971 = vmatpush1.bf16.msra.mxu0 %v3106
        %3972 = vmatprep.subr.bf16.mxu0 %v3111
        %3973 = vmatpush1.bf16.msra.mxu0 %v3110
        %3974 = vmatprep.subr.bf16.mxu0 %v3115
        %3975 = vmatpush1.bf16.msra.mxu0 %v3114
        %3976 = vmatprep.subr.bf16.mxu0 %v3119
        %3977 = vmatpush1.bf16.msra.mxu0 %v3118
        %3978 = vmatprep.subr.bf16.mxu0 %v3123
        %3979 = vmatpush1.bf16.msra.mxu0 %v3122
        %3980 = vmatprep.mubr.bf16.mxu0 %v1123
        %3981 = vmatmul.mubr.bf16.gmra.mrb[0].mxu0 %v1122
        %v3982 = vpop.f32.mrb[0].mxu0
        %v3983 = vadd.f32 %v3942, %v3982
        %v3984 = vpop.f32.mrb[0].mxu0
        %v3985 = vadd.f32 %v3944, %v3984
        %v3986 = vpop.f32.mrb[0].mxu0
        %v3987 = vpop.f32.mrb[0].mxu0
        %3988 = vdwg.mxu0
        %3989 = vmatprep.subr.bf16.mxu0 %v3127
        %3990 = vmatpush1.bf16.msra.mxu0 %v3126
        %3991 = vmatprep.subr.bf16.mxu0 %v3131
        %3992 = vmatpush1.bf16.msra.mxu0 %v3130
        %3993 = vmatprep.subr.bf16.mxu0 %v3135
        %3994 = vmatpush1.bf16.msra.mxu0 %v3134
        %3995 = vmatprep.subr.bf16.mxu0 %v3139
        %3996 = vmatpush1.bf16.msra.mxu0 %v3138
        %3997 = vmatprep.subr.bf16.mxu0 %v3143
        %3998 = vmatpush1.bf16.msra.mxu0 %v3142
        %3999 = vmatprep.subr.bf16.mxu0 %v3147
        %4000 = vmatpush1.bf16.msra.mxu0 %v3146
        %4001 = vmatprep.subr.bf16.mxu0 %v3151
        %4002 = vmatpush1.bf16.msra.mxu0 %v3150
        %4003 = vmatprep.subr.bf16.mxu0 %v3155
        %4004 = vmatpush1.bf16.msra.mxu0 %v3154
        %4005 = vmatprep.subr.bf16.mxu0 %v3159
        %4006 = vmatpush1.bf16.msra.mxu0 %v3158
        %4007 = vmatprep.subr.bf16.mxu0 %v3163
        %4008 = vmatpush1.bf16.msra.mxu0 %v3162
        %4009 = vmatprep.subr.bf16.mxu0 %v3167
        %4010 = vmatpush1.bf16.msra.mxu0 %v3166
        %4011 = vmatprep.subr.bf16.mxu0 %v3171
        %4012 = vmatpush1.bf16.msra.mxu0 %v3170
        %4013 = vmatprep.subr.bf16.mxu0 %v3175
        %4014 = vmatpush1.bf16.msra.mxu0 %v3174
        %4015 = vmatprep.subr.bf16.mxu0 %v3179
        %4016 = vmatpush1.bf16.msra.mxu0 %v3178
        %4017 = vmatprep.subr.bf16.mxu0 %v3183
        %4018 = vmatpush1.bf16.msra.mxu0 %v3182
        %4019 = vmatprep.subr.bf16.mxu0 %v3187
        %4020 = vmatpush1.bf16.msra.mxu0 %v3186
        %4021 = vmatprep.mubr.bf16.mxu0 %v1125
        %4022 = vmatmul.mubr.bf16.gmra.mrb[0].mxu0 %v1124
        %v4023 = vpop.f32.mrb[0].mxu0
        %v4024 = vadd.f32 %v3983, %v4023
        %v4025 = vpop.f32.mrb[0].mxu0
        %v4026 = vadd.f32 %v3985, %v4025
        %v4027 = vpop.f32.mrb[0].mxu0
        %v4028 = vpop.f32.mrb[0].mxu0
        %4029 = vdwg.mxu0
        %4030 = vmatprep.subr.bf16.mxu0 %v2681
        %4031 = vmatpush1.bf16.msra.mxu0 %v2680
        %4032 = vmatprep.subr.bf16.mxu0 %v2685
        %4033 = vmatpush1.bf16.msra.mxu0 %v2684
        %4034 = vmatprep.subr.bf16.mxu0 %v2689
        %4035 = vmatpush1.bf16.msra.mxu0 %v2688
        %4036 = vmatprep.subr.bf16.mxu0 %v2693
        %4037 = vmatpush1.bf16.msra.mxu0 %v2692
        %4038 = vmatprep.subr.bf16.mxu0 %v2697
        %4039 = vmatpush1.bf16.msra.mxu0 %v2696
        %4040 = vmatprep.subr.bf16.mxu0 %v2701
        %4041 = vmatpush1.bf16.msra.mxu0 %v2700
        %4042 = vmatprep.subr.bf16.mxu0 %v2705
        %4043 = vmatpush1.bf16.msra.mxu0 %v2704
        %4044 = vmatprep.subr.bf16.mxu0 %v2709
        %4045 = vmatpush1.bf16.msra.mxu0 %v2708
        %4046 = vmatprep.subr.bf16.mxu0 %v2713
        %4047 = vmatpush1.bf16.msra.mxu0 %v2712
        %4048 = vmatprep.subr.bf16.mxu0 %v2717
        %4049 = vmatpush1.bf16.msra.mxu0 %v2716
        %4050 = vmatprep.subr.bf16.mxu0 %v2721
        %4051 = vmatpush1.bf16.msra.mxu0 %v2720
        %4052 = vmatprep.subr.bf16.mxu0 %v2725
        %4053 = vmatpush1.bf16.msra.mxu0 %v2724
        %4054 = vmatprep.subr.bf16.mxu0 %v2729
        %4055 = vmatpush1.bf16.msra.mxu0 %v2728
        %4056 = vmatprep.subr.bf16.mxu0 %v2733
        %4057 = vmatpush1.bf16.msra.mxu0 %v2732
        %4058 = vmatprep.subr.bf16.mxu0 %v2737
        %4059 = vmatpush1.bf16.msra.mxu0 %v2736
        %4060 = vmatprep.subr.bf16.mxu0 %v2741
        %4061 = vmatpush1.bf16.msra.mxu0 %v2740
        %4062 = vmatprep.mubr.bf16.mxu0 %v1111
        %4063 = vmatmul.mubr.bf16.gmra.mrb[0].mxu0 %v1110
        %v4064 = vpop.f32.mrb[0].mxu0
        %v4065 = vadd.f32 %v1077, %v4064
        %v4066 = vpop.f32.mrb[0].mxu0
        %v4067 = vadd.f32 %v1081, %v4066
        %v4068 = vpop.f32.mrb[0].mxu0
        %v4069 = vpop.f32.mrb[0].mxu0
        %4070 = vdwg.mxu0
        %4071 = vmatprep.subr.bf16.mxu0 %v2745
        %4072 = vmatpush1.bf16.msra.mxu0 %v2744
        %4073 = vmatprep.subr.bf16.mxu0 %v2749
        %4074 = vmatpush1.bf16.msra.mxu0 %v2748
        %4075 = vmatprep.subr.bf16.mxu0 %v2753
        %4076 = vmatpush1.bf16.msra.mxu0 %v2752
        %4077 = vmatprep.subr.bf16.mxu0 %v2757
        %4078 = vmatpush1.bf16.msra.mxu0 %v2756
        %4079 = vmatprep.subr.bf16.mxu0 %v2761
        %4080 = vmatpush1.bf16.msra.mxu0 %v2760
        %4081 = vmatprep.subr.bf16.mxu0 %v2765
        %4082 = vmatpush1.bf16.msra.mxu0 %v2764
        %4083 = vmatprep.subr.bf16.mxu0 %v2769
        %4084 = vmatpush1.bf16.msra.mxu0 %v2768
        %4085 = vmatprep.subr.bf16.mxu0 %v2773
        %4086 = vmatpush1.bf16.msra.mxu0 %v2772
        %4087 = vmatprep.subr.bf16.mxu0 %v2777
        %4088 = vmatpush1.bf16.msra.mxu0 %v2776
        %4089 = vmatprep.subr.bf16.mxu0 %v2781
        %4090 = vmatpush1.bf16.msra.mxu0 %v2780
        %4091 = vmatprep.subr.bf16.mxu0 %v2785
        %4092 = vmatpush1.bf16.msra.mxu0 %v2784
        %4093 = vmatprep.subr.bf16.mxu0 %v2789
        %4094 = vmatpush1.bf16.msra.mxu0 %v2788
        %4095 = vmatprep.subr.bf16.mxu0 %v2793
        %4096 = vmatpush1.bf16.msra.mxu0 %v2792
        %4097 = vmatprep.subr.bf16.mxu0 %v2797
        %4098 = vmatpush1.bf16.msra.mxu0 %v2796
        %4099 = vmatprep.subr.bf16.mxu0 %v2801
        %4100 = vmatpush1.bf16.msra.mxu0 %v2800
        %4101 = vmatprep.subr.bf16.mxu0 %v2805
        %4102 = vmatpush1.bf16.msra.mxu0 %v2804
        %4103 = vmatprep.mubr.bf16.mxu0 %v1113
        %4104 = vmatmul.mubr.bf16.gmra.mrb[0].mxu0 %v1112
        %v4105 = vpop.f32.mrb[0].mxu0
        %v4106 = vadd.f32 %v4065, %v4105
        %v4107 = vpop.f32.mrb[0].mxu0
        %v4108 = vadd.f32 %v4067, %v4107
        %v4109 = vpop.f32.mrb[0].mxu0
        %v4110 = vpop.f32.mrb[0].mxu0
        %4111 = vdwg.mxu0
        %4112 = vmatprep.subr.bf16.mxu0 %v2809
        %4113 = vmatpush1.bf16.msra.mxu0 %v2808
        %4114 = vmatprep.subr.bf16.mxu0 %v2813
        %4115 = vmatpush1.bf16.msra.mxu0 %v2812
        %4116 = vmatprep.subr.bf16.mxu0 %v2817
        %4117 = vmatpush1.bf16.msra.mxu0 %v2816
        %4118 = vmatprep.subr.bf16.mxu0 %v2821
        %4119 = vmatpush1.bf16.msra.mxu0 %v2820
        %4120 = vmatprep.subr.bf16.mxu0 %v2825
        %4121 = vmatpush1.bf16.msra.mxu0 %v2824
        %4122 = vmatprep.subr.bf16.mxu0 %v2829
        %4123 = vmatpush1.bf16.msra.mxu0 %v2828
        %4124 = vmatprep.subr.bf16.mxu0 %v2833
        %4125 = vmatpush1.bf16.msra.mxu0 %v2832
        %4126 = vmatprep.subr.bf16.mxu0 %v2837
        %4127 = vmatpush1.bf16.msra.mxu0 %v2836
        %4128 = vmatprep.subr.bf16.mxu0 %v2841
        %4129 = vmatpush1.bf16.msra.mxu0 %v2840
        %4130 = vmatprep.subr.bf16.mxu0 %v2845
        %4131 = vmatpush1.bf16.msra.mxu0 %v2844
        %4132 = vmatprep.subr.bf16.mxu0 %v2849
        %4133 = vmatpush1.bf16.msra.mxu0 %v2848
        %4134 = vmatprep.subr.bf16.mxu0 %v2853
        %4135 = vmatpush1.bf16.msra.mxu0 %v2852
        %4136 = vmatprep.subr.bf16.mxu0 %v2857
        %4137 = vmatpush1.bf16.msra.mxu0 %v2856
        %4138 = vmatprep.subr.bf16.mxu0 %v2861
        %4139 = vmatpush1.bf16.msra.mxu0 %v2860
        %4140 = vmatprep.subr.bf16.mxu0 %v2865
        %4141 = vmatpush1.bf16.msra.mxu0 %v2864
        %4142 = vmatprep.subr.bf16.mxu0 %v2869
        %4143 = vmatpush1.bf16.msra.mxu0 %v2868
        %4144 = vmatprep.mubr.bf16.mxu0 %v1115
        %4145 = vmatmul.mubr.bf16.gmra.mrb[0].mxu0 %v1114
        %v4146 = vpop.f32.mrb[0].mxu0
        %v4147 = vadd.f32 %v4106, %v4146
        %v4148 = vpop.f32.mrb[0].mxu0
        %v4149 = vadd.f32 %v4108, %v4148
        %v4150 = vpop.f32.mrb[0].mxu0
        %v4151 = vpop.f32.mrb[0].mxu0
        %4152 = vdwg.mxu0
        %4153 = vmatprep.subr.bf16.mxu0 %v2873
        %4154 = vmatpush1.bf16.msra.mxu0 %v2872
        %4155 = vmatprep.subr.bf16.mxu0 %v2877
        %4156 = vmatpush1.bf16.msra.mxu0 %v2876
        %4157 = vmatprep.subr.bf16.mxu0 %v2881
        %4158 = vmatpush1.bf16.msra.mxu0 %v2880
        %4159 = vmatprep.subr.bf16.mxu0 %v2885
        %4160 = vmatpush1.bf16.msra.mxu0 %v2884
        %4161 = vmatprep.subr.bf16.mxu0 %v2889
        %4162 = vmatpush1.bf16.msra.mxu0 %v2888
        %4163 = vmatprep.subr.bf16.mxu0 %v2893
        %4164 = vmatpush1.bf16.msra.mxu0 %v2892
        %4165 = vmatprep.subr.bf16.mxu0 %v2897
        %4166 = vmatpush1.bf16.msra.mxu0 %v2896
        %4167 = vmatprep.subr.bf16.mxu0 %v2901
        %4168 = vmatpush1.bf16.msra.mxu0 %v2900
        %4169 = vmatprep.subr.bf16.mxu0 %v2905
        %4170 = vmatpush1.bf16.msra.mxu0 %v2904
        %4171 = vmatprep.subr.bf16.mxu0 %v2909
        %4172 = vmatpush1.bf16.msra.mxu0 %v2908
        %4173 = vmatprep.subr.bf16.mxu0 %v2913
        %4174 = vmatpush1.bf16.msra.mxu0 %v2912
        %4175 = vmatprep.subr.bf16.mxu0 %v2917
        %4176 = vmatpush1.bf16.msra.mxu0 %v2916
        %4177 = vmatprep.subr.bf16.mxu0 %v2921
        %4178 = vmatpush1.bf16.msra.mxu0 %v2920
        %4179 = vmatprep.subr.bf16.mxu0 %v2925
        %4180 = vmatpush1.bf16.msra.mxu0 %v2924
        %4181 = vmatprep.subr.bf16.mxu0 %v2929
        %4182 = vmatpush1.bf16.msra.mxu0 %v2928
        %4183 = vmatprep.subr.bf16.mxu0 %v2933
        %4184 = vmatpush1.bf16.msra.mxu0 %v2932
        %4185 = vmatprep.mubr.bf16.mxu0 %v1117
        %4186 = vmatmul.mubr.bf16.gmra.mrb[0].mxu0 %v1116
        %v4187 = vpop.f32.mrb[0].mxu0
        %v4188 = vadd.f32 %v4147, %v4187
        %v4189 = vpop.f32.mrb[0].mxu0
        %v4190 = vadd.f32 %v4149, %v4189
        %v4191 = vpop.f32.mrb[0].mxu0
        %v4192 = vpop.f32.mrb[0].mxu0
        %4193 = vdwg.mxu0
        %4194 = vmatprep.subr.bf16.mxu0 %v2937
        %4195 = vmatpush1.bf16.msra.mxu0 %v2936
        %4196 = vmatprep.subr.bf16.mxu0 %v2941
        %4197 = vmatpush1.bf16.msra.mxu0 %v2940
        %4198 = vmatprep.subr.bf16.mxu0 %v2945
        %4199 = vmatpush1.bf16.msra.mxu0 %v2944
        %4200 = vmatprep.subr.bf16.mxu0 %v2949
        %4201 = vmatpush1.bf16.msra.mxu0 %v2948
        %4202 = vmatprep.subr.bf16.mxu0 %v2953
        %4203 = vmatpush1.bf16.msra.mxu0 %v2952
        %4204 = vmatprep.subr.bf16.mxu0 %v2957
        %4205 = vmatpush1.bf16.msra.mxu0 %v2956
        %4206 = vmatprep.subr.bf16.mxu0 %v2961
        %4207 = vmatpush1.bf16.msra.mxu0 %v2960
        %4208 = vmatprep.subr.bf16.mxu0 %v2965
        %4209 = vmatpush1.bf16.msra.mxu0 %v2964
        %4210 = vmatprep.subr.bf16.mxu0 %v2969
        %4211 = vmatpush1.bf16.msra.mxu0 %v2968
        %4212 = vmatprep.subr.bf16.mxu0 %v2973
        %4213 = vmatpush1.bf16.msra.mxu0 %v2972
        %4214 = vmatprep.subr.bf16.mxu0 %v2977
        %4215 = vmatpush1.bf16.msra.mxu0 %v2976
        %4216 = vmatprep.subr.bf16.mxu0 %v2981
        %4217 = vmatpush1.bf16.msra.mxu0 %v2980
        %4218 = vmatprep.subr.bf16.mxu0 %v2985
        %4219 = vmatpush1.bf16.msra.mxu0 %v2984
        %4220 = vmatprep.subr.bf16.mxu0 %v2989
        %4221 = vmatpush1.bf16.msra.mxu0 %v2988
        %4222 = vmatprep.subr.bf16.mxu0 %v2993
        %4223 = vmatpush1.bf16.msra.mxu0 %v2992
        %4224 = vmatprep.subr.bf16.mxu0 %v2997
        %4225 = vmatpush1.bf16.msra.mxu0 %v2996
        %4226 = vmatprep.mubr.bf16.mxu0 %v1119
        %4227 = vmatmul.mubr.bf16.gmra.mrb[0].mxu0 %v1118
        %v4228 = vpop.f32.mrb[0].mxu0
        %v4229 = vadd.f32 %v4188, %v4228
        %v4230 = vpop.f32.mrb[0].mxu0
        %v4231 = vadd.f32 %v4190, %v4230
        %v4232 = vpop.f32.mrb[0].mxu0
        %v4233 = vpop.f32.mrb[0].mxu0
        %4234 = vdwg.mxu0
        %4235 = vmatprep.subr.bf16.mxu0 %v3001
        %4236 = vmatpush1.bf16.msra.mxu0 %v3000
        %4237 = vmatprep.subr.bf16.mxu0 %v3005
        %4238 = vmatpush1.bf16.msra.mxu0 %v3004
        %4239 = vmatprep.subr.bf16.mxu0 %v3009
        %4240 = vmatpush1.bf16.msra.mxu0 %v3008
        %4241 = vmatprep.subr.bf16.mxu0 %v3013
        %4242 = vmatpush1.bf16.msra.mxu0 %v3012
        %4243 = vmatprep.subr.bf16.mxu0 %v3017
        %4244 = vmatpush1.bf16.msra.mxu0 %v3016
        %4245 = vmatprep.subr.bf16.mxu0 %v3021
        %4246 = vmatpush1.bf16.msra.mxu0 %v3020
        %4247 = vmatprep.subr.bf16.mxu0 %v3025
        %4248 = vmatpush1.bf16.msra.mxu0 %v3024
        %4249 = vmatprep.subr.bf16.mxu0 %v3029
        %4250 = vmatpush1.bf16.msra.mxu0 %v3028
        %4251 = vmatprep.subr.bf16.mxu0 %v3033
        %4252 = vmatpush1.bf16.msra.mxu0 %v3032
        %4253 = vmatprep.subr.bf16.mxu0 %v3037
        %4254 = vmatpush1.bf16.msra.mxu0 %v3036
        %4255 = vmatprep.subr.bf16.mxu0 %v3041
        %4256 = vmatpush1.bf16.msra.mxu0 %v3040
        %4257 = vmatprep.subr.bf16.mxu0 %v3045
        %4258 = vmatpush1.bf16.msra.mxu0 %v3044
        %4259 = vmatprep.subr.bf16.mxu0 %v3049
        %4260 = vmatpush1.bf16.msra.mxu0 %v3048
        %4261 = vmatprep.subr.bf16.mxu0 %v3053
        %4262 = vmatpush1.bf16.msra.mxu0 %v3052
        %4263 = vmatprep.subr.bf16.mxu0 %v3057
        %4264 = vmatpush1.bf16.msra.mxu0 %v3056
        %4265 = vmatprep.subr.bf16.mxu0 %v3061
        %4266 = vmatpush1.bf16.msra.mxu0 %v3060
        %4267 = vmatprep.mubr.bf16.mxu0 %v1121
        %4268 = vmatmul.mubr.bf16.gmra.mrb[0].mxu0 %v1120
        %v4269 = vpop.f32.mrb[0].mxu0
        %v4270 = vadd.f32 %v4229, %v4269
        %v4271 = vpop.f32.mrb[0].mxu0
        %v4272 = vadd.f32 %v4231, %v4271
        %v4273 = vpop.f32.mrb[0].mxu0
        %v4274 = vpop.f32.mrb[0].mxu0
        %4275 = vdwg.mxu0
        %4276 = vmatprep.subr.bf16.mxu0 %v3065
        %4277 = vmatpush1.bf16.msra.mxu0 %v3064
        %4278 = vmatprep.subr.bf16.mxu0 %v3069
        %4279 = vmatpush1.bf16.msra.mxu0 %v3068
        %4280 = vmatprep.subr.bf16.mxu0 %v3073
        %4281 = vmatpush1.bf16.msra.mxu0 %v3072
        %4282 = vmatprep.subr.bf16.mxu0 %v3077
        %4283 = vmatpush1.bf16.msra.mxu0 %v3076
        %4284 = vmatprep.subr.bf16.mxu0 %v3081
        %4285 = vmatpush1.bf16.msra.mxu0 %v3080
        %4286 = vmatprep.subr.bf16.mxu0 %v3085
        %4287 = vmatpush1.bf16.msra.mxu0 %v3084
        %4288 = vmatprep.subr.bf16.mxu0 %v3089
        %4289 = vmatpush1.bf16.msra.mxu0 %v3088
        %4290 = vmatprep.subr.bf16.mxu0 %v3093
        %4291 = vmatpush1.bf16.msra.mxu0 %v3092
        %4292 = vmatprep.subr.bf16.mxu0 %v3097
        %4293 = vmatpush1.bf16.msra.mxu0 %v3096
        %4294 = vmatprep.subr.bf16.mxu0 %v3101
        %4295 = vmatpush1.bf16.msra.mxu0 %v3100
        %4296 = vmatprep.subr.bf16.mxu0 %v3105
        %4297 = vmatpush1.bf16.msra.mxu0 %v3104
        %4298 = vmatprep.subr.bf16.mxu0 %v3109
        %4299 = vmatpush1.bf16.msra.mxu0 %v3108
        %4300 = vmatprep.subr.bf16.mxu0 %v3113
        %4301 = vmatpush1.bf16.msra.mxu0 %v3112
        %4302 = vmatprep.subr.bf16.mxu0 %v3117
        %4303 = vmatpush1.bf16.msra.mxu0 %v3116
        %4304 = vmatprep.subr.bf16.mxu0 %v3121
        %4305 = vmatpush1.bf16.msra.mxu0 %v3120
        %4306 = vmatprep.subr.bf16.mxu0 %v3125
        %4307 = vmatpush1.bf16.msra.mxu0 %v3124
        %4308 = vmatprep.mubr.bf16.mxu0 %v1123
        %4309 = vmatmul.mubr.bf16.gmra.mrb[0].mxu0 %v1122
        %v4310 = vpop.f32.mrb[0].mxu0
        %v4311 = vadd.f32 %v4270, %v4310
        %v4312 = vpop.f32.mrb[0].mxu0
        %v4313 = vadd.f32 %v4272, %v4312
        %v4314 = vpop.f32.mrb[0].mxu0
        %v4315 = vpop.f32.mrb[0].mxu0
        %4316 = vdwg.mxu0
        %4317 = vmatprep.subr.bf16.mxu0 %v3129
        %4318 = vmatpush1.bf16.msra.mxu0 %v3128
        %4319 = vmatprep.subr.bf16.mxu0 %v3133
        %4320 = vmatpush1.bf16.msra.mxu0 %v3132
        %4321 = vmatprep.subr.bf16.mxu0 %v3137
        %4322 = vmatpush1.bf16.msra.mxu0 %v3136
        %4323 = vmatprep.subr.bf16.mxu0 %v3141
        %4324 = vmatpush1.bf16.msra.mxu0 %v3140
        %4325 = vmatprep.subr.bf16.mxu0 %v3145
        %4326 = vmatpush1.bf16.msra.mxu0 %v3144
        %4327 = vmatprep.subr.bf16.mxu0 %v3149
        %4328 = vmatpush1.bf16.msra.mxu0 %v3148
        %4329 = vmatprep.subr.bf16.mxu0 %v3153
        %4330 = vmatpush1.bf16.msra.mxu0 %v3152
        %4331 = vmatprep.subr.bf16.mxu0 %v3157
        %4332 = vmatpush1.bf16.msra.mxu0 %v3156
        %4333 = vmatprep.subr.bf16.mxu0 %v3161
        %4334 = vmatpush1.bf16.msra.mxu0 %v3160
        %4335 = vmatprep.subr.bf16.mxu0 %v3165
        %4336 = vmatpush1.bf16.msra.mxu0 %v3164
        %4337 = vmatprep.subr.bf16.mxu0 %v3169
        %4338 = vmatpush1.bf16.msra.mxu0 %v3168
        %4339 = vmatprep.subr.bf16.mxu0 %v3173
        %4340 = vmatpush1.bf16.msra.mxu0 %v3172
        %4341 = vmatprep.subr.bf16.mxu0 %v3177
        %4342 = vmatpush1.bf16.msra.mxu0 %v3176
        %4343 = vmatprep.subr.bf16.mxu0 %v3181
        %4344 = vmatpush1.bf16.msra.mxu0 %v3180
        %4345 = vmatprep.subr.bf16.mxu0 %v3185
        %4346 = vmatpush1.bf16.msra.mxu0 %v3184
        %4347 = vmatprep.subr.bf16.mxu0 %v3189
        %4348 = vmatpush1.bf16.msra.mxu0 %v3188
        %4349 = vmatprep.mubr.bf16.mxu0 %v1125
        %4350 = vmatmul.mubr.bf16.gmra.mrb[0].mxu0 %v1124
        %v4351 = vpop.f32.mrb[0].mxu0
        %v4352 = vadd.f32 %v4311, %v4351
        %v4353 = vpop.f32.mrb[0].mxu0
        %v4354 = vadd.f32 %v4313, %v4353
        %v4355 = vpop.f32.mrb[0].mxu0
        %v4356 = vpop.f32.mrb[0].mxu0
        %4357 = vdwg.mxu0
        %s4358 = sld [smem:[#allocation2 + %s37]]
        %v4359 = vstv %s4358
        %v4360 = vmul.f32 %v4359, %v4024
        %v4361 = vmul.f32 %v4359, %v4026
        %v4362 = vmul.f32 %v4359, %v4352
        %v4363 = vmul.f32 %v4359, %v4354
        %s4364 = sld [smem:[#allocation6 + %s37]]
        %v4365 = vstv %s4364
        %v4366 = vadd.f32 %v4360, %v4365
        %v4367 = vadd.f32 %v4361, %v4365
        %v4368 = vadd.f32 %v4362, %v4365
        %v4369 = vadd.f32 %v4363, %v4365
        %v4370 = vmax.f32 %v4366, 0.0
        %v4371 = vmax.f32 %v4367, 0.0
        %v4372 = vmax.f32 %v4368, 0.0
        %v4373 = vmax.f32 %v4369, 0.0
        %v4374 = vpack.c.bf16 %v4370, %v4370
        %v4375 = vpack.c.bf16 %v4371, %v4371
        %v4376 = vpack.c.bf16 %v4372, %v4372
        %v4377 = vpack.c.bf16 %v4373, %v4373
        %v4378 = vld [vmem:[#allocation12] sm:$0xff]
        %v4379 = vld [vmem:[#allocation12 + $0x8] sm:$0xff]
        %v4380 = vld [vmem:[#allocation12 + $0x10] sm:$0xff]
        %v4381 = vld [vmem:[#allocation12 + $0x18] sm:$0xff]
        %v4382 = vld [vmem:[#allocation12 + $0x20] sm:$0xff]
        %v4383 = vld [vmem:[#allocation12 + $0x28] sm:$0xff]
        %v4384 = vld [vmem:[#allocation12 + $0x30] sm:$0xff]
        %v4385 = vld [vmem:[#allocation12 + $0x38] sm:$0xff]
        %v4386 = vld [vmem:[#allocation12 + $0x40] sm:$0xff]
        %v4387 = vld [vmem:[#allocation12 + $0x48] sm:$0xff]
        %v4388 = vld [vmem:[#allocation12 + $0x50] sm:$0xff]
        %v4389 = vld [vmem:[#allocation12 + $0x58] sm:$0xff]
        %v4390 = vld [vmem:[#allocation12 + $0x60] sm:$0xff]
        %v4391 = vld [vmem:[#allocation12 + $0x68] sm:$0xff]
        %v4392 = vld [vmem:[#allocation12 + $0x70] sm:$0xff]
        %v4393 = vld [vmem:[#allocation12 + $0x78] sm:$0xff]
        %v4394 = vld [vmem:[#allocation12 + $0x80] sm:$0xff]
        %v4395 = vld [vmem:[#allocation12 + $0x88] sm:$0xff]
        %v4396 = vld [vmem:[#allocation12 + $0x90] sm:$0xff]
        %v4397 = vld [vmem:[#allocation12 + $0x98] sm:$0xff]
        %v4398 = vld [vmem:[#allocation12 + $0xa0] sm:$0xff]
        %v4399 = vld [vmem:[#allocation12 + $0xa8] sm:$0xff]
        %v4400 = vld [vmem:[#allocation12 + $0xb0] sm:$0xff]
        %v4401 = vld [vmem:[#allocation12 + $0xb8] sm:$0xff]
        %v4402 = vld [vmem:[#allocation12 + $0xc0] sm:$0xff]
        %v4403 = vld [vmem:[#allocation12 + $0xc8] sm:$0xff]
        %v4404 = vld [vmem:[#allocation12 + $0xd0] sm:$0xff]
        %v4405 = vld [vmem:[#allocation12 + $0xd8] sm:$0xff]
        %v4406 = vld [vmem:[#allocation12 + $0xe0] sm:$0xff]
        %v4407 = vld [vmem:[#allocation12 + $0xe8] sm:$0xff]
        %v4408 = vld [vmem:[#allocation12 + $0xf0] sm:$0xff]
        %v4409 = vld [vmem:[#allocation12 + $0xf8] sm:$0xff]
        %v4410 = vld [vmem:[#allocation12 + $0x100] sm:$0xff]
        %v4411 = vld [vmem:[#allocation12 + $0x108] sm:$0xff]
        %v4412 = vld [vmem:[#allocation12 + $0x110] sm:$0xff]
        %v4413 = vld [vmem:[#allocation12 + $0x118] sm:$0xff]
        %v4414 = vld [vmem:[#allocation12 + $0x120] sm:$0xff]
        %v4415 = vld [vmem:[#allocation12 + $0x128] sm:$0xff]
        %v4416 = vld [vmem:[#allocation12 + $0x130] sm:$0xff]
        %v4417 = vld [vmem:[#allocation12 + $0x138] sm:$0xff]
        %v4418 = vld [vmem:[#allocation12 + $0x140] sm:$0xff]
        %v4419 = vld [vmem:[#allocation12 + $0x148] sm:$0xff]
        %v4420 = vld [vmem:[#allocation12 + $0x150] sm:$0xff]
        %v4421 = vld [vmem:[#allocation12 + $0x158] sm:$0xff]
        %v4422 = vld [vmem:[#allocation12 + $0x160] sm:$0xff]
        %v4423 = vld [vmem:[#allocation12 + $0x168] sm:$0xff]
        %v4424 = vld [vmem:[#allocation12 + $0x170] sm:$0xff]
        %v4425 = vld [vmem:[#allocation12 + $0x178] sm:$0xff]
        %v4426 = vld [vmem:[#allocation12 + $0x180] sm:$0xff]
        %v4427 = vld [vmem:[#allocation12 + $0x188] sm:$0xff]
        %v4428 = vld [vmem:[#allocation12 + $0x190] sm:$0xff]
        %v4429 = vld [vmem:[#allocation12 + $0x198] sm:$0xff]
        %v4430 = vld [vmem:[#allocation12 + $0x1a0] sm:$0xff]
        %v4431 = vld [vmem:[#allocation12 + $0x1a8] sm:$0xff]
        %v4432 = vld [vmem:[#allocation12 + $0x1b0] sm:$0xff]
        %v4433 = vld [vmem:[#allocation12 + $0x1b8] sm:$0xff]
        %v4434 = vld [vmem:[#allocation12 + $0x1c0] sm:$0xff]
        %v4435 = vld [vmem:[#allocation12 + $0x1c8] sm:$0xff]
        %v4436 = vld [vmem:[#allocation12 + $0x1d0] sm:$0xff]
        %v4437 = vld [vmem:[#allocation12 + $0x1d8] sm:$0xff]
        %v4438 = vld [vmem:[#allocation12 + $0x1e0] sm:$0xff]
        %v4439 = vld [vmem:[#allocation12 + $0x1e8] sm:$0xff]
        %v4440 = vld [vmem:[#allocation12 + $0x1f0] sm:$0xff]
        %v4441 = vld [vmem:[#allocation12 + $0x1f8] sm:$0xff]
        %v4442 = vld [vmem:[#allocation14] sm:$0x3]
        %v4444 = vlaneseq
        %v4445 = vshrl.u32 %v4444, 7
        %v4446 = vsub.s32 0, %v4445
        %v4447 = vrot.slane %v4442, %v4446
        %v4448 = vlaneseq
        %v4449 = vshrl.u32 %v4448, 7
        %v4450 = vsub.s32 1, %v4449
        %v4451 = vrot.slane %v4442, %v4450
        %v4518 = vunpack.c.l.b16 %v4378
        %v4519 = vunpack.c.h.b16 %v4378
        %v4520 = vunpack.c.l.b16 %v4379
        %v4521 = vunpack.c.h.b16 %v4379
        %v4522 = vunpack.c.l.b16 %v4380
        %v4523 = vunpack.c.h.b16 %v4380
        %v4524 = vunpack.c.l.b16 %v4381
        %v4525 = vunpack.c.h.b16 %v4381
        %v4526 = vunpack.c.l.b16 %v4382
        %v4527 = vunpack.c.h.b16 %v4382
        %v4528 = vunpack.c.l.b16 %v4383
        %v4529 = vunpack.c.h.b16 %v4383
        %v4530 = vunpack.c.l.b16 %v4384
        %v4531 = vunpack.c.h.b16 %v4384
        %v4532 = vunpack.c.l.b16 %v4385
        %v4533 = vunpack.c.h.b16 %v4385
        %v4534 = vunpack.c.l.b16 %v4386
        %v4535 = vunpack.c.h.b16 %v4386
        %v4536 = vunpack.c.l.b16 %v4387
        %v4537 = vunpack.c.h.b16 %v4387
        %v4538 = vunpack.c.l.b16 %v4388
        %v4539 = vunpack.c.h.b16 %v4388
        %v4540 = vunpack.c.l.b16 %v4389
        %v4541 = vunpack.c.h.b16 %v4389
        %v4542 = vunpack.c.l.b16 %v4390
        %v4543 = vunpack.c.h.b16 %v4390
        %v4544 = vunpack.c.l.b16 %v4391
        %v4545 = vunpack.c.h.b16 %v4391
        %v4546 = vunpack.c.l.b16 %v4392
        %v4547 = vunpack.c.h.b16 %v4392
        %v4548 = vunpack.c.l.b16 %v4393
        %v4549 = vunpack.c.h.b16 %v4393
        %v4550 = vunpack.c.l.b16 %v4394
        %v4551 = vunpack.c.h.b16 %v4394
        %v4552 = vunpack.c.l.b16 %v4395
        %v4553 = vunpack.c.h.b16 %v4395
        %v4554 = vunpack.c.l.b16 %v4396
        %v4555 = vunpack.c.h.b16 %v4396
        %v4556 = vunpack.c.l.b16 %v4397
        %v4557 = vunpack.c.h.b16 %v4397
        %v4558 = vunpack.c.l.b16 %v4398
        %v4559 = vunpack.c.h.b16 %v4398
        %v4560 = vunpack.c.l.b16 %v4399
        %v4561 = vunpack.c.h.b16 %v4399
        %v4562 = vunpack.c.l.b16 %v4400
        %v4563 = vunpack.c.h.b16 %v4400
        %v4564 = vunpack.c.l.b16 %v4401
        %v4565 = vunpack.c.h.b16 %v4401
        %v4566 = vunpack.c.l.b16 %v4402
        %v4567 = vunpack.c.h.b16 %v4402
        %v4568 = vunpack.c.l.b16 %v4403
        %v4569 = vunpack.c.h.b16 %v4403
        %v4570 = vunpack.c.l.b16 %v4404
        %v4571 = vunpack.c.h.b16 %v4404
        %v4572 = vunpack.c.l.b16 %v4405
        %v4573 = vunpack.c.h.b16 %v4405
        %v4574 = vunpack.c.l.b16 %v4406
        %v4575 = vunpack.c.h.b16 %v4406
        %v4576 = vunpack.c.l.b16 %v4407
        %v4577 = vunpack.c.h.b16 %v4407
        %v4578 = vunpack.c.l.b16 %v4408
        %v4579 = vunpack.c.h.b16 %v4408
        %v4580 = vunpack.c.l.b16 %v4409
        %v4581 = vunpack.c.h.b16 %v4409
        %v4582 = vunpack.c.l.b16 %v4410
        %v4583 = vunpack.c.h.b16 %v4410
        %v4584 = vunpack.c.l.b16 %v4411
        %v4585 = vunpack.c.h.b16 %v4411
        %v4586 = vunpack.c.l.b16 %v4412
        %v4587 = vunpack.c.h.b16 %v4412
        %v4588 = vunpack.c.l.b16 %v4413
        %v4589 = vunpack.c.h.b16 %v4413
        %v4590 = vunpack.c.l.b16 %v4414
        %v4591 = vunpack.c.h.b16 %v4414
        %v4592 = vunpack.c.l.b16 %v4415
        %v4593 = vunpack.c.h.b16 %v4415
        %v4594 = vunpack.c.l.b16 %v4416
        %v4595 = vunpack.c.h.b16 %v4416
        %v4596 = vunpack.c.l.b16 %v4417
        %v4597 = vunpack.c.h.b16 %v4417
        %v4598 = vunpack.c.l.b16 %v4418
        %v4599 = vunpack.c.h.b16 %v4418
        %v4600 = vunpack.c.l.b16 %v4419
        %v4601 = vunpack.c.h.b16 %v4419
        %v4602 = vunpack.c.l.b16 %v4420
        %v4603 = vunpack.c.h.b16 %v4420
        %v4604 = vunpack.c.l.b16 %v4421
        %v4605 = vunpack.c.h.b16 %v4421
        %v4606 = vunpack.c.l.b16 %v4422
        %v4607 = vunpack.c.h.b16 %v4422
        %v4608 = vunpack.c.l.b16 %v4423
        %v4609 = vunpack.c.h.b16 %v4423
        %v4610 = vunpack.c.l.b16 %v4424
        %v4611 = vunpack.c.h.b16 %v4424
        %v4612 = vunpack.c.l.b16 %v4425
        %v4613 = vunpack.c.h.b16 %v4425
        %v4614 = vunpack.c.l.b16 %v4426
        %v4615 = vunpack.c.h.b16 %v4426
        %v4616 = vunpack.c.l.b16 %v4427
        %v4617 = vunpack.c.h.b16 %v4427
        %v4618 = vunpack.c.l.b16 %v4428
        %v4619 = vunpack.c.h.b16 %v4428
        %v4620 = vunpack.c.l.b16 %v4429
        %v4621 = vunpack.c.h.b16 %v4429
        %v4622 = vunpack.c.l.b16 %v4430
        %v4623 = vunpack.c.h.b16 %v4430
        %v4624 = vunpack.c.l.b16 %v4431
        %v4625 = vunpack.c.h.b16 %v4431
        %v4626 = vunpack.c.l.b16 %v4432
        %v4627 = vunpack.c.h.b16 %v4432
        %v4628 = vunpack.c.l.b16 %v4433
        %v4629 = vunpack.c.h.b16 %v4433
        %v4630 = vunpack.c.l.b16 %v4434
        %v4631 = vunpack.c.h.b16 %v4434
        %v4632 = vunpack.c.l.b16 %v4435
        %v4633 = vunpack.c.h.b16 %v4435
        %v4634 = vunpack.c.l.b16 %v4436
        %v4635 = vunpack.c.h.b16 %v4436
        %v4636 = vunpack.c.l.b16 %v4437
        %v4637 = vunpack.c.h.b16 %v4437
        %v4638 = vunpack.c.l.b16 %v4438
        %v4639 = vunpack.c.h.b16 %v4438
        %v4640 = vunpack.c.l.b16 %v4439
        %v4641 = vunpack.c.h.b16 %v4439
        %v4642 = vunpack.c.l.b16 %v4440
        %v4643 = vunpack.c.h.b16 %v4440
        %v4644 = vunpack.c.l.b16 %v4441
        %v4645 = vunpack.c.h.b16 %v4441
        %v4646 = vpack.c.b16 %v4520, %v4518
        %v4647 = vpack.c.b16 %v4521, %v4519
        %v4648 = vpack.c.b16 %v4524, %v4522
        %v4649 = vpack.c.b16 %v4525, %v4523
        %v4650 = vpack.c.b16 %v4528, %v4526
        %v4651 = vpack.c.b16 %v4529, %v4527
        %v4652 = vpack.c.b16 %v4532, %v4530
        %v4653 = vpack.c.b16 %v4533, %v4531
        %v4654 = vpack.c.b16 %v4536, %v4534
        %v4655 = vpack.c.b16 %v4537, %v4535
        %v4656 = vpack.c.b16 %v4540, %v4538
        %v4657 = vpack.c.b16 %v4541, %v4539
        %v4658 = vpack.c.b16 %v4544, %v4542
        %v4659 = vpack.c.b16 %v4545, %v4543
        %v4660 = vpack.c.b16 %v4548, %v4546
        %v4661 = vpack.c.b16 %v4549, %v4547
        %v4662 = vpack.c.b16 %v4552, %v4550
        %v4663 = vpack.c.b16 %v4553, %v4551
        %v4664 = vpack.c.b16 %v4556, %v4554
        %v4665 = vpack.c.b16 %v4557, %v4555
        %v4666 = vpack.c.b16 %v4560, %v4558
        %v4667 = vpack.c.b16 %v4561, %v4559
        %v4668 = vpack.c.b16 %v4564, %v4562
        %v4669 = vpack.c.b16 %v4565, %v4563
        %v4670 = vpack.c.b16 %v4568, %v4566
        %v4671 = vpack.c.b16 %v4569, %v4567
        %v4672 = vpack.c.b16 %v4572, %v4570
        %v4673 = vpack.c.b16 %v4573, %v4571
        %v4674 = vpack.c.b16 %v4576, %v4574
        %v4675 = vpack.c.b16 %v4577, %v4575
        %v4676 = vpack.c.b16 %v4580, %v4578
        %v4677 = vpack.c.b16 %v4581, %v4579
        %v4678 = vpack.c.b16 %v4584, %v4582
        %v4679 = vpack.c.b16 %v4585, %v4583
        %v4680 = vpack.c.b16 %v4588, %v4586
        %v4681 = vpack.c.b16 %v4589, %v4587
        %v4682 = vpack.c.b16 %v4592, %v4590
        %v4683 = vpack.c.b16 %v4593, %v4591
        %v4684 = vpack.c.b16 %v4596, %v4594
        %v4685 = vpack.c.b16 %v4597, %v4595
        %v4686 = vpack.c.b16 %v4600, %v4598
        %v4687 = vpack.c.b16 %v4601, %v4599
        %v4688 = vpack.c.b16 %v4604, %v4602
        %v4689 = vpack.c.b16 %v4605, %v4603
        %v4690 = vpack.c.b16 %v4608, %v4606
        %v4691 = vpack.c.b16 %v4609, %v4607
        %v4692 = vpack.c.b16 %v4612, %v4610
        %v4693 = vpack.c.b16 %v4613, %v4611
        %v4694 = vpack.c.b16 %v4616, %v4614
        %v4695 = vpack.c.b16 %v4617, %v4615
        %v4696 = vpack.c.b16 %v4620, %v4618
        %v4697 = vpack.c.b16 %v4621, %v4619
        %v4698 = vpack.c.b16 %v4624, %v4622
        %v4699 = vpack.c.b16 %v4625, %v4623
        %v4700 = vpack.c.b16 %v4628, %v4626
        %v4701 = vpack.c.b16 %v4629, %v4627
        %v4702 = vpack.c.b16 %v4632, %v4630
        %v4703 = vpack.c.b16 %v4633, %v4631
        %v4704 = vpack.c.b16 %v4636, %v4634
        %v4705 = vpack.c.b16 %v4637, %v4635
        %v4706 = vpack.c.b16 %v4640, %v4638
        %v4707 = vpack.c.b16 %v4641, %v4639
        %v4708 = vpack.c.b16 %v4644, %v4642
        %v4709 = vpack.c.b16 %v4645, %v4643
        %4774 = vmatprep.subr.bf16.mxu0 %v4647
        %4775 = vmatpush1.bf16.msra.mxu0 %v4646
        %4776 = vmatprep.subr.bf16.mxu0 %v4649
        %4777 = vmatpush1.bf16.msra.mxu0 %v4648
        %4778 = vmatprep.subr.bf16.mxu0 %v4651
        %4779 = vmatpush1.bf16.msra.mxu0 %v4650
        %4780 = vmatprep.subr.bf16.mxu0 %v4653
        %4781 = vmatpush1.bf16.msra.mxu0 %v4652
        %4782 = vmatprep.subr.bf16.mxu0 %v4655
        %4783 = vmatpush1.bf16.msra.mxu0 %v4654
        %4784 = vmatprep.subr.bf16.mxu0 %v4657
        %4785 = vmatpush1.bf16.msra.mxu0 %v4656
        %4786 = vmatprep.subr.bf16.mxu0 %v4659
        %4787 = vmatpush1.bf16.msra.mxu0 %v4658
        %4788 = vmatprep.subr.bf16.mxu0 %v4661
        %4789 = vmatpush1.bf16.msra.mxu0 %v4660
        %4790 = vmatprep.subr.bf16.mxu0 %v4663
        %4791 = vmatpush1.bf16.msra.mxu0 %v4662
        %4792 = vmatprep.subr.bf16.mxu0 %v4665
        %4793 = vmatpush1.bf16.msra.mxu0 %v4664
        %4794 = vmatprep.subr.bf16.mxu0 %v4667
        %4795 = vmatpush1.bf16.msra.mxu0 %v4666
        %4796 = vmatprep.subr.bf16.mxu0 %v4669
        %4797 = vmatpush1.bf16.msra.mxu0 %v4668
        %4798 = vmatprep.subr.bf16.mxu0 %v4671
        %4799 = vmatpush1.bf16.msra.mxu0 %v4670
        %4800 = vmatprep.subr.bf16.mxu0 %v4673
        %4801 = vmatpush1.bf16.msra.mxu0 %v4672
        %4802 = vmatprep.subr.bf16.mxu0 %v4675
        %4803 = vmatpush1.bf16.msra.mxu0 %v4674
        %4804 = vmatprep.subr.bf16.mxu0 %v4677
        %4805 = vmatpush1.bf16.msra.mxu0 %v4676
        %4806 = vmatprep.mubr.bf16.mxu0 %v4375
        %4807 = vmatmul.mubr.bf16.gmra.mrb[0].mxu0 %v4374
        %v4808 = vpop.f32.mrb[0].mxu0
        %v4809 = vadd.f32 %v4447, %v4808
        %v4810 = vpop.f32.mrb[0].mxu0
        %v4811 = vadd.f32 %v4451, %v4810
        %v4812 = vpop.f32.mrb[0].mxu0
        %v4813 = vpop.f32.mrb[0].mxu0
        %4814 = vdwg.mxu0
        %4815 = vmatprep.subr.bf16.mxu0 %v4679
        %4816 = vmatpush1.bf16.msra.mxu0 %v4678
        %4817 = vmatprep.subr.bf16.mxu0 %v4681
        %4818 = vmatpush1.bf16.msra.mxu0 %v4680
        %4819 = vmatprep.subr.bf16.mxu0 %v4683
        %4820 = vmatpush1.bf16.msra.mxu0 %v4682
        %4821 = vmatprep.subr.bf16.mxu0 %v4685
        %4822 = vmatpush1.bf16.msra.mxu0 %v4684
        %4823 = vmatprep.subr.bf16.mxu0 %v4687
        %4824 = vmatpush1.bf16.msra.mxu0 %v4686
        %4825 = vmatprep.subr.bf16.mxu0 %v4689
        %4826 = vmatpush1.bf16.msra.mxu0 %v4688
        %4827 = vmatprep.subr.bf16.mxu0 %v4691
        %4828 = vmatpush1.bf16.msra.mxu0 %v4690
        %4829 = vmatprep.subr.bf16.mxu0 %v4693
        %4830 = vmatpush1.bf16.msra.mxu0 %v4692
        %4831 = vmatprep.subr.bf16.mxu0 %v4695
        %4832 = vmatpush1.bf16.msra.mxu0 %v4694
        %4833 = vmatprep.subr.bf16.mxu0 %v4697
        %4834 = vmatpush1.bf16.msra.mxu0 %v4696
        %4835 = vmatprep.subr.bf16.mxu0 %v4699
        %4836 = vmatpush1.bf16.msra.mxu0 %v4698
        %4837 = vmatprep.subr.bf16.mxu0 %v4701
        %4838 = vmatpush1.bf16.msra.mxu0 %v4700
        %4839 = vmatprep.subr.bf16.mxu0 %v4703
        %4840 = vmatpush1.bf16.msra.mxu0 %v4702
        %4841 = vmatprep.subr.bf16.mxu0 %v4705
        %4842 = vmatpush1.bf16.msra.mxu0 %v4704
        %4843 = vmatprep.subr.bf16.mxu0 %v4707
        %4844 = vmatpush1.bf16.msra.mxu0 %v4706
        %4845 = vmatprep.subr.bf16.mxu0 %v4709
        %4846 = vmatpush1.bf16.msra.mxu0 %v4708
        %4847 = vmatprep.mubr.bf16.mxu0 %v4377
        %4848 = vmatmul.mubr.bf16.gmra.mrb[0].mxu0 %v4376
        %v4849 = vpop.f32.mrb[0].mxu0
        %v4850 = vadd.f32 %v4809, %v4849
        %v4851 = vpop.f32.mrb[0].mxu0
        %v4852 = vadd.f32 %v4811, %v4851
        %v4853 = vpop.f32.mrb[0].mxu0
        %v4854 = vpop.f32.mrb[0].mxu0
        %4855 = vdwg.mxu0
        %s4856 = sshra.s32 %s37, 7
        %s4857 = sand.u32 %s37, 127
        %s4858 = sadd.s32 %s4856, 1
        %s4859 = smul.u32 %s4858, 128
        %s4860 = sshra.s32 %s37, 7
        %s4861 = sand.u32 %s37, 127
        %s4862 = sadd.s32 %s4859, %s4861
        %s4863 = sld [smem:[#allocation2 + %s4862]]
        %v4864 = vstv %s4863
        %v4865 = vmul.f32 %v4864, %v4850
        %v4866 = vmul.f32 %v4864, %v4852
        %s4867 = sld [smem:[#allocation6 + %s4862]]
        %v4868 = vstv %s4867
        %v4869 = vadd.f32 %v4865, %v4868
        %v4870 = vadd.f32 %v4866, %v4868
        %v4871 = vmax.f32 %v4869, 0.0
        %v4872 = vmax.f32 %v4870, 0.0
        %v4873 = vpack.c.bf16 %v4871, %v4871
        %v4874 = vpack.c.bf16 %v4872, %v4872
        %v4875 = vld [vmem:[#allocation15] sm:$0xf]
        %v4876 = vld [vmem:[#allocation15 + $0x4] sm:$0xf]
        %v4877 = vld [vmem:[#allocation15 + $0x8] sm:$0xf]
        %v4878 = vld [vmem:[#allocation15 + $0xc] sm:$0xf]
        %v4879 = vld [vmem:[#allocation15 + $0x10] sm:$0xf]
        %v4880 = vld [vmem:[#allocation15 + $0x14] sm:$0xf]
        %v4881 = vld [vmem:[#allocation15 + $0x18] sm:$0xf]
        %v4882 = vld [vmem:[#allocation15 + $0x1c] sm:$0xf]
        %v4883 = vld [vmem:[#allocation15 + $0x20] sm:$0xf]
        %v4884 = vld [vmem:[#allocation15 + $0x24] sm:$0xf]
        %v4885 = vld [vmem:[#allocation15 + $0x28] sm:$0xf]
        %v4886 = vld [vmem:[#allocation15 + $0x2c] sm:$0xf]
        %v4887 = vld [vmem:[#allocation15 + $0x30] sm:$0xf]
        %v4888 = vld [vmem:[#allocation15 + $0x34] sm:$0xf]
        %v4889 = vld [vmem:[#allocation15 + $0x38] sm:$0xf]
        %v4890 = vld [vmem:[#allocation15 + $0x3c] sm:$0xf]
        %v4891 = vld [vmem:[#allocation15 + $0x40] sm:$0xf]
        %v4892 = vld [vmem:[#allocation15 + $0x44] sm:$0xf]
        %v4893 = vld [vmem:[#allocation15 + $0x48] sm:$0xf]
        %v4894 = vld [vmem:[#allocation15 + $0x4c] sm:$0xf]
        %v4895 = vld [vmem:[#allocation15 + $0x50] sm:$0xf]
        %v4896 = vld [vmem:[#allocation15 + $0x54] sm:$0xf]
        %v4897 = vld [vmem:[#allocation15 + $0x58] sm:$0xf]
        %v4898 = vld [vmem:[#allocation15 + $0x5c] sm:$0xf]
        %v4899 = vld [vmem:[#allocation15 + $0x60] sm:$0xf]
        %v4900 = vld [vmem:[#allocation15 + $0x64] sm:$0xf]
        %v4901 = vld [vmem:[#allocation15 + $0x68] sm:$0xf]
        %v4902 = vld [vmem:[#allocation15 + $0x6c] sm:$0xf]
        %v4903 = vld [vmem:[#allocation15 + $0x70] sm:$0xf]
        %v4904 = vld [vmem:[#allocation15 + $0x74] sm:$0xf]
        %v4905 = vld [vmem:[#allocation15 + $0x78] sm:$0xf]
        %v4906 = vld [vmem:[#allocation15 + $0x7c] sm:$0xf]
        %v4907 = vld [vmem:[#allocation17] sm:$0x1]
        %v4909 = vlaneseq
        %v4910 = vshrl.u32 %v4909, 7
        %v4911 = vsub.s32 0, %v4910
        %v4912 = vrot.slane %v4907, %v4911
        %v4946 = vunpack.c.l.b16 %v4875
        %v4947 = vunpack.c.l.b16 %v4876
        %v4948 = vunpack.c.l.b16 %v4877
        %v4949 = vunpack.c.l.b16 %v4878
        %v4950 = vunpack.c.l.b16 %v4879
        %v4951 = vunpack.c.l.b16 %v4880
        %v4952 = vunpack.c.l.b16 %v4881
        %v4953 = vunpack.c.l.b16 %v4882
        %v4954 = vunpack.c.l.b16 %v4883
        %v4955 = vunpack.c.l.b16 %v4884
        %v4956 = vunpack.c.l.b16 %v4885
        %v4957 = vunpack.c.l.b16 %v4886
        %v4958 = vunpack.c.l.b16 %v4887
        %v4959 = vunpack.c.l.b16 %v4888
        %v4960 = vunpack.c.l.b16 %v4889
        %v4961 = vunpack.c.l.b16 %v4890
        %v4962 = vunpack.c.l.b16 %v4891
        %v4963 = vunpack.c.l.b16 %v4892
        %v4964 = vunpack.c.l.b16 %v4893
        %v4965 = vunpack.c.l.b16 %v4894
        %v4966 = vunpack.c.l.b16 %v4895
        %v4967 = vunpack.c.l.b16 %v4896
        %v4968 = vunpack.c.l.b16 %v4897
        %v4969 = vunpack.c.l.b16 %v4898
        %v4970 = vunpack.c.l.b16 %v4899
        %v4971 = vunpack.c.l.b16 %v4900
        %v4972 = vunpack.c.l.b16 %v4901
        %v4973 = vunpack.c.l.b16 %v4902
        %v4974 = vunpack.c.l.b16 %v4903
        %v4975 = vunpack.c.l.b16 %v4904
        %v4976 = vunpack.c.l.b16 %v4905
        %v4977 = vunpack.c.l.b16 %v4906
        %v4978 = vpack.c.b16 %v4947, %v4946
        %v4979 = vpack.c.b16 %v4949, %v4948
        %v4980 = vpack.c.b16 %v4951, %v4950
        %v4981 = vpack.c.b16 %v4953, %v4952
        %v4982 = vpack.c.b16 %v4955, %v4954
        %v4983 = vpack.c.b16 %v4957, %v4956
        %v4984 = vpack.c.b16 %v4959, %v4958
        %v4985 = vpack.c.b16 %v4961, %v4960
        %v4986 = vpack.c.b16 %v4963, %v4962
        %v4987 = vpack.c.b16 %v4965, %v4964
        %v4988 = vpack.c.b16 %v4967, %v4966
        %v4989 = vpack.c.b16 %v4969, %v4968
        %v4990 = vpack.c.b16 %v4971, %v4970
        %v4991 = vpack.c.b16 %v4973, %v4972
        %v4992 = vpack.c.b16 %v4975, %v4974
        %v4993 = vpack.c.b16 %v4977, %v4976
        %5010 = vmatprep.subr.bf16.mxu0 0
        %5011 = vmatpush1.bf16.msra.mxu0 %v4978
        %5012 = vmatprep.subr.bf16.mxu0 0
        %5013 = vmatpush1.bf16.msra.mxu0 %v4979
        %5014 = vmatprep.subr.bf16.mxu0 0
        %5015 = vmatpush1.bf16.msra.mxu0 %v4980
        %5016 = vmatprep.subr.bf16.mxu0 0
        %5017 = vmatpush1.bf16.msra.mxu0 %v4981
        %5018 = vmatprep.subr.bf16.mxu0 0
        %5019 = vmatpush1.bf16.msra.mxu0 %v4982
        %5020 = vmatprep.subr.bf16.mxu0 0
        %5021 = vmatpush1.bf16.msra.mxu0 %v4983
        %5022 = vmatprep.subr.bf16.mxu0 0
        %5023 = vmatpush1.bf16.msra.mxu0 %v4984
        %5024 = vmatprep.subr.bf16.mxu0 0
        %5025 = vmatpush1.bf16.msra.mxu0 %v4985
        %5026 = vmatprep.subr.bf16.mxu0 0
        %5027 = vmatpush1.bf16.msra.mxu0 %v4986
        %5028 = vmatprep.subr.bf16.mxu0 0
        %5029 = vmatpush1.bf16.msra.mxu0 %v4987
        %5030 = vmatprep.subr.bf16.mxu0 0
        %5031 = vmatpush1.bf16.msra.mxu0 %v4988
        %5032 = vmatprep.subr.bf16.mxu0 0
        %5033 = vmatpush1.bf16.msra.mxu0 %v4989
        %5034 = vmatprep.subr.bf16.mxu0 0
        %5035 = vmatpush1.bf16.msra.mxu0 %v4990
        %5036 = vmatprep.subr.bf16.mxu0 0
        %5037 = vmatpush1.bf16.msra.mxu0 %v4991
        %5038 = vmatprep.subr.bf16.mxu0 0
        %5039 = vmatpush1.bf16.msra.mxu0 %v4992
        %5040 = vmatprep.subr.bf16.mxu0 0
        %5041 = vmatpush1.bf16.msra.mxu0 %v4993
        %5042 = vmatprep.mubr.bf16.mxu0 %v4874
        %5043 = vmatmul.mubr.bf16.gmra.mrb[0].mxu0 %v4873
        %v5044 = vpop.f32.mrb[0].mxu0
        %v5045 = vadd.f32 %v4912, %v5044
        %v5046 = vpop.f32.mrb[0].mxu0
        %v5047 = vpop.f32.mrb[0].mxu0
        %v5048 = vpop.f32.mrb[0].mxu0
        %5049 = vdwg.mxu0
        %s5050 = sadd.s32 %s4856, 2
        %s5051 = smul.u32 %s5050, 128
        %s5052 = sadd.s32 %s5051, %s4861
        %s5053 = sld [smem:[#allocation2 + %s5052]]
        %v5054 = vstv %s5053
        %v5055 = vmul.f32 %v5054, %v5045
        %s5056 = sld [smem:[#allocation6 + %s5052]]
        %v5057 = vstv %s5056
        %v5058 = vadd.f32 %v5055, %v5057
        %v5059 = vmax.f32 %v5058, 0.0
        %v5060 = vpack.c.bf16 %v5059, %v5059
        %v5061 = vld [vmem:[#allocation18] sm:$0xf]
        %v5062 = vld [vmem:[#allocation18 + $0x4] sm:$0xf]
        %v5063 = vld [vmem:[#allocation18 + $0x8] sm:$0xf]
        %v5064 = vld [vmem:[#allocation18 + $0xc] sm:$0xf]
        %v5065 = vld [vmem:[#allocation18 + $0x10] sm:$0xf]
        %v5066 = vld [vmem:[#allocation18 + $0x14] sm:$0xf]
        %v5067 = vld [vmem:[#allocation18 + $0x18] sm:$0xf]
        %v5068 = vld [vmem:[#allocation18 + $0x1c] sm:$0xf]
        %v5069 = vld [vmem:[#allocation18 + $0x20] sm:$0xf]
        %v5070 = vld [vmem:[#allocation18 + $0x24] sm:$0xf]
        %v5071 = vld [vmem:[#allocation18 + $0x28] sm:$0xf]
        %v5072 = vld [vmem:[#allocation18 + $0x2c] sm:$0xf]
        %v5073 = vld [vmem:[#allocation18 + $0x30] sm:$0xf]
        %v5074 = vld [vmem:[#allocation18 + $0x34] sm:$0xf]
        %v5075 = vld [vmem:[#allocation18 + $0x38] sm:$0xf]
        %v5076 = vld [vmem:[#allocation18 + $0x3c] sm:$0xf]
        %v5077 = vld [vmem:[#allocation20] sm:$0x1]
        %v5079 = vlaneseq
        %v5080 = vshrl.u32 %v5079, 7
        %v5081 = vsub.s32 0, %v5080
        %v5082 = vrot.slane %v5077, %v5081
        %v5100 = vunpack.c.l.b16 %v5061
        %v5101 = vunpack.c.l.b16 %v5062
        %v5102 = vunpack.c.l.b16 %v5063
        %v5103 = vunpack.c.l.b16 %v5064
        %v5104 = vunpack.c.l.b16 %v5065
        %v5105 = vunpack.c.l.b16 %v5066
        %v5106 = vunpack.c.l.b16 %v5067
        %v5107 = vunpack.c.l.b16 %v5068
        %v5108 = vunpack.c.l.b16 %v5069
        %v5109 = vunpack.c.l.b16 %v5070
        %v5110 = vunpack.c.l.b16 %v5071
        %v5111 = vunpack.c.l.b16 %v5072
        %v5112 = vunpack.c.l.b16 %v5073
        %v5113 = vunpack.c.l.b16 %v5074
        %v5114 = vunpack.c.l.b16 %v5075
        %v5115 = vunpack.c.l.b16 %v5076
        %v5116 = vpack.c.b16 %v5101, %v5100
        %v5117 = vpack.c.b16 %v5103, %v5102
        %v5118 = vpack.c.b16 %v5105, %v5104
        %v5119 = vpack.c.b16 %v5107, %v5106
        %v5120 = vpack.c.b16 %v5109, %v5108
        %v5121 = vpack.c.b16 %v5111, %v5110
        %v5122 = vpack.c.b16 %v5113, %v5112
        %v5123 = vpack.c.b16 %v5115, %v5114
        %5132 = vmatprep.subr.bf16.mxu0 0
        %5133 = vmatpush1.bf16.msra.mxu0 %v5116
        %5134 = vmatprep.subr.bf16.mxu0 0
        %5135 = vmatpush1.bf16.msra.mxu0 %v5117
        %5136 = vmatprep.subr.bf16.mxu0 0
        %5137 = vmatpush1.bf16.msra.mxu0 %v5118
        %5138 = vmatprep.subr.bf16.mxu0 0
        %5139 = vmatpush1.bf16.msra.mxu0 %v5119
        %5140 = vmatprep.subr.bf16.mxu0 0
        %5141 = vmatpush1.bf16.msra.mxu0 %v5120
        %5142 = vmatprep.subr.bf16.mxu0 0
        %5143 = vmatpush1.bf16.msra.mxu0 %v5121
        %5144 = vmatprep.subr.bf16.mxu0 0
        %5145 = vmatpush1.bf16.msra.mxu0 %v5122
        %5146 = vmatprep.subr.bf16.mxu0 0
        %5147 = vmatpush1.bf16.msra.mxu0 %v5123
        %5148 = vmatprep.subr.bf16.mxu0 0
        %5149 = vmatpush1.bf16.msra.mxu0 0
        %5150 = vmatprep.subr.bf16.mxu0 0
        %5151 = vmatpush1.bf16.msra.mxu0 0
        %5152 = vmatprep.subr.bf16.mxu0 0
        %5153 = vmatpush1.bf16.msra.mxu0 0
        %5154 = vmatprep.subr.bf16.mxu0 0
        %5155 = vmatpush1.bf16.msra.mxu0 0
        %5156 = vmatprep.subr.bf16.mxu0 0
        %5157 = vmatpush1.bf16.msra.mxu0 0
        %5158 = vmatprep.subr.bf16.mxu0 0
        %5159 = vmatpush1.bf16.msra.mxu0 0
        %5160 = vmatprep.subr.bf16.mxu0 0
        %5161 = vmatpush1.bf16.msra.mxu0 0
        %5162 = vmatprep.subr.bf16.mxu0 0
        %5163 = vmatpush1.bf16.msra.mxu0 0
        %5164 = vmatprep.mubr.bf16.mxu0 0
        %5165 = vmatmul.mubr.bf16.gmra.mrb[0].mxu0 %v5060
        %v5166 = vpop.f32.mrb[0].mxu0
        %v5167 = vadd.f32 %v5082, %v5166
        %v5168 = vpop.f32.mrb[0].mxu0
        %v5169 = vpop.f32.mrb[0].mxu0
        %v5170 = vpop.f32.mrb[0].mxu0
        %5171 = vdwg.mxu0
        %p5172 = scmp.eq.s32.totalorder %s37, 0
        // Predicated region
        $region109: #{tpu_custom_call.1} parent=63 // pred_check
          %p5173 = pneg %p5172
        $region110: #{tpu_custom_call.1} parent=63 // pred_check_branch
          %5175 = sbr.rel (%p5173) target = $region112
        $region111: #{tpu_custom_call.1} parent=63 // pred_region
          %5176 = vst [vmem:[#allocation21] sm:$0xff] %v5167
        $region112: #{tpu_custom_call.1} parent=63 // pred_fallthru
          _
        %p5177 = scmp.gt.s32.totalorder %s37, 0
        // Predicated region
        $region113: #{tpu_custom_call.1} parent=63 // pred_check
          %p5178 = pneg %p5177
        $region114: #{tpu_custom_call.1} parent=63 // pred_check_branch
          %5180 = sbr.rel (%p5178) target = $region116
        $region115: #{tpu_custom_call.1} parent=63 // pred_region
          %v5181 = vld [vmem:[#allocation21] sm:$0xff]
          %v5182 = vmax.f32 %v5181, %v5167
          %5183 = vst [vmem:[#allocation21] sm:$0xff] %v5182
        $region116: #{tpu_custom_call.1} parent=63 // pred_fallthru
          _
        // Predicated region
        $region117: #{tpu_custom_call.1} parent=63 // pred_check
          %p5184 = pneg %p300
        $region118: #{tpu_custom_call.1} parent=63 // pred_check_branch
          %5186 = sbr.rel (%p5184) target = $region120
        $region119: #{tpu_custom_call.1} parent=63 // pred_region
          %s5188 = ssub.s32 128, 128
          %5189 = vsyncadd [#allocation4], %s5188
          %s5190 = smul.addr %s36, 128
          %s5191 = scalar_lea.hbm %s11, %s5190
          %s5193 = sshll.u32 [#allocation21], 4
          %s5194 = int_to_ptr.vmem [resolvable:$true] %s5193
          %5196 = dma.vmem_to_hbm [thread:$0]  %s5194, 128, %s5191, [#allocation4]
        $region120: #{tpu_custom_call.1} parent=63 // pred_fallthru
          _
        // Predicated region
        $region121: #{tpu_custom_call.1} parent=63 // pred_check
          %p5197 = pneg %p300
        $region122: #{tpu_custom_call.1} parent=63 // pred_check_branch
          %5199 = sbr.rel (%p5197) target = $region124
        $region123: #{tpu_custom_call.1} parent=63 // pred_region
          %5200 = dma.done [#allocation4], 128
        $region124: #{tpu_custom_call.1} parent=63 // pred_fallthru
          _
      $region64: #{tpu_custom_call.1} parent=5 // pred_fallthru
        _
      %p5201 = scmp.le.s32.totalorder 2, %s27
      // Predicated region
      $region125: #{tpu_custom_call.1} parent=5 // pred_check
        %p5202 = pneg %p5201
      $region126: #{tpu_custom_call.1} parent=5 // pred_check_branch
        %5204 = sbr.rel (%p5202) target = $region128
      $region127: #{tpu_custom_call.1} parent=5 // pred_region
        %s5205 = ssub.s32 %s27, 2
      $region128: #{tpu_custom_call.1} parent=5 // pred_fallthru
        _
    $region6: #{tpu_custom_call.1} parent=1 // loop_footer
      %s31 = sadd.s32 1, %s27
    $region7: #{tpu_custom_call.1} parent=1 // loop_footer_branch
      %26 = sbr.rel target = $region3
    $region8: #{tpu_custom_call.1} parent=1 // loop_exit
      _
    %5206 = vsyncpa [#allocation3], 1
    %s5207 = scalar_lea.sflag [#allocation3], 1
    %5208 = vsyncpa %s5207, 1
    %5209 = vsyncpa [#allocation10], 1
    %5210 = vsyncpa [#allocation13], 1
    %5211 = vsyncpa [#allocation16], 1
    %5212 = vsyncpa [#allocation19], 1
    %5213 = vsyncpa [#allocation4], 1
    %s5214 = scalar_lea.sflag [#allocation4], 1
    %5215 = vsyncpa %s5214, 1
    %5216 = vsyncpa [#allocation5], 1
    %s5217 = scalar_lea.sflag [#allocation5], 1
    %5218 = vsyncpa %s5217, 1
    %5219 = vsyncpa [#allocation7], 1

</llo_original>
